<compile_context>
chip_gen: v5e
topology: v5e:2x2
jax: 0.10.0
libtpu: 0.0.40
codegen_flags: <defaults>
</compile_context>

<pallas_src>
import jax
import jax.numpy as jnp
from jax import lax
from jax.experimental import pallas as pl
from jax.experimental.pallas import tpu as pltpu


def _round_up(x, m):
    return (x + m - 1) // m * m


def lstm_mlp_kernel(xg_ref,    # [TC, Bp, 4*Hp] gate pre-acts (= x@W_ih + b_ih + b_hh) for this chunk
                    w_hh_ref,  # [Hp, 4*Hp]
                    w1_ref,    # [Hp, Hp]
                    b1_ref,    # [1, Hp]   (f32)
                    w2_ref,    # [Hp, Op]
                    b2_ref,    # [1, Op]   (f32)
                    out_ref,   # [Bp, Op]  (f32)
                    h_scr,     # [Bp, Hp]  f32 scratch (hidden state, persists across grid)
                    c_scr):    # [Bp, Hp]  f32 scratch (cell state,   persists across grid)
    blk = pl.program_id(0)
    Hp = h_scr.shape[-1]
    TC = xg_ref.shape[0]

    @pl.when(blk == 0)
    def _():
        h_scr[...] = jnp.zeros_like(h_scr)
        c_scr[...] = jnp.zeros_like(c_scr)

    w_hh = w_hh_ref[...]

    # Only the recurrent matmul lives on the serial path; input projection and
    # biases were hoisted into xg (precomputed in the wrapper).
    def step(t, carry):
        h, c = carry
        gates = xg_ref[t].astype(jnp.float32) + jnp.dot(
            h.astype(w_hh.dtype), w_hh, preferred_element_type=jnp.float32)   # [Bp, 4Hp]
        # Hp is a multiple of 128 -> every gate slice is lane-tile aligned.
        i_g = jax.nn.sigmoid(gates[:, 0 * Hp:1 * Hp])
        f_g = jax.nn.sigmoid(gates[:, 1 * Hp:2 * Hp])
        g_g = jnp.tanh(gates[:, 2 * Hp:3 * Hp])
        o_g = jax.nn.sigmoid(gates[:, 3 * Hp:4 * Hp])
        c = f_g * c + i_g * g_g
        h = o_g * jnp.tanh(c)
        return (h, c)

    h, c = lax.fori_loop(0, TC, step, (h_scr[...], c_scr[...]), unroll=True)
    h_scr[...] = h
    c_scr[...] = c

    # LayerNorm + Dropout are dead code in the reference forward (x is overwritten
    # by mlp(h)); Dropout is identity in eval mode -> output = mlp(h_final).
    @pl.when(blk == pl.num_programs(0) - 1)
    def _():
        z = jnp.dot(h.astype(w1_ref.dtype), w1_ref[...],
                    preferred_element_type=jnp.float32) + b1_ref[...]
        y = jnp.dot(z.astype(w2_ref.dtype), w2_ref[...],
                    preferred_element_type=jnp.float32) + b2_ref[...]
        out_ref[...] = y.astype(out_ref.dtype)


def init_params(key, vocab_size, in_size, hidden_dim, out_notes):
    assert in_size == hidden_dim, "forward() requires embedding dim == LSTM input size"
    ks = jax.random.split(key, 9)
    s = 0.1
    return dict(
        emb=jax.random.normal(ks[0], (vocab_size, hidden_dim), jnp.float32) * s,
        w_ih=jax.random.normal(ks[1], (in_size, 4 * hidden_dim), jnp.float32) * s,
        w_hh=jax.random.normal(ks[2], (hidden_dim, 4 * hidden_dim), jnp.float32) * s,
        b_ih=jax.random.normal(ks[3], (4 * hidden_dim,), jnp.float32) * s,
        b_hh=jax.random.normal(ks[4], (4 * hidden_dim,), jnp.float32) * s,
        w1=jax.random.normal(ks[5], (hidden_dim, hidden_dim), jnp.float32) * s,
        b1=jax.random.normal(ks[6], (hidden_dim,), jnp.float32) * s,
        w2=jax.random.normal(ks[7], (hidden_dim, out_notes), jnp.float32) * s,
        b2=jax.random.normal(ks[8], (out_notes,), jnp.float32) * s,
    )


def model_forward(tokens, params, compute_dtype=jnp.float32):
    """tokens: [B, T] int32 -> [B, out_notes] f32.

    compute_dtype=jnp.bfloat16 halves HBM/VMEM traffic and uses the bf16 MXU on
    v6e/v7x; accumulation, cell/hidden state and nonlinearities stay f32.
    """
    B, T = tokens.shape
    H = params["w_hh"].shape[0]
    O = params["w2"].shape[1]
    V = params["emb"].shape[0]

    Bp = _round_up(B, 8)      # sublane tile
    Hp = _round_up(H, 128)    # lane tile (per gate)
    Op = _round_up(O, 128)    # lane-dense output store

    # --- Fold embedding + input projection + both biases into one table [V, 4H]. ---
    proj = params["emb"] @ params["w_ih"] + (params["b_ih"] + params["b_hh"])
    # Pad per gate so each gate slice lands on a 128-lane boundary.
    proj = jnp.pad(proj.reshape(V, 4, H), ((0, 0), (0, 0), (0, Hp - H)))
    proj = proj.reshape(V, 4 * Hp)

    w_hh = jnp.pad(params["w_hh"].reshape(H, 4, H),
                   ((0, Hp - H), (0, 0), (0, Hp - H))).reshape(Hp, 4 * Hp)
    w1 = jnp.pad(params["w1"], ((0, Hp - H), (0, Hp - H)))
    b1 = jnp.pad(params["b1"], (0, Hp - H)).reshape(1, Hp).astype(jnp.float32)
    w2 = jnp.pad(params["w2"], ((0, Hp - H), (0, Op - O)))
    b2 = jnp.pad(params["b2"], (0, Op - O)).reshape(1, Op).astype(jnp.float32)

    # Gate pre-activations for the whole sequence: one gather, no in-kernel x@W.
    # (jnp.take clamps out-of-range ids; PyTorch embedding would error instead.)
    xg = jnp.take(proj, tokens, axis=0)                  # [B, T, 4Hp]
    xg = jnp.transpose(xg, (1, 0, 2))                    # [T, B, 4Hp] time-major
    xg = jnp.pad(xg, ((0, 0), (0, Bp - B), (0, 0)))      # [T, Bp, 4Hp]
    # Padded batch rows / hidden lanes have zero pre-activations -> c,h stay 0 there.

    itemsize = jnp.dtype(compute_dtype).itemsize
    # Time-chunk size: amortize per-grid-step overhead, cap streamed slab ~4 MiB.
    tc_mem_cap = max(1, (4 << 20) // max(1, Bp * 4 * Hp * itemsize))
    TC = max(1, min(16, T, tc_mem_cap))
    T_pad = _round_up(T, TC)
    # LEFT-pad with zero pre-activations: exact for an LSTM starting at h=c=0
    # (gates=0 -> i=f=o=0.5, g=0 -> c'=0, h'=0), so the final h is unchanged.
    xg = jnp.pad(xg, ((T_pad - T, 0), (0, 0), (0, 0)))   # [T_pad, Bp, 4Hp]

    xg = xg.astype(compute_dtype)
    w_hh = w_hh.astype(compute_dtype)
    w1 = w1.astype(compute_dtype)
    w2 = w2.astype(compute_dtype)

    out = pl.pallas_call(
        lstm_mlp_kernel,
        out_shape=jax.ShapeDtypeStruct((Bp, Op), jnp.float32),
        grid=(T_pad // TC,),
        in_specs=[
            pl.BlockSpec((TC, Bp, 4 * Hp), lambda b: (b, 0, 0)),  # streamed chunk
            pl.BlockSpec((Hp, 4 * Hp), lambda b: (0, 0)),         # resident weights
            pl.BlockSpec((Hp, Hp), lambda b: (0, 0)),
            pl.BlockSpec((1, Hp), lambda b: (0, 0)),
            pl.BlockSpec((Hp, Op), lambda b: (0, 0)),
            pl.BlockSpec((1, Op), lambda b: (0, 0)),
        ],
        out_specs=pl.BlockSpec((Bp, Op), lambda b: (0, 0)),       # written at last block
        scratch_shapes=[pltpu.VMEM((Bp, Hp), jnp.float32),        # h
                        pltpu.VMEM((Bp, Hp), jnp.float32)],       # c
        compiler_params=pltpu.CompilerParams(
            dimension_semantics=("arbitrary",),      # serial recurrence over time
            vmem_limit_bytes=32 * 1024 * 1024,       # safe on v5e/v6e/v7x
        ),
    )(xg, w_hh, w1, b1, w2, b2)

    return out[:B, :O]


def model_forward_ref(tokens, params):
    """Pure-JAX reference (matches PyTorch eval semantics) for validation."""
    H = params["w_hh"].shape[0]
    x_emb = jnp.take(params["emb"], tokens, axis=0)           # [B, T, H]
    B = x_emb.shape[0]

    def step(carry, x_t):
        h, c = carry
        gates = (x_t @ params["w_ih"] + h @ params["w_hh"]
                 + params["b_ih"] + params["b_hh"])
        i = jax.nn.sigmoid(gates[:, 0 * H:1 * H])
        f = jax.nn.sigmoid(gates[:, 1 * H:2 * H])
        g = jnp.tanh(gates[:, 2 * H:3 * H])
        o = jax.nn.sigmoid(gates[:, 3 * H:4 * H])
        c = f * c + i * g
        h = o * jnp.tanh(c)
        return (h, c), None

    h0 = jnp.zeros((B, H), jnp.float32)
    (h, _), _ = lax.scan(step, (h0, h0), jnp.transpose(x_emb, (1, 0, 2)))
    z = h @ params["w1"] + params["b1"]
    return z @ params["w2"] + params["b2"]


if __name__ == "__main__":
    # Small shapes consistent with the module: hidden_dim=256 (as in the spec),
    # batch=4, seq=8, vocab=64, out_notes=16, in_size == hidden_dim (required by
    # the forward pass, since embedding output feeds the LSTM).
    B, T, H, V, O = 4, 8, 256, 64, 16

    key = jax.random.PRNGKey(0)
    k_tok, k_par = jax.random.split(key)
    tokens = jax.random.randint(k_tok, (B, T), 0, V, dtype=jnp.int32)
    params = init_params(k_par, vocab_size=V, in_size=H, hidden_dim=H, out_notes=O)

    ref = jax.block_until_ready(model_forward_ref(tokens, params))

    # f32 path: tight match to the pure-JAX reference.
    out = jax.block_until_ready(model_forward(tokens, params))
    assert out.shape == (B, O)
    assert jnp.allclose(out, ref, atol=1e-4, rtol=1e-4), "f32 mismatch vs reference"

    # bf16 compute path (f32 accumulation / state): loose tolerance.
    out_bf16 = jax.block_until_ready(
        model_forward(tokens, params, compute_dtype=jnp.bfloat16))
    assert out_bf16.shape == (B, O)
    assert jnp.allclose(out_bf16, ref, atol=5e-2, rtol=5e-2), "bf16 mismatch vs reference"

    print("KERNEL_OK")
</pallas_src>

<mosaic_0001>
module attributes {stable_mosaic.version = 11 : i64} {
  func.func @lstm_mlp_kernel(%arg0: i32, %arg1: memref<8x8x1024xf32, #tpu.memory_space<vmem>>, %arg2: memref<256x1024xf32, #tpu.memory_space<vmem>>, %arg3: memref<256x256xf32, #tpu.memory_space<vmem>>, %arg4: memref<1x256xf32, #tpu.memory_space<vmem>>, %arg5: memref<256x128xf32, #tpu.memory_space<vmem>>, %arg6: memref<1x128xf32, #tpu.memory_space<vmem>>, %arg7: memref<8x128xf32, #tpu.memory_space<vmem>>, %arg8: memref<8x256xf32, #tpu.memory_space<vmem>>, %arg9: memref<8x256xf32, #tpu.memory_space<vmem>>) attributes {dimension_semantics = [#tpu.dimension_semantics<arbitrary>], iteration_bounds = array<i64: 1>, scalar_prefetch = 0 : i64, scratch_operands = 2 : i64, tpu.core_type = #tpu.core_type<tc>, window_params = [{transform_indices = @transform_0, window_bounds = array<i64: 8, 8, 1024>}, {pipeline_mode = #tpu.pipeline_mode<synchronous>, transform_indices = @transform_1, window_bounds = array<i64: 256, 1024>}, {pipeline_mode = #tpu.pipeline_mode<synchronous>, transform_indices = @transform_2, window_bounds = array<i64: 256, 256>}, {pipeline_mode = #tpu.pipeline_mode<synchronous>, transform_indices = @transform_3, window_bounds = array<i64: 1, 256>}, {pipeline_mode = #tpu.pipeline_mode<synchronous>, transform_indices = @transform_4, window_bounds = array<i64: 256, 128>}, {pipeline_mode = #tpu.pipeline_mode<synchronous>, transform_indices = @transform_5, window_bounds = array<i64: 1, 128>}, {pipeline_mode = #tpu.pipeline_mode<synchronous>, transform_indices = @transform_6, window_bounds = array<i64: 8, 128>}]} {
    %c0_i32 = arith.constant 0 : i32
    %0 = arith.cmpi eq, %arg0, %c0_i32 : i32
    %1 = arith.extui %0 : i1 to i32
    %c0_i32_0 = arith.constant 0 : i32
    %2 = arith.cmpi ne, %1, %c0_i32_0 : i32
    scf.if %2 {
      %cst_60 = arith.constant 0.000000e+00 : f32
      %251 = vector.broadcast %cst_60 : f32 to vector<8x256xf32>
      %c0_61 = arith.constant 0 : index
      %c0_62 = arith.constant 0 : index
      %252 = vector.load %arg8[%c0_61, %c0_62] : memref<8x256xf32, #tpu.memory_space<vmem>>, vector<8x256xf32>
      tpu.vector_store %arg8[%c0_61, %c0_62], %251 {strides = array<i32>} : memref<8x256xf32, #tpu.memory_space<vmem>>, vector<8x256xf32>,
      %cst_63 = arith.constant 0.000000e+00 : f32
      %253 = vector.broadcast %cst_63 : f32 to vector<8x256xf32>
      %c0_64 = arith.constant 0 : index
      %c0_65 = arith.constant 0 : index
      %254 = vector.load %arg9[%c0_64, %c0_65] : memref<8x256xf32, #tpu.memory_space<vmem>>, vector<8x256xf32>
      tpu.vector_store %arg9[%c0_64, %c0_65], %253 {strides = array<i32>} : memref<8x256xf32, #tpu.memory_space<vmem>>, vector<8x256xf32>,
    } else {
    }
    %c0 = arith.constant 0 : index
    %c0_1 = arith.constant 0 : index
    %3 = vector.load %arg2[%c0, %c0_1] : memref<256x1024xf32, #tpu.memory_space<vmem>>, vector<256x1024xf32>
    %c0_2 = arith.constant 0 : index
    %c0_3 = arith.constant 0 : index
    %4 = vector.load %arg8[%c0_2, %c0_3] : memref<8x256xf32, #tpu.memory_space<vmem>>, vector<8x256xf32>
    %c0_4 = arith.constant 0 : index
    %c0_5 = arith.constant 0 : index
    %5 = vector.load %arg9[%c0_4, %c0_5] : memref<8x256xf32, #tpu.memory_space<vmem>>, vector<8x256xf32>
    %c0_i32_6 = arith.constant 0 : i32
    %6 = arith.index_cast %c0_i32_6 : i32 to index
    %c0_7 = arith.constant 0 : index
    %c0_8 = arith.constant 0 : index
    %7 = vector.load %arg1[%6, %c0_7, %c0_8] : memref<8x8x1024xf32, #tpu.memory_space<vmem>>, vector<1x8x1024xf32>
    %8 = vector.shape_cast %7 : vector<1x8x1024xf32> to vector<8x1024xf32>
    %cst = arith.constant dense<0.000000e+00> : vector<8x1024xf32>
    %9 = tpu.matmul %4, %3, %cst {dimension_numbers = #tpu.dot_dimension_numbers<[1], [0], [0], [1], [0, 0, 1, 1], [], []>} : vector<8x256xf32>, vector<256x1024xf32>, vector<8x1024xf32> -> vector<8x1024xf32>
    %10 = arith.addf %8, %9 : vector<8x1024xf32>
    %11 = vector.extract_strided_slice %10 {offsets = [0, 0], sizes = [8, 256], strides = [1, 1]} : vector<8x1024xf32> to vector<8x256xf32>
    %12 = arith.negf %11 : vector<8x256xf32>
    %13 = math.exp %12 : vector<8x256xf32>
    %cst_9 = arith.constant 1.000000e+00 : f32
    %14 = vector.broadcast %cst_9 : f32 to vector<8x256xf32>
    %15 = arith.addf %14, %13 : vector<8x256xf32>
    %16 = arith.divf %14, %15 : vector<8x256xf32>
    %17 = vector.extract_strided_slice %10 {offsets = [0, 256], sizes = [8, 256], strides = [1, 1]} : vector<8x1024xf32> to vector<8x256xf32>
    %18 = arith.negf %17 : vector<8x256xf32>
    %19 = math.exp %18 : vector<8x256xf32>
    %cst_10 = arith.constant 1.000000e+00 : f32
    %20 = vector.broadcast %cst_10 : f32 to vector<8x256xf32>
    %21 = arith.addf %20, %19 : vector<8x256xf32>
    %22 = arith.divf %20, %21 : vector<8x256xf32>
    %23 = vector.extract_strided_slice %10 {offsets = [0, 512], sizes = [8, 256], strides = [1, 1]} : vector<8x1024xf32> to vector<8x256xf32>
    %24 = math.tanh %23 : vector<8x256xf32>
    %25 = vector.extract_strided_slice %10 {offsets = [0, 768], sizes = [8, 256], strides = [1, 1]} : vector<8x1024xf32> to vector<8x256xf32>
    %26 = arith.negf %25 : vector<8x256xf32>
    %27 = math.exp %26 : vector<8x256xf32>
    %cst_11 = arith.constant 1.000000e+00 : f32
    %28 = vector.broadcast %cst_11 : f32 to vector<8x256xf32>
    %29 = arith.addf %28, %27 : vector<8x256xf32>
    %30 = arith.divf %28, %29 : vector<8x256xf32>
    %31 = arith.mulf %22, %5 : vector<8x256xf32>
    %32 = arith.mulf %16, %24 : vector<8x256xf32>
    %33 = arith.addf %31, %32 : vector<8x256xf32>
    %34 = math.tanh %33 : vector<8x256xf32>
    %35 = arith.mulf %30, %34 : vector<8x256xf32>
    %c1_i32 = arith.constant 1 : i32
    %36 = arith.index_cast %c1_i32 : i32 to index
    %c0_12 = arith.constant 0 : index
    %c0_13 = arith.constant 0 : index
    %37 = vector.load %arg1[%36, %c0_12, %c0_13] : memref<8x8x1024xf32, #tpu.memory_space<vmem>>, vector<1x8x1024xf32>
    %38 = vector.shape_cast %37 : vector<1x8x1024xf32> to vector<8x1024xf32>
    %cst_14 = arith.constant dense<0.000000e+00> : vector<8x1024xf32>
    %39 = tpu.matmul %35, %3, %cst_14 {dimension_numbers = #tpu.dot_dimension_numbers<[1], [0], [0], [1], [0, 0, 1, 1], [], []>} : vector<8x256xf32>, vector<256x1024xf32>, vector<8x1024xf32> -> vector<8x1024xf32>
    %40 = arith.addf %38, %39 : vector<8x1024xf32>
    %41 = vector.extract_strided_slice %40 {offsets = [0, 0], sizes = [8, 256], strides = [1, 1]} : vector<8x1024xf32> to vector<8x256xf32>
    %42 = arith.negf %41 : vector<8x256xf32>
    %43 = math.exp %42 : vector<8x256xf32>
    %cst_15 = arith.constant 1.000000e+00 : f32
    %44 = vector.broadcast %cst_15 : f32 to vector<8x256xf32>
    %45 = arith.addf %44, %43 : vector<8x256xf32>
    %46 = arith.divf %44, %45 : vector<8x256xf32>
    %47 = vector.extract_strided_slice %40 {offsets = [0, 256], sizes = [8, 256], strides = [1, 1]} : vector<8x1024xf32> to vector<8x256xf32>
    %48 = arith.negf %47 : vector<8x256xf32>
    %49 = math.exp %48 : vector<8x256xf32>
    %cst_16 = arith.constant 1.000000e+00 : f32
    %50 = vector.broadcast %cst_16 : f32 to vector<8x256xf32>
    %51 = arith.addf %50, %49 : vector<8x256xf32>
    %52 = arith.divf %50, %51 : vector<8x256xf32>
    %53 = vector.extract_strided_slice %40 {offsets = [0, 512], sizes = [8, 256], strides = [1, 1]} : vector<8x1024xf32> to vector<8x256xf32>
    %54 = math.tanh %53 : vector<8x256xf32>
    %55 = vector.extract_strided_slice %40 {offsets = [0, 768], sizes = [8, 256], strides = [1, 1]} : vector<8x1024xf32> to vector<8x256xf32>
    %56 = arith.negf %55 : vector<8x256xf32>
    %57 = math.exp %56 : vector<8x256xf32>
    %cst_17 = arith.constant 1.000000e+00 : f32
    %58 = vector.broadcast %cst_17 : f32 to vector<8x256xf32>
    %59 = arith.addf %58, %57 : vector<8x256xf32>
    %60 = arith.divf %58, %59 : vector<8x256xf32>
    %61 = arith.mulf %52, %33 : vector<8x256xf32>
    %62 = arith.mulf %46, %54 : vector<8x256xf32>
    %63 = arith.addf %61, %62 : vector<8x256xf32>
    %64 = math.tanh %63 : vector<8x256xf32>
    %65 = arith.mulf %60, %64 : vector<8x256xf32>
    %c2_i32 = arith.constant 2 : i32
    %66 = arith.index_cast %c2_i32 : i32 to index
    %c0_18 = arith.constant 0 : index
    %c0_19 = arith.constant 0 : index
    %67 = vector.load %arg1[%66, %c0_18, %c0_19] : memref<8x8x1024xf32, #tpu.memory_space<vmem>>, vector<1x8x1024xf32>
    %68 = vector.shape_cast %67 : vector<1x8x1024xf32> to vector<8x1024xf32>
    %cst_20 = arith.constant dense<0.000000e+00> : vector<8x1024xf32>
    %69 = tpu.matmul %65, %3, %cst_20 {dimension_numbers = #tpu.dot_dimension_numbers<[1], [0], [0], [1], [0, 0, 1, 1], [], []>} : vector<8x256xf32>, vector<256x1024xf32>, vector<8x1024xf32> -> vector<8x1024xf32>
    %70 = arith.addf %68, %69 : vector<8x1024xf32>
    %71 = vector.extract_strided_slice %70 {offsets = [0, 0], sizes = [8, 256], strides = [1, 1]} : vector<8x1024xf32> to vector<8x256xf32>
    %72 = arith.negf %71 : vector<8x256xf32>
    %73 = math.exp %72 : vector<8x256xf32>
    %cst_21 = arith.constant 1.000000e+00 : f32
    %74 = vector.broadcast %cst_21 : f32 to vector<8x256xf32>
    %75 = arith.addf %74, %73 : vector<8x256xf32>
    %76 = arith.divf %74, %75 : vector<8x256xf32>
    %77 = vector.extract_strided_slice %70 {offsets = [0, 256], sizes = [8, 256], strides = [1, 1]} : vector<8x1024xf32> to vector<8x256xf32>
    %78 = arith.negf %77 : vector<8x256xf32>
    %79 = math.exp %78 : vector<8x256xf32>
    %cst_22 = arith.constant 1.000000e+00 : f32
    %80 = vector.broadcast %cst_22 : f32 to vector<8x256xf32>
    %81 = arith.addf %80, %79 : vector<8x256xf32>
    %82 = arith.divf %80, %81 : vector<8x256xf32>
    %83 = vector.extract_strided_slice %70 {offsets = [0, 512], sizes = [8, 256], strides = [1, 1]} : vector<8x1024xf32> to vector<8x256xf32>
    %84 = math.tanh %83 : vector<8x256xf32>
    %85 = vector.extract_strided_slice %70 {offsets = [0, 768], sizes = [8, 256], strides = [1, 1]} : vector<8x1024xf32> to vector<8x256xf32>
    %86 = arith.negf %85 : vector<8x256xf32>
    %87 = math.exp %86 : vector<8x256xf32>
    %cst_23 = arith.constant 1.000000e+00 : f32
    %88 = vector.broadcast %cst_23 : f32 to vector<8x256xf32>
    %89 = arith.addf %88, %87 : vector<8x256xf32>
    %90 = arith.divf %88, %89 : vector<8x256xf32>
    %91 = arith.mulf %82, %63 : vector<8x256xf32>
    %92 = arith.mulf %76, %84 : vector<8x256xf32>
    %93 = arith.addf %91, %92 : vector<8x256xf32>
    %94 = math.tanh %93 : vector<8x256xf32>
    %95 = arith.mulf %90, %94 : vector<8x256xf32>
    %c3_i32 = arith.constant 3 : i32
    %96 = arith.index_cast %c3_i32 : i32 to index
    %c0_24 = arith.constant 0 : index
    %c0_25 = arith.constant 0 : index
    %97 = vector.load %arg1[%96, %c0_24, %c0_25] : memref<8x8x1024xf32, #tpu.memory_space<vmem>>, vector<1x8x1024xf32>
    %98 = vector.shape_cast %97 : vector<1x8x1024xf32> to vector<8x1024xf32>
    %cst_26 = arith.constant dense<0.000000e+00> : vector<8x1024xf32>
    %99 = tpu.matmul %95, %3, %cst_26 {dimension_numbers = #tpu.dot_dimension_numbers<[1], [0], [0], [1], [0, 0, 1, 1], [], []>} : vector<8x256xf32>, vector<256x1024xf32>, vector<8x1024xf32> -> vector<8x1024xf32>
    %100 = arith.addf %98, %99 : vector<8x1024xf32>
    %101 = vector.extract_strided_slice %100 {offsets = [0, 0], sizes = [8, 256], strides = [1, 1]} : vector<8x1024xf32> to vector<8x256xf32>
    %102 = arith.negf %101 : vector<8x256xf32>
    %103 = math.exp %102 : vector<8x256xf32>
    %cst_27 = arith.constant 1.000000e+00 : f32
    %104 = vector.broadcast %cst_27 : f32 to vector<8x256xf32>
    %105 = arith.addf %104, %103 : vector<8x256xf32>
    %106 = arith.divf %104, %105 : vector<8x256xf32>
    %107 = vector.extract_strided_slice %100 {offsets = [0, 256], sizes = [8, 256], strides = [1, 1]} : vector<8x1024xf32> to vector<8x256xf32>
    %108 = arith.negf %107 : vector<8x256xf32>
    %109 = math.exp %108 : vector<8x256xf32>
    %cst_28 = arith.constant 1.000000e+00 : f32
    %110 = vector.broadcast %cst_28 : f32 to vector<8x256xf32>
    %111 = arith.addf %110, %109 : vector<8x256xf32>
    %112 = arith.divf %110, %111 : vector<8x256xf32>
    %113 = vector.extract_strided_slice %100 {offsets = [0, 512], sizes = [8, 256], strides = [1, 1]} : vector<8x1024xf32> to vector<8x256xf32>
    %114 = math.tanh %113 : vector<8x256xf32>
    %115 = vector.extract_strided_slice %100 {offsets = [0, 768], sizes = [8, 256], strides = [1, 1]} : vector<8x1024xf32> to vector<8x256xf32>
    %116 = arith.negf %115 : vector<8x256xf32>
    %117 = math.exp %116 : vector<8x256xf32>
    %cst_29 = arith.constant 1.000000e+00 : f32
    %118 = vector.broadcast %cst_29 : f32 to vector<8x256xf32>
    %119 = arith.addf %118, %117 : vector<8x256xf32>
    %120 = arith.divf %118, %119 : vector<8x256xf32>
    %121 = arith.mulf %112, %93 : vector<8x256xf32>
    %122 = arith.mulf %106, %114 : vector<8x256xf32>
    %123 = arith.addf %121, %122 : vector<8x256xf32>
    %124 = math.tanh %123 : vector<8x256xf32>
    %125 = arith.mulf %120, %124 : vector<8x256xf32>
    %c4_i32 = arith.constant 4 : i32
    %126 = arith.index_cast %c4_i32 : i32 to index
    %c0_30 = arith.constant 0 : index
    %c0_31 = arith.constant 0 : index
    %127 = vector.load %arg1[%126, %c0_30, %c0_31] : memref<8x8x1024xf32, #tpu.memory_space<vmem>>, vector<1x8x1024xf32>
    %128 = vector.shape_cast %127 : vector<1x8x1024xf32> to vector<8x1024xf32>
    %cst_32 = arith.constant dense<0.000000e+00> : vector<8x1024xf32>
    %129 = tpu.matmul %125, %3, %cst_32 {dimension_numbers = #tpu.dot_dimension_numbers<[1], [0], [0], [1], [0, 0, 1, 1], [], []>} : vector<8x256xf32>, vector<256x1024xf32>, vector<8x1024xf32> -> vector<8x1024xf32>
    %130 = arith.addf %128, %129 : vector<8x1024xf32>
    %131 = vector.extract_strided_slice %130 {offsets = [0, 0], sizes = [8, 256], strides = [1, 1]} : vector<8x1024xf32> to vector<8x256xf32>
    %132 = arith.negf %131 : vector<8x256xf32>
    %133 = math.exp %132 : vector<8x256xf32>
    %cst_33 = arith.constant 1.000000e+00 : f32
    %134 = vector.broadcast %cst_33 : f32 to vector<8x256xf32>
    %135 = arith.addf %134, %133 : vector<8x256xf32>
    %136 = arith.divf %134, %135 : vector<8x256xf32>
    %137 = vector.extract_strided_slice %130 {offsets = [0, 256], sizes = [8, 256], strides = [1, 1]} : vector<8x1024xf32> to vector<8x256xf32>
    %138 = arith.negf %137 : vector<8x256xf32>
    %139 = math.exp %138 : vector<8x256xf32>
    %cst_34 = arith.constant 1.000000e+00 : f32
    %140 = vector.broadcast %cst_34 : f32 to vector<8x256xf32>
    %141 = arith.addf %140, %139 : vector<8x256xf32>
    %142 = arith.divf %140, %141 : vector<8x256xf32>
    %143 = vector.extract_strided_slice %130 {offsets = [0, 512], sizes = [8, 256], strides = [1, 1]} : vector<8x1024xf32> to vector<8x256xf32>
    %144 = math.tanh %143 : vector<8x256xf32>
    %145 = vector.extract_strided_slice %130 {offsets = [0, 768], sizes = [8, 256], strides = [1, 1]} : vector<8x1024xf32> to vector<8x256xf32>
    %146 = arith.negf %145 : vector<8x256xf32>
    %147 = math.exp %146 : vector<8x256xf32>
    %cst_35 = arith.constant 1.000000e+00 : f32
    %148 = vector.broadcast %cst_35 : f32 to vector<8x256xf32>
    %149 = arith.addf %148, %147 : vector<8x256xf32>
    %150 = arith.divf %148, %149 : vector<8x256xf32>
    %151 = arith.mulf %142, %123 : vector<8x256xf32>
    %152 = arith.mulf %136, %144 : vector<8x256xf32>
    %153 = arith.addf %151, %152 : vector<8x256xf32>
    %154 = math.tanh %153 : vector<8x256xf32>
    %155 = arith.mulf %150, %154 : vector<8x256xf32>
    %c5_i32 = arith.constant 5 : i32
    %156 = arith.index_cast %c5_i32 : i32 to index
    %c0_36 = arith.constant 0 : index
    %c0_37 = arith.constant 0 : index
    %157 = vector.load %arg1[%156, %c0_36, %c0_37] : memref<8x8x1024xf32, #tpu.memory_space<vmem>>, vector<1x8x1024xf32>
    %158 = vector.shape_cast %157 : vector<1x8x1024xf32> to vector<8x1024xf32>
    %cst_38 = arith.constant dense<0.000000e+00> : vector<8x1024xf32>
    %159 = tpu.matmul %155, %3, %cst_38 {dimension_numbers = #tpu.dot_dimension_numbers<[1], [0], [0], [1], [0, 0, 1, 1], [], []>} : vector<8x256xf32>, vector<256x1024xf32>, vector<8x1024xf32> -> vector<8x1024xf32>
    %160 = arith.addf %158, %159 : vector<8x1024xf32>
    %161 = vector.extract_strided_slice %160 {offsets = [0, 0], sizes = [8, 256], strides = [1, 1]} : vector<8x1024xf32> to vector<8x256xf32>
    %162 = arith.negf %161 : vector<8x256xf32>
    %163 = math.exp %162 : vector<8x256xf32>
    %cst_39 = arith.constant 1.000000e+00 : f32
    %164 = vector.broadcast %cst_39 : f32 to vector<8x256xf32>
    %165 = arith.addf %164, %163 : vector<8x256xf32>
    %166 = arith.divf %164, %165 : vector<8x256xf32>
    %167 = vector.extract_strided_slice %160 {offsets = [0, 256], sizes = [8, 256], strides = [1, 1]} : vector<8x1024xf32> to vector<8x256xf32>
    %168 = arith.negf %167 : vector<8x256xf32>
    %169 = math.exp %168 : vector<8x256xf32>
    %cst_40 = arith.constant 1.000000e+00 : f32
    %170 = vector.broadcast %cst_40 : f32 to vector<8x256xf32>
    %171 = arith.addf %170, %169 : vector<8x256xf32>
    %172 = arith.divf %170, %171 : vector<8x256xf32>
    %173 = vector.extract_strided_slice %160 {offsets = [0, 512], sizes = [8, 256], strides = [1, 1]} : vector<8x1024xf32> to vector<8x256xf32>
    %174 = math.tanh %173 : vector<8x256xf32>
    %175 = vector.extract_strided_slice %160 {offsets = [0, 768], sizes = [8, 256], strides = [1, 1]} : vector<8x1024xf32> to vector<8x256xf32>
    %176 = arith.negf %175 : vector<8x256xf32>
    %177 = math.exp %176 : vector<8x256xf32>
    %cst_41 = arith.constant 1.000000e+00 : f32
    %178 = vector.broadcast %cst_41 : f32 to vector<8x256xf32>
    %179 = arith.addf %178, %177 : vector<8x256xf32>
    %180 = arith.divf %178, %179 : vector<8x256xf32>
    %181 = arith.mulf %172, %153 : vector<8x256xf32>
    %182 = arith.mulf %166, %174 : vector<8x256xf32>
    %183 = arith.addf %181, %182 : vector<8x256xf32>
    %184 = math.tanh %183 : vector<8x256xf32>
    %185 = arith.mulf %180, %184 : vector<8x256xf32>
    %c6_i32 = arith.constant 6 : i32
    %186 = arith.index_cast %c6_i32 : i32 to index
    %c0_42 = arith.constant 0 : index
    %c0_43 = arith.constant 0 : index
    %187 = vector.load %arg1[%186, %c0_42, %c0_43] : memref<8x8x1024xf32, #tpu.memory_space<vmem>>, vector<1x8x1024xf32>
    %188 = vector.shape_cast %187 : vector<1x8x1024xf32> to vector<8x1024xf32>
    %cst_44 = arith.constant dense<0.000000e+00> : vector<8x1024xf32>
    %189 = tpu.matmul %185, %3, %cst_44 {dimension_numbers = #tpu.dot_dimension_numbers<[1], [0], [0], [1], [0, 0, 1, 1], [], []>} : vector<8x256xf32>, vector<256x1024xf32>, vector<8x1024xf32> -> vector<8x1024xf32>
    %190 = arith.addf %188, %189 : vector<8x1024xf32>
    %191 = vector.extract_strided_slice %190 {offsets = [0, 0], sizes = [8, 256], strides = [1, 1]} : vector<8x1024xf32> to vector<8x256xf32>
    %192 = arith.negf %191 : vector<8x256xf32>
    %193 = math.exp %192 : vector<8x256xf32>
    %cst_45 = arith.constant 1.000000e+00 : f32
    %194 = vector.broadcast %cst_45 : f32 to vector<8x256xf32>
    %195 = arith.addf %194, %193 : vector<8x256xf32>
    %196 = arith.divf %194, %195 : vector<8x256xf32>
    %197 = vector.extract_strided_slice %190 {offsets = [0, 256], sizes = [8, 256], strides = [1, 1]} : vector<8x1024xf32> to vector<8x256xf32>
    %198 = arith.negf %197 : vector<8x256xf32>
    %199 = math.exp %198 : vector<8x256xf32>
    %cst_46 = arith.constant 1.000000e+00 : f32
    %200 = vector.broadcast %cst_46 : f32 to vector<8x256xf32>
    %201 = arith.addf %200, %199 : vector<8x256xf32>
    %202 = arith.divf %200, %201 : vector<8x256xf32>
    %203 = vector.extract_strided_slice %190 {offsets = [0, 512], sizes = [8, 256], strides = [1, 1]} : vector<8x1024xf32> to vector<8x256xf32>
    %204 = math.tanh %203 : vector<8x256xf32>
    %205 = vector.extract_strided_slice %190 {offsets = [0, 768], sizes = [8, 256], strides = [1, 1]} : vector<8x1024xf32> to vector<8x256xf32>
    %206 = arith.negf %205 : vector<8x256xf32>
    %207 = math.exp %206 : vector<8x256xf32>
    %cst_47 = arith.constant 1.000000e+00 : f32
    %208 = vector.broadcast %cst_47 : f32 to vector<8x256xf32>
    %209 = arith.addf %208, %207 : vector<8x256xf32>
    %210 = arith.divf %208, %209 : vector<8x256xf32>
    %211 = arith.mulf %202, %183 : vector<8x256xf32>
    %212 = arith.mulf %196, %204 : vector<8x256xf32>
    %213 = arith.addf %211, %212 : vector<8x256xf32>
    %214 = math.tanh %213 : vector<8x256xf32>
    %215 = arith.mulf %210, %214 : vector<8x256xf32>
    %c7_i32 = arith.constant 7 : i32
    %216 = arith.index_cast %c7_i32 : i32 to index
    %c0_48 = arith.constant 0 : index
    %c0_49 = arith.constant 0 : index
    %217 = vector.load %arg1[%216, %c0_48, %c0_49] : memref<8x8x1024xf32, #tpu.memory_space<vmem>>, vector<1x8x1024xf32>
    %218 = vector.shape_cast %217 : vector<1x8x1024xf32> to vector<8x1024xf32>
    %cst_50 = arith.constant dense<0.000000e+00> : vector<8x1024xf32>
    %219 = tpu.matmul %215, %3, %cst_50 {dimension_numbers = #tpu.dot_dimension_numbers<[1], [0], [0], [1], [0, 0, 1, 1], [], []>} : vector<8x256xf32>, vector<256x1024xf32>, vector<8x1024xf32> -> vector<8x1024xf32>
    %220 = arith.addf %218, %219 : vector<8x1024xf32>
    %221 = vector.extract_strided_slice %220 {offsets = [0, 0], sizes = [8, 256], strides = [1, 1]} : vector<8x1024xf32> to vector<8x256xf32>
    %222 = arith.negf %221 : vector<8x256xf32>
    %223 = math.exp %222 : vector<8x256xf32>
    %cst_51 = arith.constant 1.000000e+00 : f32
    %224 = vector.broadcast %cst_51 : f32 to vector<8x256xf32>
    %225 = arith.addf %224, %223 : vector<8x256xf32>
    %226 = arith.divf %224, %225 : vector<8x256xf32>
    %227 = vector.extract_strided_slice %220 {offsets = [0, 256], sizes = [8, 256], strides = [1, 1]} : vector<8x1024xf32> to vector<8x256xf32>
    %228 = arith.negf %227 : vector<8x256xf32>
    %229 = math.exp %228 : vector<8x256xf32>
    %cst_52 = arith.constant 1.000000e+00 : f32
    %230 = vector.broadcast %cst_52 : f32 to vector<8x256xf32>
    %231 = arith.addf %230, %229 : vector<8x256xf32>
    %232 = arith.divf %230, %231 : vector<8x256xf32>
    %233 = vector.extract_strided_slice %220 {offsets = [0, 512], sizes = [8, 256], strides = [1, 1]} : vector<8x1024xf32> to vector<8x256xf32>
    %234 = math.tanh %233 : vector<8x256xf32>
    %235 = vector.extract_strided_slice %220 {offsets = [0, 768], sizes = [8, 256], strides = [1, 1]} : vector<8x1024xf32> to vector<8x256xf32>
    %236 = arith.negf %235 : vector<8x256xf32>
    %237 = math.exp %236 : vector<8x256xf32>
    %cst_53 = arith.constant 1.000000e+00 : f32
    %238 = vector.broadcast %cst_53 : f32 to vector<8x256xf32>
    %239 = arith.addf %238, %237 : vector<8x256xf32>
    %240 = arith.divf %238, %239 : vector<8x256xf32>
    %241 = arith.mulf %232, %213 : vector<8x256xf32>
    %242 = arith.mulf %226, %234 : vector<8x256xf32>
    %243 = arith.addf %241, %242 : vector<8x256xf32>
    %244 = math.tanh %243 : vector<8x256xf32>
    %245 = arith.mulf %240, %244 : vector<8x256xf32>
    %c8_i32 = arith.constant 8 : i32
    %c0_54 = arith.constant 0 : index
    %c0_55 = arith.constant 0 : index
    %246 = vector.load %arg8[%c0_54, %c0_55] : memref<8x256xf32, #tpu.memory_space<vmem>>, vector<8x256xf32>
    tpu.vector_store %arg8[%c0_54, %c0_55], %245 {strides = array<i32>} : memref<8x256xf32, #tpu.memory_space<vmem>>, vector<8x256xf32>,
    %c0_56 = arith.constant 0 : index
    %c0_57 = arith.constant 0 : index
    %247 = vector.load %arg9[%c0_56, %c0_57] : memref<8x256xf32, #tpu.memory_space<vmem>>, vector<8x256xf32>
    tpu.vector_store %arg9[%c0_56, %c0_57], %243 {strides = array<i32>} : memref<8x256xf32, #tpu.memory_space<vmem>>, vector<8x256xf32>,
    %c0_i32_58 = arith.constant 0 : i32
    %248 = arith.cmpi eq, %arg0, %c0_i32_58 : i32
    %249 = arith.extui %248 : i1 to i32
    %c0_i32_59 = arith.constant 0 : i32
    %250 = arith.cmpi ne, %249, %c0_i32_59 : i32
    scf.if %250 {
      %c0_60 = arith.constant 0 : index
      %c0_61 = arith.constant 0 : index
      %251 = vector.load %arg3[%c0_60, %c0_61] : memref<256x256xf32, #tpu.memory_space<vmem>>, vector<256x256xf32>
      %cst_62 = arith.constant dense<0.000000e+00> : vector<8x256xf32>
      %252 = tpu.matmul %245, %251, %cst_62 {dimension_numbers = #tpu.dot_dimension_numbers<[1], [0], [0], [1], [0, 0, 1, 1], [], []>} : vector<8x256xf32>, vector<256x256xf32>, vector<8x256xf32> -> vector<8x256xf32>
      %c0_63 = arith.constant 0 : index
      %c0_64 = arith.constant 0 : index
      %253 = vector.load %arg4[%c0_63, %c0_64] : memref<1x256xf32, #tpu.memory_space<vmem>>, vector<1x256xf32>
      %254 = vector.broadcast %253 : vector<1x256xf32> to vector<8x256xf32>
      %255 = arith.addf %252, %254 : vector<8x256xf32>
      %c0_65 = arith.constant 0 : index
      %c0_66 = arith.constant 0 : index
      %256 = vector.load %arg5[%c0_65, %c0_66] : memref<256x128xf32, #tpu.memory_space<vmem>>, vector<256x128xf32>
      %cst_67 = arith.constant dense<0.000000e+00> : vector<8x128xf32>
      %257 = tpu.matmul %255, %256, %cst_67 {dimension_numbers = #tpu.dot_dimension_numbers<[1], [0], [0], [1], [0, 0, 1, 1], [], []>} : vector<8x256xf32>, vector<256x128xf32>, vector<8x128xf32> -> vector<8x128xf32>
      %c0_68 = arith.constant 0 : index
      %c0_69 = arith.constant 0 : index
      %258 = vector.load %arg6[%c0_68, %c0_69] : memref<1x128xf32, #tpu.memory_space<vmem>>, vector<1x128xf32>
      %259 = vector.broadcast %258 : vector<1x128xf32> to vector<8x128xf32>
      %260 = arith.addf %257, %259 : vector<8x128xf32>
      %c0_70 = arith.constant 0 : index
      %c0_71 = arith.constant 0 : index
      %261 = vector.load %arg7[%c0_70, %c0_71] : memref<8x128xf32, #tpu.memory_space<vmem>>, vector<8x128xf32>
      tpu.vector_store %arg7[%c0_70, %c0_71], %260 {strides = array<i32>} : memref<8x128xf32, #tpu.memory_space<vmem>>, vector<8x128xf32>,
    } else {
    }
    return
  }
  func.func @transform_0(%arg0: i32) -> (i32, i32, i32) {
    %c0_i32 = arith.constant 0 : i32
    %c0_i32_0 = arith.constant 0 : i32
    %c0_i32_1 = arith.constant 0 : i32
    return %arg0, %c0_i32, %c0_i32_0 : i32, i32, i32
  }
  func.func @transform_1(%arg0: i32) -> (i32, i32) {
    %c0_i32 = arith.constant 0 : i32
    %c0_i32_0 = arith.constant 0 : i32
    %c0_i32_1 = arith.constant 0 : i32
    return %c0_i32, %c0_i32_0 : i32, i32
  }
  func.func @transform_2(%arg0: i32) -> (i32, i32) {
    %c0_i32 = arith.constant 0 : i32
    %c0_i32_0 = arith.constant 0 : i32
    %c0_i32_1 = arith.constant 0 : i32
    return %c0_i32, %c0_i32_0 : i32, i32
  }
  func.func @transform_3(%arg0: i32) -> (i32, i32) {
    %c0_i32 = arith.constant 0 : i32
    %c0_i32_0 = arith.constant 0 : i32
    %c0_i32_1 = arith.constant 0 : i32
    return %c0_i32, %c0_i32_0 : i32, i32
  }
  func.func @transform_4(%arg0: i32) -> (i32, i32) {
    %c0_i32 = arith.constant 0 : i32
    %c0_i32_0 = arith.constant 0 : i32
    %c0_i32_1 = arith.constant 0 : i32
    return %c0_i32, %c0_i32_0 : i32, i32
  }
  func.func @transform_5(%arg0: i32) -> (i32, i32) {
    %c0_i32 = arith.constant 0 : i32
    %c0_i32_0 = arith.constant 0 : i32
    %c0_i32_1 = arith.constant 0 : i32
    return %c0_i32, %c0_i32_0 : i32, i32
  }
  func.func @transform_6(%arg0: i32) -> (i32, i32) {
    %c0_i32 = arith.constant 0 : i32
    %c0_i32_0 = arith.constant 0 : i32
    %c0_i32_1 = arith.constant 0 : i32
    return %c0_i32, %c0_i32_0 : i32, i32
  }
}

</mosaic_0001>

<llo_original>
// kernel: tpu_custom_call.1
$region0: #{tpu_custom_call.1}
  #allocation0 [shape = 'u32[]', space=smem, size = 0x4, offset = 0x4, fixed_abs, tag = 'smem constant byte address 0x4 - core index']
  #allocation1 [shape = 'u32[72,128]{1,0:T(1,128)}', space=vmem, size = 0x9000, scoped, tag = 'internal scratch']
  #allocation2 [shape = 'f32[8,256]{1,0:T(8,128)}', space=vmem, size = 0x2000, scoped, tag = 'scratch operand']
  #allocation3 [shape = 'f32[8,256]{1,0:T(8,128)}', space=vmem, size = 0x2000, scoped, tag = 'scratch operand']
  %s0 = inlined_call_operand.hbm [shape: f32[8,8,1024], index: 0, kind: input, shape index: {}]
  %s1 = inlined_call_operand.hbm [shape: f32[256,1024], index: 1, kind: input, shape index: {}]
  %s2 = inlined_call_operand.hbm [shape: f32[256,256], index: 2, kind: input, shape index: {}]
  %s3 = inlined_call_operand.vmem [shape: f32[1,256], index: 3, kind: input, shape index: {}]
  %s4 = inlined_call_operand.hbm [shape: f32[256,128], index: 4, kind: input, shape index: {}]
  %s5 = inlined_call_operand.vmem [shape: f32[1,128], index: 5, kind: input, shape index: {}]
  %s6 = inlined_call_operand.hbm [shape: f32[8,128], index: 6, kind: output, shape index: {}]
  %s7 = sld [smem:[#allocation0]]
  $region58: #{tpu_custom_call.1} parent=0
    _
  %s9 = ssub.s32 1, %s7
  %s10 = scalar_select 0, %s9, %s7
  $region1: #{tpu_custom_call.1} parent=0
    #allocation4 [shape = 'u8[262144]{0}', space=vmem, size = 0x40000, scoped, tag = 'input window, operand 0, single buffered']
    #allocation5 [shape = 's32[1]{0}', space=sflag, size = 0x4, scoped, tag = 'scoped memory for tpu_custom_call.1']
    #allocation6 [shape = 's32[1]{0}', space=sflag, size = 0x4, scoped, tag = 'scoped memory for tpu_custom_call.1']
    #allocation7 [shape = 'u8[1048576]{0}', space=vmem, size = 0x100000, scoped, tag = 'input window, operand 1, single buffered']
    #allocation8 [shape = 's32[1]{0}', space=sflag, size = 0x4, scoped, tag = 'scoped memory for tpu_custom_call.1']
    #allocation9 [shape = 'u8[262144]{0}', space=vmem, size = 0x40000, scoped, tag = 'input window, operand 2, single buffered']
    #allocation10 [shape = 'u8[131072]{0}', space=vmem, size = 0x20000, scoped, tag = 'input window, operand 4, single buffered']
    #allocation11 [shape = 's32[1]{0}', space=sflag, size = 0x4, scoped, tag = 'scoped memory for tpu_custom_call.1']
    #allocation12 [shape = 'u8[4096]{0}', space=vmem, size = 0x1000, scoped, tag = 'output window, operand 0, single buffered']
    %11 = vsyncpa [#allocation5], 0
    %12 = vsyncpa [#allocation8], 0
    %13 = vsyncpa [#allocation11], 0
    %14 = vsyncpa [#allocation6], 0
    // Predicated region
    $region2: #{tpu_custom_call.1} parent=1 // pred_check
      _
    $region3: #{tpu_custom_call.1} parent=1 // pred_check_branch
      %16 = sbr.rel (0) target = $region5
    $region4: #{tpu_custom_call.1} parent=1 // pred_region
      %18 = vsyncadd [#allocation5], 0
      %s19 = sshll.u32 %s0, 4
      %s20 = int_to_ptr.hbm [resolvable:$true] %s19
      %s21 = sshll.u32 [#allocation4], 4
      %s22 = int_to_ptr.vmem [resolvable:$true] %s21
      %27 = dma.hbm_to_vmem [thread:$0]  %s20, 8192, %s22, [#allocation5], 1024, 1024, 64
    $region5: #{tpu_custom_call.1} parent=1 // pred_fallthru
      _
    // Predicated region
    $region6: #{tpu_custom_call.1} parent=1 // pred_check
      _
    $region7: #{tpu_custom_call.1} parent=1 // pred_check_branch
      %29 = sbr.rel (0) target = $region9
    $region8: #{tpu_custom_call.1} parent=1 // pred_region
      %31 = vsyncadd [#allocation8], 0
      %s32 = sshll.u32 %s1, 4
      %s33 = int_to_ptr.hbm [resolvable:$true] %s32
      %s34 = sshll.u32 [#allocation7], 4
      %s35 = int_to_ptr.vmem [resolvable:$true] %s34
      %40 = dma.hbm_to_vmem [thread:$0]  %s33, 32768, %s35, [#allocation8], 1024, 1024, 64
    $region9: #{tpu_custom_call.1} parent=1 // pred_fallthru
      _
    // Predicated region
    $region10: #{tpu_custom_call.1} parent=1 // pred_check
      _
    $region11: #{tpu_custom_call.1} parent=1 // pred_check_branch
      %42 = sbr.rel (0) target = $region13
    $region12: #{tpu_custom_call.1} parent=1 // pred_region
      %44 = vsyncadd [#allocation8], 0
      %s45 = sshll.u32 %s2, 4
      %s46 = int_to_ptr.hbm [resolvable:$true] %s45
      %s47 = sshll.u32 [#allocation9], 4
      %s48 = int_to_ptr.vmem [resolvable:$true] %s47
      %53 = dma.hbm_to_vmem [thread:$0]  %s46, 8192, %s48, [#allocation8], 256, 256, 16
    $region13: #{tpu_custom_call.1} parent=1 // pred_fallthru
      _
    // Predicated region
    $region14: #{tpu_custom_call.1} parent=1 // pred_check
      _
    $region15: #{tpu_custom_call.1} parent=1 // pred_check_branch
      %55 = sbr.rel (0) target = $region17
    $region16: #{tpu_custom_call.1} parent=1 // pred_region
      _
    $region17: #{tpu_custom_call.1} parent=1 // pred_fallthru
      _
    // Predicated region
    $region18: #{tpu_custom_call.1} parent=1 // pred_check
      _
    $region19: #{tpu_custom_call.1} parent=1 // pred_check_branch
      %57 = sbr.rel (0) target = $region21
    $region20: #{tpu_custom_call.1} parent=1 // pred_region
      %59 = vsyncadd [#allocation11], 0
      %s60 = sshll.u32 %s4, 4
      %s61 = int_to_ptr.hbm [resolvable:$true] %s60
      %s62 = sshll.u32 [#allocation10], 4
      %s63 = int_to_ptr.vmem [resolvable:$true] %s62
      %68 = dma.hbm_to_vmem [thread:$0]  %s61, 4096, %s63, [#allocation11], 128, 128, 8
    $region21: #{tpu_custom_call.1} parent=1 // pred_fallthru
      _
    // Predicated region
    $region22: #{tpu_custom_call.1} parent=1 // pred_check
      _
    $region23: #{tpu_custom_call.1} parent=1 // pred_check_branch
      %70 = sbr.rel (0) target = $region25
    $region24: #{tpu_custom_call.1} parent=1 // pred_region
      _
    $region25: #{tpu_custom_call.1} parent=1 // pred_fallthru
      _
    // Predicated region
    $region26: #{tpu_custom_call.1} parent=1 // pred_check
      _
    $region27: #{tpu_custom_call.1} parent=1 // pred_check_branch
      %72 = sbr.rel (0) target = $region29
    $region28: #{tpu_custom_call.1} parent=1 // pred_region
      %74 = dma.done [#allocation5], 8192
    $region29: #{tpu_custom_call.1} parent=1 // pred_fallthru
      _
    // Predicated region
    $region30: #{tpu_custom_call.1} parent=1 // pred_check
      _
    $region31: #{tpu_custom_call.1} parent=1 // pred_check_branch
      %76 = sbr.rel (0) target = $region33
    $region32: #{tpu_custom_call.1} parent=1 // pred_region
      %78 = dma.done [#allocation8], 32768
    $region33: #{tpu_custom_call.1} parent=1 // pred_fallthru
      _
    // Predicated region
    $region34: #{tpu_custom_call.1} parent=1 // pred_check
      _
    $region35: #{tpu_custom_call.1} parent=1 // pred_check_branch
      %80 = sbr.rel (0) target = $region37
    $region36: #{tpu_custom_call.1} parent=1 // pred_region
      %82 = dma.done [#allocation8], 8192
    $region37: #{tpu_custom_call.1} parent=1 // pred_fallthru
      _
    // Predicated region
    $region38: #{tpu_custom_call.1} parent=1 // pred_check
      _
    $region39: #{tpu_custom_call.1} parent=1 // pred_check_branch
      %84 = sbr.rel (0) target = $region41
    $region40: #{tpu_custom_call.1} parent=1 // pred_region
      %86 = dma.done [#allocation11], 4096
    $region41: #{tpu_custom_call.1} parent=1 // pred_fallthru
      _
    %p87 = scmp.eq.s32.totalorder 0, 0
    // Predicated region
    $region42: #{tpu_custom_call.1} parent=1 // pred_check
      %p88 = pneg %p87
    $region43: #{tpu_custom_call.1} parent=1 // pred_check_branch
      %90 = sbr.rel (%p88) target = $region45
    $region44: #{tpu_custom_call.1} parent=1 // pred_region
      %91 = vst [vmem:[#allocation2] sm:$0xff] 0.0
      %92 = vst [vmem:[#allocation2 + $0x8] sm:$0xff] 0.0
      %93 = vst [vmem:[#allocation3] sm:$0xff] 0.0
      %94 = vst [vmem:[#allocation3 + $0x8] sm:$0xff] 0.0
    $region45: #{tpu_custom_call.1} parent=1 // pred_fallthru
      _
    %v95 = vld [vmem:[#allocation7] sm:$0xff]
    %v96 = vld [vmem:[#allocation7 + $0x8] sm:$0xff]
    %v97 = vld [vmem:[#allocation7 + $0x10] sm:$0xff]
    %v98 = vld [vmem:[#allocation7 + $0x18] sm:$0xff]
    %v99 = vld [vmem:[#allocation7 + $0x20] sm:$0xff]
    %v100 = vld [vmem:[#allocation7 + $0x28] sm:$0xff]
    %v101 = vld [vmem:[#allocation7 + $0x30] sm:$0xff]
    %v102 = vld [vmem:[#allocation7 + $0x38] sm:$0xff]
    %v103 = vld [vmem:[#allocation7 + $0x40] sm:$0xff]
    %v104 = vld [vmem:[#allocation7 + $0x48] sm:$0xff]
    %v105 = vld [vmem:[#allocation7 + $0x50] sm:$0xff]
    %v106 = vld [vmem:[#allocation7 + $0x58] sm:$0xff]
    %v107 = vld [vmem:[#allocation7 + $0x60] sm:$0xff]
    %v108 = vld [vmem:[#allocation7 + $0x68] sm:$0xff]
    %v109 = vld [vmem:[#allocation7 + $0x70] sm:$0xff]
    %v110 = vld [vmem:[#allocation7 + $0x78] sm:$0xff]
    %v111 = vld [vmem:[#allocation7 + $0x80] sm:$0xff]
    %v112 = vld [vmem:[#allocation7 + $0x88] sm:$0xff]
    %v113 = vld [vmem:[#allocation7 + $0x90] sm:$0xff]
    %v114 = vld [vmem:[#allocation7 + $0x98] sm:$0xff]
    %v115 = vld [vmem:[#allocation7 + $0xa0] sm:$0xff]
    %v116 = vld [vmem:[#allocation7 + $0xa8] sm:$0xff]
    %v117 = vld [vmem:[#allocation7 + $0xb0] sm:$0xff]
    %v118 = vld [vmem:[#allocation7 + $0xb8] sm:$0xff]
    %v119 = vld [vmem:[#allocation7 + $0xc0] sm:$0xff]
    %v120 = vld [vmem:[#allocation7 + $0xc8] sm:$0xff]
    %v121 = vld [vmem:[#allocation7 + $0xd0] sm:$0xff]
    %v122 = vld [vmem:[#allocation7 + $0xd8] sm:$0xff]
    %v123 = vld [vmem:[#allocation7 + $0xe0] sm:$0xff]
    %v124 = vld [vmem:[#allocation7 + $0xe8] sm:$0xff]
    %v125 = vld [vmem:[#allocation7 + $0xf0] sm:$0xff]
    %v126 = vld [vmem:[#allocation7 + $0xf8] sm:$0xff]
    %v127 = vld [vmem:[#allocation7 + $0x100] sm:$0xff]
    %v128 = vld [vmem:[#allocation7 + $0x108] sm:$0xff]
    %v129 = vld [vmem:[#allocation7 + $0x110] sm:$0xff]
    %v130 = vld [vmem:[#allocation7 + $0x118] sm:$0xff]
    %v131 = vld [vmem:[#allocation7 + $0x120] sm:$0xff]
    %v132 = vld [vmem:[#allocation7 + $0x128] sm:$0xff]
    %v133 = vld [vmem:[#allocation7 + $0x130] sm:$0xff]
    %v134 = vld [vmem:[#allocation7 + $0x138] sm:$0xff]
    %v135 = vld [vmem:[#allocation7 + $0x140] sm:$0xff]
    %v136 = vld [vmem:[#allocation7 + $0x148] sm:$0xff]
    %v137 = vld [vmem:[#allocation7 + $0x150] sm:$0xff]
    %v138 = vld [vmem:[#allocation7 + $0x158] sm:$0xff]
    %v139 = vld [vmem:[#allocation7 + $0x160] sm:$0xff]
    %v140 = vld [vmem:[#allocation7 + $0x168] sm:$0xff]
    %v141 = vld [vmem:[#allocation7 + $0x170] sm:$0xff]
    %v142 = vld [vmem:[#allocation7 + $0x178] sm:$0xff]
    %v143 = vld [vmem:[#allocation7 + $0x180] sm:$0xff]
    %v144 = vld [vmem:[#allocation7 + $0x188] sm:$0xff]
    %v145 = vld [vmem:[#allocation7 + $0x190] sm:$0xff]
    %v146 = vld [vmem:[#allocation7 + $0x198] sm:$0xff]
    %v147 = vld [vmem:[#allocation7 + $0x1a0] sm:$0xff]
    %v148 = vld [vmem:[#allocation7 + $0x1a8] sm:$0xff]
    %v149 = vld [vmem:[#allocation7 + $0x1b0] sm:$0xff]
    %v150 = vld [vmem:[#allocation7 + $0x1b8] sm:$0xff]
    %v151 = vld [vmem:[#allocation7 + $0x1c0] sm:$0xff]
    %v152 = vld [vmem:[#allocation7 + $0x1c8] sm:$0xff]
    %v153 = vld [vmem:[#allocation7 + $0x1d0] sm:$0xff]
    %v154 = vld [vmem:[#allocation7 + $0x1d8] sm:$0xff]
    %v155 = vld [vmem:[#allocation7 + $0x1e0] sm:$0xff]
    %v156 = vld [vmem:[#allocation7 + $0x1e8] sm:$0xff]
    %v157 = vld [vmem:[#allocation7 + $0x1f0] sm:$0xff]
    %v158 = vld [vmem:[#allocation7 + $0x1f8] sm:$0xff]
    %v159 = vld [vmem:[#allocation7 + $0x200] sm:$0xff]
    %v160 = vld [vmem:[#allocation7 + $0x208] sm:$0xff]
    %v161 = vld [vmem:[#allocation7 + $0x210] sm:$0xff]
    %v162 = vld [vmem:[#allocation7 + $0x218] sm:$0xff]
    %v163 = vld [vmem:[#allocation7 + $0x220] sm:$0xff]
    %v164 = vld [vmem:[#allocation7 + $0x228] sm:$0xff]
    %v165 = vld [vmem:[#allocation7 + $0x230] sm:$0xff]
    %v166 = vld [vmem:[#allocation7 + $0x238] sm:$0xff]
    %v167 = vld [vmem:[#allocation7 + $0x240] sm:$0xff]
    %v168 = vld [vmem:[#allocation7 + $0x248] sm:$0xff]
    %v169 = vld [vmem:[#allocation7 + $0x250] sm:$0xff]
    %v170 = vld [vmem:[#allocation7 + $0x258] sm:$0xff]
    %v171 = vld [vmem:[#allocation7 + $0x260] sm:$0xff]
    %v172 = vld [vmem:[#allocation7 + $0x268] sm:$0xff]
    %v173 = vld [vmem:[#allocation7 + $0x270] sm:$0xff]
    %v174 = vld [vmem:[#allocation7 + $0x278] sm:$0xff]
    %v175 = vld [vmem:[#allocation7 + $0x280] sm:$0xff]
    %v176 = vld [vmem:[#allocation7 + $0x288] sm:$0xff]
    %v177 = vld [vmem:[#allocation7 + $0x290] sm:$0xff]
    %v178 = vld [vmem:[#allocation7 + $0x298] sm:$0xff]
    %v179 = vld [vmem:[#allocation7 + $0x2a0] sm:$0xff]
    %v180 = vld [vmem:[#allocation7 + $0x2a8] sm:$0xff]
    %v181 = vld [vmem:[#allocation7 + $0x2b0] sm:$0xff]
    %v182 = vld [vmem:[#allocation7 + $0x2b8] sm:$0xff]
    %v183 = vld [vmem:[#allocation7 + $0x2c0] sm:$0xff]
    %v184 = vld [vmem:[#allocation7 + $0x2c8] sm:$0xff]
    %v185 = vld [vmem:[#allocation7 + $0x2d0] sm:$0xff]
    %v186 = vld [vmem:[#allocation7 + $0x2d8] sm:$0xff]
    %v187 = vld [vmem:[#allocation7 + $0x2e0] sm:$0xff]
    %v188 = vld [vmem:[#allocation7 + $0x2e8] sm:$0xff]
    %v189 = vld [vmem:[#allocation7 + $0x2f0] sm:$0xff]
    %v190 = vld [vmem:[#allocation7 + $0x2f8] sm:$0xff]
    %v191 = vld [vmem:[#allocation7 + $0x300] sm:$0xff]
    %v192 = vld [vmem:[#allocation7 + $0x308] sm:$0xff]
    %v193 = vld [vmem:[#allocation7 + $0x310] sm:$0xff]
    %v194 = vld [vmem:[#allocation7 + $0x318] sm:$0xff]
    %v195 = vld [vmem:[#allocation7 + $0x320] sm:$0xff]
    %v196 = vld [vmem:[#allocation7 + $0x328] sm:$0xff]
    %v197 = vld [vmem:[#allocation7 + $0x330] sm:$0xff]
    %v198 = vld [vmem:[#allocation7 + $0x338] sm:$0xff]
    %v199 = vld [vmem:[#allocation7 + $0x340] sm:$0xff]
    %v200 = vld [vmem:[#allocation7 + $0x348] sm:$0xff]
    %v201 = vld [vmem:[#allocation7 + $0x350] sm:$0xff]
    %v202 = vld [vmem:[#allocation7 + $0x358] sm:$0xff]
    %v203 = vld [vmem:[#allocation7 + $0x360] sm:$0xff]
    %v204 = vld [vmem:[#allocation7 + $0x368] sm:$0xff]
    %v205 = vld [vmem:[#allocation7 + $0x370] sm:$0xff]
    %v206 = vld [vmem:[#allocation7 + $0x378] sm:$0xff]
    %v207 = vld [vmem:[#allocation7 + $0x380] sm:$0xff]
    %v208 = vld [vmem:[#allocation7 + $0x388] sm:$0xff]
    %v209 = vld [vmem:[#allocation7 + $0x390] sm:$0xff]
    %v210 = vld [vmem:[#allocation7 + $0x398] sm:$0xff]
    %v211 = vld [vmem:[#allocation7 + $0x3a0] sm:$0xff]
    %v212 = vld [vmem:[#allocation7 + $0x3a8] sm:$0xff]
    %v213 = vld [vmem:[#allocation7 + $0x3b0] sm:$0xff]
    %v214 = vld [vmem:[#allocation7 + $0x3b8] sm:$0xff]
    %v215 = vld [vmem:[#allocation7 + $0x3c0] sm:$0xff]
    %v216 = vld [vmem:[#allocation7 + $0x3c8] sm:$0xff]
    %v217 = vld [vmem:[#allocation7 + $0x3d0] sm:$0xff]
    %v218 = vld [vmem:[#allocation7 + $0x3d8] sm:$0xff]
    %v219 = vld [vmem:[#allocation7 + $0x3e0] sm:$0xff]
    %v220 = vld [vmem:[#allocation7 + $0x3e8] sm:$0xff]
    %v221 = vld [vmem:[#allocation7 + $0x3f0] sm:$0xff]
    %v222 = vld [vmem:[#allocation7 + $0x3f8] sm:$0xff]
    %v223 = vld [vmem:[#allocation7 + $0x400] sm:$0xff]
    %v224 = vld [vmem:[#allocation7 + $0x408] sm:$0xff]
    %v225 = vld [vmem:[#allocation7 + $0x410] sm:$0xff]
    %v226 = vld [vmem:[#allocation7 + $0x418] sm:$0xff]
    %v227 = vld [vmem:[#allocation7 + $0x420] sm:$0xff]
    %v228 = vld [vmem:[#allocation7 + $0x428] sm:$0xff]
    %v229 = vld [vmem:[#allocation7 + $0x430] sm:$0xff]
    %v230 = vld [vmem:[#allocation7 + $0x438] sm:$0xff]
    %v231 = vld [vmem:[#allocation7 + $0x440] sm:$0xff]
    %v232 = vld [vmem:[#allocation7 + $0x448] sm:$0xff]
    %v233 = vld [vmem:[#allocation7 + $0x450] sm:$0xff]
    %v234 = vld [vmem:[#allocation7 + $0x458] sm:$0xff]
    %v235 = vld [vmem:[#allocation7 + $0x460] sm:$0xff]
    %v236 = vld [vmem:[#allocation7 + $0x468] sm:$0xff]
    %v237 = vld [vmem:[#allocation7 + $0x470] sm:$0xff]
    %v238 = vld [vmem:[#allocation7 + $0x478] sm:$0xff]
    %v239 = vld [vmem:[#allocation7 + $0x480] sm:$0xff]
    %v240 = vld [vmem:[#allocation7 + $0x488] sm:$0xff]
    %v241 = vld [vmem:[#allocation7 + $0x490] sm:$0xff]
    %v242 = vld [vmem:[#allocation7 + $0x498] sm:$0xff]
    %v243 = vld [vmem:[#allocation7 + $0x4a0] sm:$0xff]
    %v244 = vld [vmem:[#allocation7 + $0x4a8] sm:$0xff]
    %v245 = vld [vmem:[#allocation7 + $0x4b0] sm:$0xff]
    %v246 = vld [vmem:[#allocation7 + $0x4b8] sm:$0xff]
    %v247 = vld [vmem:[#allocation7 + $0x4c0] sm:$0xff]
    %v248 = vld [vmem:[#allocation7 + $0x4c8] sm:$0xff]
    %v249 = vld [vmem:[#allocation7 + $0x4d0] sm:$0xff]
    %v250 = vld [vmem:[#allocation7 + $0x4d8] sm:$0xff]
    %v251 = vld [vmem:[#allocation7 + $0x4e0] sm:$0xff]
    %v252 = vld [vmem:[#allocation7 + $0x4e8] sm:$0xff]
    %v253 = vld [vmem:[#allocation7 + $0x4f0] sm:$0xff]
    %v254 = vld [vmem:[#allocation7 + $0x4f8] sm:$0xff]
    %v255 = vld [vmem:[#allocation7 + $0x500] sm:$0xff]
    %v256 = vld [vmem:[#allocation7 + $0x508] sm:$0xff]
    %v257 = vld [vmem:[#allocation7 + $0x510] sm:$0xff]
    %v258 = vld [vmem:[#allocation7 + $0x518] sm:$0xff]
    %v259 = vld [vmem:[#allocation7 + $0x520] sm:$0xff]
    %v260 = vld [vmem:[#allocation7 + $0x528] sm:$0xff]
    %v261 = vld [vmem:[#allocation7 + $0x530] sm:$0xff]
    %v262 = vld [vmem:[#allocation7 + $0x538] sm:$0xff]
    %v263 = vld [vmem:[#allocation7 + $0x540] sm:$0xff]
    %v264 = vld [vmem:[#allocation7 + $0x548] sm:$0xff]
    %v265 = vld [vmem:[#allocation7 + $0x550] sm:$0xff]
    %v266 = vld [vmem:[#allocation7 + $0x558] sm:$0xff]
    %v267 = vld [vmem:[#allocation7 + $0x560] sm:$0xff]
    %v268 = vld [vmem:[#allocation7 + $0x568] sm:$0xff]
    %v269 = vld [vmem:[#allocation7 + $0x570] sm:$0xff]
    %v270 = vld [vmem:[#allocation7 + $0x578] sm:$0xff]
    %v271 = vld [vmem:[#allocation7 + $0x580] sm:$0xff]
    %v272 = vld [vmem:[#allocation7 + $0x588] sm:$0xff]
    %v273 = vld [vmem:[#allocation7 + $0x590] sm:$0xff]
    %v274 = vld [vmem:[#allocation7 + $0x598] sm:$0xff]
    %v275 = vld [vmem:[#allocation7 + $0x5a0] sm:$0xff]
    %v276 = vld [vmem:[#allocation7 + $0x5a8] sm:$0xff]
    %v277 = vld [vmem:[#allocation7 + $0x5b0] sm:$0xff]
    %v278 = vld [vmem:[#allocation7 + $0x5b8] sm:$0xff]
    %v279 = vld [vmem:[#allocation7 + $0x5c0] sm:$0xff]
    %v280 = vld [vmem:[#allocation7 + $0x5c8] sm:$0xff]
    %v281 = vld [vmem:[#allocation7 + $0x5d0] sm:$0xff]
    %v282 = vld [vmem:[#allocation7 + $0x5d8] sm:$0xff]
    %v283 = vld [vmem:[#allocation7 + $0x5e0] sm:$0xff]
    %v284 = vld [vmem:[#allocation7 + $0x5e8] sm:$0xff]
    %v285 = vld [vmem:[#allocation7 + $0x5f0] sm:$0xff]
    %v286 = vld [vmem:[#allocation7 + $0x5f8] sm:$0xff]
    %v287 = vld [vmem:[#allocation7 + $0x600] sm:$0xff]
    %v288 = vld [vmem:[#allocation7 + $0x608] sm:$0xff]
    %v289 = vld [vmem:[#allocation7 + $0x610] sm:$0xff]
    %v290 = vld [vmem:[#allocation7 + $0x618] sm:$0xff]
    %v291 = vld [vmem:[#allocation7 + $0x620] sm:$0xff]
    %v292 = vld [vmem:[#allocation7 + $0x628] sm:$0xff]
    %v293 = vld [vmem:[#allocation7 + $0x630] sm:$0xff]
    %v294 = vld [vmem:[#allocation7 + $0x638] sm:$0xff]
    %v295 = vld [vmem:[#allocation7 + $0x640] sm:$0xff]
    %v296 = vld [vmem:[#allocation7 + $0x648] sm:$0xff]
    %v297 = vld [vmem:[#allocation7 + $0x650] sm:$0xff]
    %v298 = vld [vmem:[#allocation7 + $0x658] sm:$0xff]
    %v299 = vld [vmem:[#allocation7 + $0x660] sm:$0xff]
    %v300 = vld [vmem:[#allocation7 + $0x668] sm:$0xff]
    %v301 = vld [vmem:[#allocation7 + $0x670] sm:$0xff]
    %v302 = vld [vmem:[#allocation7 + $0x678] sm:$0xff]
    %v303 = vld [vmem:[#allocation7 + $0x680] sm:$0xff]
    %v304 = vld [vmem:[#allocation7 + $0x688] sm:$0xff]
    %v305 = vld [vmem:[#allocation7 + $0x690] sm:$0xff]
    %v306 = vld [vmem:[#allocation7 + $0x698] sm:$0xff]
    %v307 = vld [vmem:[#allocation7 + $0x6a0] sm:$0xff]
    %v308 = vld [vmem:[#allocation7 + $0x6a8] sm:$0xff]
    %v309 = vld [vmem:[#allocation7 + $0x6b0] sm:$0xff]
    %v310 = vld [vmem:[#allocation7 + $0x6b8] sm:$0xff]
    %v311 = vld [vmem:[#allocation7 + $0x6c0] sm:$0xff]
    %v312 = vld [vmem:[#allocation7 + $0x6c8] sm:$0xff]
    %v313 = vld [vmem:[#allocation7 + $0x6d0] sm:$0xff]
    %v314 = vld [vmem:[#allocation7 + $0x6d8] sm:$0xff]
    %v315 = vld [vmem:[#allocation7 + $0x6e0] sm:$0xff]
    %v316 = vld [vmem:[#allocation7 + $0x6e8] sm:$0xff]
    %v317 = vld [vmem:[#allocation7 + $0x6f0] sm:$0xff]
    %v318 = vld [vmem:[#allocation7 + $0x6f8] sm:$0xff]
    %v319 = vld [vmem:[#allocation7 + $0x700] sm:$0xff]
    %v320 = vld [vmem:[#allocation7 + $0x708] sm:$0xff]
    %v321 = vld [vmem:[#allocation7 + $0x710] sm:$0xff]
    %v322 = vld [vmem:[#allocation7 + $0x718] sm:$0xff]
    %v323 = vld [vmem:[#allocation7 + $0x720] sm:$0xff]
    %v324 = vld [vmem:[#allocation7 + $0x728] sm:$0xff]
    %v325 = vld [vmem:[#allocation7 + $0x730] sm:$0xff]
    %v326 = vld [vmem:[#allocation7 + $0x738] sm:$0xff]
    %v327 = vld [vmem:[#allocation7 + $0x740] sm:$0xff]
    %v328 = vld [vmem:[#allocation7 + $0x748] sm:$0xff]
    %v329 = vld [vmem:[#allocation7 + $0x750] sm:$0xff]
    %v330 = vld [vmem:[#allocation7 + $0x758] sm:$0xff]
    %v331 = vld [vmem:[#allocation7 + $0x760] sm:$0xff]
    %v332 = vld [vmem:[#allocation7 + $0x768] sm:$0xff]
    %v333 = vld [vmem:[#allocation7 + $0x770] sm:$0xff]
    %v334 = vld [vmem:[#allocation7 + $0x778] sm:$0xff]
    %v335 = vld [vmem:[#allocation7 + $0x780] sm:$0xff]
    %v336 = vld [vmem:[#allocation7 + $0x788] sm:$0xff]
    %v337 = vld [vmem:[#allocation7 + $0x790] sm:$0xff]
    %v338 = vld [vmem:[#allocation7 + $0x798] sm:$0xff]
    %v339 = vld [vmem:[#allocation7 + $0x7a0] sm:$0xff]
    %v340 = vld [vmem:[#allocation7 + $0x7a8] sm:$0xff]
    %v341 = vld [vmem:[#allocation7 + $0x7b0] sm:$0xff]
    %v342 = vld [vmem:[#allocation7 + $0x7b8] sm:$0xff]
    %v343 = vld [vmem:[#allocation7 + $0x7c0] sm:$0xff]
    %v344 = vld [vmem:[#allocation7 + $0x7c8] sm:$0xff]
    %v345 = vld [vmem:[#allocation7 + $0x7d0] sm:$0xff]
    %v346 = vld [vmem:[#allocation7 + $0x7d8] sm:$0xff]
    %v347 = vld [vmem:[#allocation7 + $0x7e0] sm:$0xff]
    %v348 = vld [vmem:[#allocation7 + $0x7e8] sm:$0xff]
    %v349 = vld [vmem:[#allocation7 + $0x7f0] sm:$0xff]
    %v350 = vld [vmem:[#allocation7 + $0x7f8] sm:$0xff]
    %v351 = vld [vmem:[#allocation2] sm:$0xff]
    %v352 = vld [vmem:[#allocation2 + $0x8] sm:$0xff]
    %v353 = vld [vmem:[#allocation3] sm:$0xff]
    %v354 = vld [vmem:[#allocation3 + $0x8] sm:$0xff]
    %v355 = vld [vmem:[#allocation4] sm:$0xff]
    %v356 = vld [vmem:[#allocation4 + $0x8] sm:$0xff]
    %v357 = vld [vmem:[#allocation4 + $0x10] sm:$0xff]
    %v358 = vld [vmem:[#allocation4 + $0x18] sm:$0xff]
    %v359 = vld [vmem:[#allocation4 + $0x20] sm:$0xff]
    %v360 = vld [vmem:[#allocation4 + $0x28] sm:$0xff]
    %v361 = vld [vmem:[#allocation4 + $0x30] sm:$0xff]
    %v362 = vld [vmem:[#allocation4 + $0x38] sm:$0xff]
    %363 = vmatpush.msra.mxu0 %v215
    %364 = vmatpush.msra.mxu0 %v207
    %365 = vmatpush.msra.mxu0 %v199
    %366 = vmatpush.msra.mxu0 %v191
    %367 = vmatpush.msra.mxu0 %v183
    %368 = vmatpush.msra.mxu0 %v175
    %369 = vmatpush.msra.mxu0 %v167
    %370 = vmatpush.msra.mxu0 %v159
    %371 = vmatpush.msra.mxu0 %v151
    %372 = vmatpush.msra.mxu0 %v143
    %373 = vmatpush.msra.mxu0 %v135
    %374 = vmatpush.msra.mxu0 %v127
    %375 = vmatpush.msra.mxu0 %v119
    %376 = vmatpush.msra.mxu0 %v111
    %377 = vmatpush.msra.mxu0 %v103
    %378 = vmatpush.msra.mxu0 %v95
    %379 = vmatmul.f32.gmra.mxu0 %v351
    %v380 = vpop.f32.mrf.mxu0
    %v381 = vadd.f32 0.0, %v380
    %382 = vdwg.mxu0
    %383 = vmatpush.msra.mxu0 %v343
    %384 = vmatpush.msra.mxu0 %v335
    %385 = vmatpush.msra.mxu0 %v327
    %386 = vmatpush.msra.mxu0 %v319
    %387 = vmatpush.msra.mxu0 %v311
    %388 = vmatpush.msra.mxu0 %v303
    %389 = vmatpush.msra.mxu0 %v295
    %390 = vmatpush.msra.mxu0 %v287
    %391 = vmatpush.msra.mxu0 %v279
    %392 = vmatpush.msra.mxu0 %v271
    %393 = vmatpush.msra.mxu0 %v263
    %394 = vmatpush.msra.mxu0 %v255
    %395 = vmatpush.msra.mxu0 %v247
    %396 = vmatpush.msra.mxu0 %v239
    %397 = vmatpush.msra.mxu0 %v231
    %398 = vmatpush.msra.mxu0 %v223
    %399 = vmatmul.f32.gmra.mxu0 %v352
    %v400 = vpop.f32.mrf.mxu0
    %v401 = vadd.f32 %v381, %v400
    %402 = vdwg.mxu0
    %403 = vmatpush.msra.mxu0 %v216
    %404 = vmatpush.msra.mxu0 %v208
    %405 = vmatpush.msra.mxu0 %v200
    %406 = vmatpush.msra.mxu0 %v192
    %407 = vmatpush.msra.mxu0 %v184
    %408 = vmatpush.msra.mxu0 %v176
    %409 = vmatpush.msra.mxu0 %v168
    %410 = vmatpush.msra.mxu0 %v160
    %411 = vmatpush.msra.mxu0 %v152
    %412 = vmatpush.msra.mxu0 %v144
    %413 = vmatpush.msra.mxu0 %v136
    %414 = vmatpush.msra.mxu0 %v128
    %415 = vmatpush.msra.mxu0 %v120
    %416 = vmatpush.msra.mxu0 %v112
    %417 = vmatpush.msra.mxu0 %v104
    %418 = vmatpush.msra.mxu0 %v96
    %419 = vmatmul.f32.gmra.mxu0 %v351
    %v420 = vpop.f32.mrf.mxu0
    %v421 = vadd.f32 0.0, %v420
    %422 = vdwg.mxu0
    %423 = vmatpush.msra.mxu0 %v344
    %424 = vmatpush.msra.mxu0 %v336
    %425 = vmatpush.msra.mxu0 %v328
    %426 = vmatpush.msra.mxu0 %v320
    %427 = vmatpush.msra.mxu0 %v312
    %428 = vmatpush.msra.mxu0 %v304
    %429 = vmatpush.msra.mxu0 %v296
    %430 = vmatpush.msra.mxu0 %v288
    %431 = vmatpush.msra.mxu0 %v280
    %432 = vmatpush.msra.mxu0 %v272
    %433 = vmatpush.msra.mxu0 %v264
    %434 = vmatpush.msra.mxu0 %v256
    %435 = vmatpush.msra.mxu0 %v248
    %436 = vmatpush.msra.mxu0 %v240
    %437 = vmatpush.msra.mxu0 %v232
    %438 = vmatpush.msra.mxu0 %v224
    %439 = vmatmul.f32.gmra.mxu0 %v352
    %v440 = vpop.f32.mrf.mxu0
    %v441 = vadd.f32 %v421, %v440
    %442 = vdwg.mxu0
    %443 = vmatpush.msra.mxu0 %v217
    %444 = vmatpush.msra.mxu0 %v209
    %445 = vmatpush.msra.mxu0 %v201
    %446 = vmatpush.msra.mxu0 %v193
    %447 = vmatpush.msra.mxu0 %v185
    %448 = vmatpush.msra.mxu0 %v177
    %449 = vmatpush.msra.mxu0 %v169
    %450 = vmatpush.msra.mxu0 %v161
    %451 = vmatpush.msra.mxu0 %v153
    %452 = vmatpush.msra.mxu0 %v145
    %453 = vmatpush.msra.mxu0 %v137
    %454 = vmatpush.msra.mxu0 %v129
    %455 = vmatpush.msra.mxu0 %v121
    %456 = vmatpush.msra.mxu0 %v113
    %457 = vmatpush.msra.mxu0 %v105
    %458 = vmatpush.msra.mxu0 %v97
    %459 = vmatmul.f32.gmra.mxu0 %v351
    %v460 = vpop.f32.mrf.mxu0
    %v461 = vadd.f32 0.0, %v460
    %462 = vdwg.mxu0
    %463 = vmatpush.msra.mxu0 %v345
    %464 = vmatpush.msra.mxu0 %v337
    %465 = vmatpush.msra.mxu0 %v329
    %466 = vmatpush.msra.mxu0 %v321
    %467 = vmatpush.msra.mxu0 %v313
    %468 = vmatpush.msra.mxu0 %v305
    %469 = vmatpush.msra.mxu0 %v297
    %470 = vmatpush.msra.mxu0 %v289
    %471 = vmatpush.msra.mxu0 %v281
    %472 = vmatpush.msra.mxu0 %v273
    %473 = vmatpush.msra.mxu0 %v265
    %474 = vmatpush.msra.mxu0 %v257
    %475 = vmatpush.msra.mxu0 %v249
    %476 = vmatpush.msra.mxu0 %v241
    %477 = vmatpush.msra.mxu0 %v233
    %478 = vmatpush.msra.mxu0 %v225
    %479 = vmatmul.f32.gmra.mxu0 %v352
    %v480 = vpop.f32.mrf.mxu0
    %v481 = vadd.f32 %v461, %v480
    %482 = vdwg.mxu0
    %483 = vmatpush.msra.mxu0 %v218
    %484 = vmatpush.msra.mxu0 %v210
    %485 = vmatpush.msra.mxu0 %v202
    %486 = vmatpush.msra.mxu0 %v194
    %487 = vmatpush.msra.mxu0 %v186
    %488 = vmatpush.msra.mxu0 %v178
    %489 = vmatpush.msra.mxu0 %v170
    %490 = vmatpush.msra.mxu0 %v162
    %491 = vmatpush.msra.mxu0 %v154
    %492 = vmatpush.msra.mxu0 %v146
    %493 = vmatpush.msra.mxu0 %v138
    %494 = vmatpush.msra.mxu0 %v130
    %495 = vmatpush.msra.mxu0 %v122
    %496 = vmatpush.msra.mxu0 %v114
    %497 = vmatpush.msra.mxu0 %v106
    %498 = vmatpush.msra.mxu0 %v98
    %499 = vmatmul.f32.gmra.mxu0 %v351
    %v500 = vpop.f32.mrf.mxu0
    %v501 = vadd.f32 0.0, %v500
    %502 = vdwg.mxu0
    %503 = vmatpush.msra.mxu0 %v346
    %504 = vmatpush.msra.mxu0 %v338
    %505 = vmatpush.msra.mxu0 %v330
    %506 = vmatpush.msra.mxu0 %v322
    %507 = vmatpush.msra.mxu0 %v314
    %508 = vmatpush.msra.mxu0 %v306
    %509 = vmatpush.msra.mxu0 %v298
    %510 = vmatpush.msra.mxu0 %v290
    %511 = vmatpush.msra.mxu0 %v282
    %512 = vmatpush.msra.mxu0 %v274
    %513 = vmatpush.msra.mxu0 %v266
    %514 = vmatpush.msra.mxu0 %v258
    %515 = vmatpush.msra.mxu0 %v250
    %516 = vmatpush.msra.mxu0 %v242
    %517 = vmatpush.msra.mxu0 %v234
    %518 = vmatpush.msra.mxu0 %v226
    %519 = vmatmul.f32.gmra.mxu0 %v352
    %v520 = vpop.f32.mrf.mxu0
    %v521 = vadd.f32 %v501, %v520
    %522 = vdwg.mxu0
    %523 = vmatpush.msra.mxu0 %v219
    %524 = vmatpush.msra.mxu0 %v211
    %525 = vmatpush.msra.mxu0 %v203
    %526 = vmatpush.msra.mxu0 %v195
    %527 = vmatpush.msra.mxu0 %v187
    %528 = vmatpush.msra.mxu0 %v179
    %529 = vmatpush.msra.mxu0 %v171
    %530 = vmatpush.msra.mxu0 %v163
    %531 = vmatpush.msra.mxu0 %v155
    %532 = vmatpush.msra.mxu0 %v147
    %533 = vmatpush.msra.mxu0 %v139
    %534 = vmatpush.msra.mxu0 %v131
    %535 = vmatpush.msra.mxu0 %v123
    %536 = vmatpush.msra.mxu0 %v115
    %537 = vmatpush.msra.mxu0 %v107
    %538 = vmatpush.msra.mxu0 %v99
    %539 = vmatmul.f32.gmra.mxu0 %v351
    %v540 = vpop.f32.mrf.mxu0
    %v541 = vadd.f32 0.0, %v540
    %542 = vdwg.mxu0
    %543 = vmatpush.msra.mxu0 %v347
    %544 = vmatpush.msra.mxu0 %v339
    %545 = vmatpush.msra.mxu0 %v331
    %546 = vmatpush.msra.mxu0 %v323
    %547 = vmatpush.msra.mxu0 %v315
    %548 = vmatpush.msra.mxu0 %v307
    %549 = vmatpush.msra.mxu0 %v299
    %550 = vmatpush.msra.mxu0 %v291
    %551 = vmatpush.msra.mxu0 %v283
    %552 = vmatpush.msra.mxu0 %v275
    %553 = vmatpush.msra.mxu0 %v267
    %554 = vmatpush.msra.mxu0 %v259
    %555 = vmatpush.msra.mxu0 %v251
    %556 = vmatpush.msra.mxu0 %v243
    %557 = vmatpush.msra.mxu0 %v235
    %558 = vmatpush.msra.mxu0 %v227
    %559 = vmatmul.f32.gmra.mxu0 %v352
    %v560 = vpop.f32.mrf.mxu0
    %v561 = vadd.f32 %v541, %v560
    %562 = vdwg.mxu0
    %563 = vmatpush.msra.mxu0 %v220
    %564 = vmatpush.msra.mxu0 %v212
    %565 = vmatpush.msra.mxu0 %v204
    %566 = vmatpush.msra.mxu0 %v196
    %567 = vmatpush.msra.mxu0 %v188
    %568 = vmatpush.msra.mxu0 %v180
    %569 = vmatpush.msra.mxu0 %v172
    %570 = vmatpush.msra.mxu0 %v164
    %571 = vmatpush.msra.mxu0 %v156
    %572 = vmatpush.msra.mxu0 %v148
    %573 = vmatpush.msra.mxu0 %v140
    %574 = vmatpush.msra.mxu0 %v132
    %575 = vmatpush.msra.mxu0 %v124
    %576 = vmatpush.msra.mxu0 %v116
    %577 = vmatpush.msra.mxu0 %v108
    %578 = vmatpush.msra.mxu0 %v100
    %579 = vmatmul.f32.gmra.mxu0 %v351
    %v580 = vpop.f32.mrf.mxu0
    %v581 = vadd.f32 0.0, %v580
    %582 = vdwg.mxu0
    %583 = vmatpush.msra.mxu0 %v348
    %584 = vmatpush.msra.mxu0 %v340
    %585 = vmatpush.msra.mxu0 %v332
    %586 = vmatpush.msra.mxu0 %v324
    %587 = vmatpush.msra.mxu0 %v316
    %588 = vmatpush.msra.mxu0 %v308
    %589 = vmatpush.msra.mxu0 %v300
    %590 = vmatpush.msra.mxu0 %v292
    %591 = vmatpush.msra.mxu0 %v284
    %592 = vmatpush.msra.mxu0 %v276
    %593 = vmatpush.msra.mxu0 %v268
    %594 = vmatpush.msra.mxu0 %v260
    %595 = vmatpush.msra.mxu0 %v252
    %596 = vmatpush.msra.mxu0 %v244
    %597 = vmatpush.msra.mxu0 %v236
    %598 = vmatpush.msra.mxu0 %v228
    %599 = vmatmul.f32.gmra.mxu0 %v352
    %v600 = vpop.f32.mrf.mxu0
    %v601 = vadd.f32 %v581, %v600
    %602 = vdwg.mxu0
    %603 = vmatpush.msra.mxu0 %v221
    %604 = vmatpush.msra.mxu0 %v213
    %605 = vmatpush.msra.mxu0 %v205
    %606 = vmatpush.msra.mxu0 %v197
    %607 = vmatpush.msra.mxu0 %v189
    %608 = vmatpush.msra.mxu0 %v181
    %609 = vmatpush.msra.mxu0 %v173
    %610 = vmatpush.msra.mxu0 %v165
    %611 = vmatpush.msra.mxu0 %v157
    %612 = vmatpush.msra.mxu0 %v149
    %613 = vmatpush.msra.mxu0 %v141
    %614 = vmatpush.msra.mxu0 %v133
    %615 = vmatpush.msra.mxu0 %v125
    %616 = vmatpush.msra.mxu0 %v117
    %617 = vmatpush.msra.mxu0 %v109
    %618 = vmatpush.msra.mxu0 %v101
    %619 = vmatmul.f32.gmra.mxu0 %v351
    %v620 = vpop.f32.mrf.mxu0
    %v621 = vadd.f32 0.0, %v620
    %622 = vdwg.mxu0
    %623 = vmatpush.msra.mxu0 %v349
    %624 = vmatpush.msra.mxu0 %v341
    %625 = vmatpush.msra.mxu0 %v333
    %626 = vmatpush.msra.mxu0 %v325
    %627 = vmatpush.msra.mxu0 %v317
    %628 = vmatpush.msra.mxu0 %v309
    %629 = vmatpush.msra.mxu0 %v301
    %630 = vmatpush.msra.mxu0 %v293
    %631 = vmatpush.msra.mxu0 %v285
    %632 = vmatpush.msra.mxu0 %v277
    %633 = vmatpush.msra.mxu0 %v269
    %634 = vmatpush.msra.mxu0 %v261
    %635 = vmatpush.msra.mxu0 %v253
    %636 = vmatpush.msra.mxu0 %v245
    %637 = vmatpush.msra.mxu0 %v237
    %638 = vmatpush.msra.mxu0 %v229
    %639 = vmatmul.f32.gmra.mxu0 %v352
    %v640 = vpop.f32.mrf.mxu0
    %v641 = vadd.f32 %v621, %v640
    %642 = vdwg.mxu0
    %643 = vmatpush.msra.mxu0 %v222
    %644 = vmatpush.msra.mxu0 %v214
    %645 = vmatpush.msra.mxu0 %v206
    %646 = vmatpush.msra.mxu0 %v198
    %647 = vmatpush.msra.mxu0 %v190
    %648 = vmatpush.msra.mxu0 %v182
    %649 = vmatpush.msra.mxu0 %v174
    %650 = vmatpush.msra.mxu0 %v166
    %651 = vmatpush.msra.mxu0 %v158
    %652 = vmatpush.msra.mxu0 %v150
    %653 = vmatpush.msra.mxu0 %v142
    %654 = vmatpush.msra.mxu0 %v134
    %655 = vmatpush.msra.mxu0 %v126
    %656 = vmatpush.msra.mxu0 %v118
    %657 = vmatpush.msra.mxu0 %v110
    %658 = vmatpush.msra.mxu0 %v102
    %659 = vmatmul.f32.gmra.mxu0 %v351
    %v660 = vpop.f32.mrf.mxu0
    %v661 = vadd.f32 0.0, %v660
    %662 = vdwg.mxu0
    %663 = vmatpush.msra.mxu0 %v350
    %664 = vmatpush.msra.mxu0 %v342
    %665 = vmatpush.msra.mxu0 %v334
    %666 = vmatpush.msra.mxu0 %v326
    %667 = vmatpush.msra.mxu0 %v318
    %668 = vmatpush.msra.mxu0 %v310
    %669 = vmatpush.msra.mxu0 %v302
    %670 = vmatpush.msra.mxu0 %v294
    %671 = vmatpush.msra.mxu0 %v286
    %672 = vmatpush.msra.mxu0 %v278
    %673 = vmatpush.msra.mxu0 %v270
    %674 = vmatpush.msra.mxu0 %v262
    %675 = vmatpush.msra.mxu0 %v254
    %676 = vmatpush.msra.mxu0 %v246
    %677 = vmatpush.msra.mxu0 %v238
    %678 = vmatpush.msra.mxu0 %v230
    %679 = vmatmul.f32.gmra.mxu0 %v352
    %v680 = vpop.f32.mrf.mxu0
    %v681 = vadd.f32 %v661, %v680
    %682 = vdwg.mxu0
    %v683 = vadd.f32 %v355, %v401
    %v684 = vadd.f32 %v356, %v441
    %v685 = vadd.f32 %v357, %v481
    %v686 = vadd.f32 %v358, %v521
    %v687 = vadd.f32 %v359, %v561
    %v688 = vadd.f32 %v360, %v601
    %v689 = vadd.f32 %v361, %v641
    %v690 = vadd.f32 %v362, %v681
    %v691 = vxor.u32 %v683, 2147483648
    %v692 = vxor.u32 %v684, 2147483648
    %v693 = vmul.f32 %v691, 1.442695
    %v694 = vpow.pop %v693
    %v695 = vmul.f32 %v692, 1.442695
    %v696 = vpow.pop %v695
    %v697 = vadd.f32 %v694, 1.0
    %v698 = vadd.f32 %v696, 1.0
    %v699 = vrcp.pop %v697
    %v700 = vmul.f32 %v697, %v699
    %v701 = vsub.f32 1.0, %v700
    %v702 = vmul.f32 %v699, %v701
    %v703 = vadd.f32 %v699, %v702
    %vm704 = vweird.f32 %v697
    %vm705 = vweird.f32 %v699
    %vm706 = vmor %vm704, %vm705
    %v707 = vsel %vm706, %v699, %v703
    %v708 = vand.u32 2147483647, %v697
    %vm709 = vcmp.eq.f32.partialorder %v708, 8.507059e+37
    %v710 = vand.u32 %v697, 2147483648
    %v711 = vor.u32 1.1754944e-38, %v710
    %v712 = vsel %vm709, %v711, %v707
    %v713 = vmul.f32 1.0, %v712
    %v714 = vrcp.pop %v698
    %v715 = vmul.f32 %v698, %v714
    %v716 = vsub.f32 1.0, %v715
    %v717 = vmul.f32 %v714, %v716
    %v718 = vadd.f32 %v714, %v717
    %vm719 = vweird.f32 %v698
    %vm720 = vweird.f32 %v714
    %vm721 = vmor %vm719, %vm720
    %v722 = vsel %vm721, %v714, %v718
    %v723 = vand.u32 2147483647, %v698
    %vm724 = vcmp.eq.f32.partialorder %v723, 8.507059e+37
    %v725 = vand.u32 %v698, 2147483648
    %v726 = vor.u32 1.1754944e-38, %v725
    %v727 = vsel %vm724, %v726, %v722
    %v728 = vmul.f32 1.0, %v727
    %v729 = vxor.u32 %v685, 2147483648
    %v730 = vxor.u32 %v686, 2147483648
    %v731 = vmul.f32 %v729, 1.442695
    %v732 = vpow.pop %v731
    %v733 = vmul.f32 %v730, 1.442695
    %v734 = vpow.pop %v733
    %v735 = vadd.f32 %v732, 1.0
    %v736 = vadd.f32 %v734, 1.0
    %v737 = vrcp.pop %v735
    %v738 = vmul.f32 %v735, %v737
    %v739 = vsub.f32 1.0, %v738
    %v740 = vmul.f32 %v737, %v739
    %v741 = vadd.f32 %v737, %v740
    %vm742 = vweird.f32 %v735
    %vm743 = vweird.f32 %v737
    %vm744 = vmor %vm742, %vm743
    %v745 = vsel %vm744, %v737, %v741
    %v746 = vand.u32 2147483647, %v735
    %vm747 = vcmp.eq.f32.partialorder %v746, 8.507059e+37
    %v748 = vand.u32 %v735, 2147483648
    %v749 = vor.u32 1.1754944e-38, %v748
    %v750 = vsel %vm747, %v749, %v745
    %v751 = vmul.f32 1.0, %v750
    %v752 = vrcp.pop %v736
    %v753 = vmul.f32 %v736, %v752
    %v754 = vsub.f32 1.0, %v753
    %v755 = vmul.f32 %v752, %v754
    %v756 = vadd.f32 %v752, %v755
    %vm757 = vweird.f32 %v736
    %vm758 = vweird.f32 %v752
    %vm759 = vmor %vm757, %vm758
    %v760 = vsel %vm759, %v752, %v756
    %v761 = vand.u32 2147483647, %v736
    %vm762 = vcmp.eq.f32.partialorder %v761, 8.507059e+37
    %v763 = vand.u32 %v736, 2147483648
    %v764 = vor.u32 1.1754944e-38, %v763
    %v765 = vsel %vm762, %v764, %v760
    %v766 = vmul.f32 1.0, %v765
    %v767 = vtanh.pop %v687
    %v768 = vtanh.pop %v688
    %v769 = vxor.u32 %v689, 2147483648
    %v770 = vxor.u32 %v690, 2147483648
    %v771 = vmul.f32 %v769, 1.442695
    %v772 = vpow.pop %v771
    %v773 = vmul.f32 %v770, 1.442695
    %v774 = vpow.pop %v773
    %v775 = vadd.f32 %v772, 1.0
    %v776 = vadd.f32 %v774, 1.0
    %v777 = vrcp.pop %v775
    %v778 = vmul.f32 %v775, %v777
    %v779 = vsub.f32 1.0, %v778
    %v780 = vmul.f32 %v777, %v779
    %v781 = vadd.f32 %v777, %v780
    %vm782 = vweird.f32 %v775
    %vm783 = vweird.f32 %v777
    %vm784 = vmor %vm782, %vm783
    %v785 = vsel %vm784, %v777, %v781
    %v786 = vand.u32 2147483647, %v775
    %vm787 = vcmp.eq.f32.partialorder %v786, 8.507059e+37
    %v788 = vand.u32 %v775, 2147483648
    %v789 = vor.u32 1.1754944e-38, %v788
    %v790 = vsel %vm787, %v789, %v785
    %v791 = vmul.f32 1.0, %v790
    %v792 = vrcp.pop %v776
    %v793 = vmul.f32 %v776, %v792
    %v794 = vsub.f32 1.0, %v793
    %v795 = vmul.f32 %v792, %v794
    %v796 = vadd.f32 %v792, %v795
    %vm797 = vweird.f32 %v776
    %vm798 = vweird.f32 %v792
    %vm799 = vmor %vm797, %vm798
    %v800 = vsel %vm799, %v792, %v796
    %v801 = vand.u32 2147483647, %v776
    %vm802 = vcmp.eq.f32.partialorder %v801, 8.507059e+37
    %v803 = vand.u32 %v776, 2147483648
    %v804 = vor.u32 1.1754944e-38, %v803
    %v805 = vsel %vm802, %v804, %v800
    %v806 = vmul.f32 1.0, %v805
    %v807 = vmul.f32 %v751, %v353
    %v808 = vmul.f32 %v766, %v354
    %v809 = vmul.f32 %v713, %v767
    %v810 = vmul.f32 %v728, %v768
    %v811 = vadd.f32 %v807, %v809
    %v812 = vadd.f32 %v808, %v810
    %v813 = vtanh.pop %v811
    %v814 = vtanh.pop %v812
    %v815 = vmul.f32 %v791, %v813
    %v816 = vmul.f32 %v806, %v814
    %s817 = scalar_lea.vmem [#allocation4], 64
    %v818 = vld [vmem:[%s817] sm:$0xff]
    %v819 = vld [vmem:[%s817 + $0x8] sm:$0xff]
    %v820 = vld [vmem:[%s817 + $0x10] sm:$0xff]
    %v821 = vld [vmem:[%s817 + $0x18] sm:$0xff]
    %v822 = vld [vmem:[%s817 + $0x20] sm:$0xff]
    %v823 = vld [vmem:[%s817 + $0x28] sm:$0xff]
    %v824 = vld [vmem:[%s817 + $0x30] sm:$0xff]
    %v825 = vld [vmem:[%s817 + $0x38] sm:$0xff]
    %826 = vmatpush.msra.mxu0 %v215
    %827 = vmatpush.msra.mxu0 %v207
    %828 = vmatpush.msra.mxu0 %v199
    %829 = vmatpush.msra.mxu0 %v191
    %830 = vmatpush.msra.mxu0 %v183
    %831 = vmatpush.msra.mxu0 %v175
    %832 = vmatpush.msra.mxu0 %v167
    %833 = vmatpush.msra.mxu0 %v159
    %834 = vmatpush.msra.mxu0 %v151
    %835 = vmatpush.msra.mxu0 %v143
    %836 = vmatpush.msra.mxu0 %v135
    %837 = vmatpush.msra.mxu0 %v127
    %838 = vmatpush.msra.mxu0 %v119
    %839 = vmatpush.msra.mxu0 %v111
    %840 = vmatpush.msra.mxu0 %v103
    %841 = vmatpush.msra.mxu0 %v95
    %842 = vmatmul.f32.gmra.mxu0 %v815
    %v843 = vpop.f32.mrf.mxu0
    %v844 = vadd.f32 0.0, %v843
    %845 = vdwg.mxu0
    %846 = vmatpush.msra.mxu0 %v343
    %847 = vmatpush.msra.mxu0 %v335
    %848 = vmatpush.msra.mxu0 %v327
    %849 = vmatpush.msra.mxu0 %v319
    %850 = vmatpush.msra.mxu0 %v311
    %851 = vmatpush.msra.mxu0 %v303
    %852 = vmatpush.msra.mxu0 %v295
    %853 = vmatpush.msra.mxu0 %v287
    %854 = vmatpush.msra.mxu0 %v279
    %855 = vmatpush.msra.mxu0 %v271
    %856 = vmatpush.msra.mxu0 %v263
    %857 = vmatpush.msra.mxu0 %v255
    %858 = vmatpush.msra.mxu0 %v247
    %859 = vmatpush.msra.mxu0 %v239
    %860 = vmatpush.msra.mxu0 %v231
    %861 = vmatpush.msra.mxu0 %v223
    %862 = vmatmul.f32.gmra.mxu0 %v816
    %v863 = vpop.f32.mrf.mxu0
    %v864 = vadd.f32 %v844, %v863
    %865 = vdwg.mxu0
    %866 = vmatpush.msra.mxu0 %v216
    %867 = vmatpush.msra.mxu0 %v208
    %868 = vmatpush.msra.mxu0 %v200
    %869 = vmatpush.msra.mxu0 %v192
    %870 = vmatpush.msra.mxu0 %v184
    %871 = vmatpush.msra.mxu0 %v176
    %872 = vmatpush.msra.mxu0 %v168
    %873 = vmatpush.msra.mxu0 %v160
    %874 = vmatpush.msra.mxu0 %v152
    %875 = vmatpush.msra.mxu0 %v144
    %876 = vmatpush.msra.mxu0 %v136
    %877 = vmatpush.msra.mxu0 %v128
    %878 = vmatpush.msra.mxu0 %v120
    %879 = vmatpush.msra.mxu0 %v112
    %880 = vmatpush.msra.mxu0 %v104
    %881 = vmatpush.msra.mxu0 %v96
    %882 = vmatmul.f32.gmra.mxu0 %v815
    %v883 = vpop.f32.mrf.mxu0
    %v884 = vadd.f32 0.0, %v883
    %885 = vdwg.mxu0
    %886 = vmatpush.msra.mxu0 %v344
    %887 = vmatpush.msra.mxu0 %v336
    %888 = vmatpush.msra.mxu0 %v328
    %889 = vmatpush.msra.mxu0 %v320
    %890 = vmatpush.msra.mxu0 %v312
    %891 = vmatpush.msra.mxu0 %v304
    %892 = vmatpush.msra.mxu0 %v296
    %893 = vmatpush.msra.mxu0 %v288
    %894 = vmatpush.msra.mxu0 %v280
    %895 = vmatpush.msra.mxu0 %v272
    %896 = vmatpush.msra.mxu0 %v264
    %897 = vmatpush.msra.mxu0 %v256
    %898 = vmatpush.msra.mxu0 %v248
    %899 = vmatpush.msra.mxu0 %v240
    %900 = vmatpush.msra.mxu0 %v232
    %901 = vmatpush.msra.mxu0 %v224
    %902 = vmatmul.f32.gmra.mxu0 %v816
    %v903 = vpop.f32.mrf.mxu0
    %v904 = vadd.f32 %v884, %v903
    %905 = vdwg.mxu0
    %906 = vmatpush.msra.mxu0 %v217
    %907 = vmatpush.msra.mxu0 %v209
    %908 = vmatpush.msra.mxu0 %v201
    %909 = vmatpush.msra.mxu0 %v193
    %910 = vmatpush.msra.mxu0 %v185
    %911 = vmatpush.msra.mxu0 %v177
    %912 = vmatpush.msra.mxu0 %v169
    %913 = vmatpush.msra.mxu0 %v161
    %914 = vmatpush.msra.mxu0 %v153
    %915 = vmatpush.msra.mxu0 %v145
    %916 = vmatpush.msra.mxu0 %v137
    %917 = vmatpush.msra.mxu0 %v129
    %918 = vmatpush.msra.mxu0 %v121
    %919 = vmatpush.msra.mxu0 %v113
    %920 = vmatpush.msra.mxu0 %v105
    %921 = vmatpush.msra.mxu0 %v97
    %922 = vmatmul.f32.gmra.mxu0 %v815
    %v923 = vpop.f32.mrf.mxu0
    %v924 = vadd.f32 0.0, %v923
    %925 = vdwg.mxu0
    %926 = vmatpush.msra.mxu0 %v345
    %927 = vmatpush.msra.mxu0 %v337
    %928 = vmatpush.msra.mxu0 %v329
    %929 = vmatpush.msra.mxu0 %v321
    %930 = vmatpush.msra.mxu0 %v313
    %931 = vmatpush.msra.mxu0 %v305
    %932 = vmatpush.msra.mxu0 %v297
    %933 = vmatpush.msra.mxu0 %v289
    %934 = vmatpush.msra.mxu0 %v281
    %935 = vmatpush.msra.mxu0 %v273
    %936 = vmatpush.msra.mxu0 %v265
    %937 = vmatpush.msra.mxu0 %v257
    %938 = vmatpush.msra.mxu0 %v249
    %939 = vmatpush.msra.mxu0 %v241
    %940 = vmatpush.msra.mxu0 %v233
    %941 = vmatpush.msra.mxu0 %v225
    %942 = vmatmul.f32.gmra.mxu0 %v816
    %v943 = vpop.f32.mrf.mxu0
    %v944 = vadd.f32 %v924, %v943
    %945 = vdwg.mxu0
    %946 = vmatpush.msra.mxu0 %v218
    %947 = vmatpush.msra.mxu0 %v210
    %948 = vmatpush.msra.mxu0 %v202
    %949 = vmatpush.msra.mxu0 %v194
    %950 = vmatpush.msra.mxu0 %v186
    %951 = vmatpush.msra.mxu0 %v178
    %952 = vmatpush.msra.mxu0 %v170
    %953 = vmatpush.msra.mxu0 %v162
    %954 = vmatpush.msra.mxu0 %v154
    %955 = vmatpush.msra.mxu0 %v146
    %956 = vmatpush.msra.mxu0 %v138
    %957 = vmatpush.msra.mxu0 %v130
    %958 = vmatpush.msra.mxu0 %v122
    %959 = vmatpush.msra.mxu0 %v114
    %960 = vmatpush.msra.mxu0 %v106
    %961 = vmatpush.msra.mxu0 %v98
    %962 = vmatmul.f32.gmra.mxu0 %v815
    %v963 = vpop.f32.mrf.mxu0
    %v964 = vadd.f32 0.0, %v963
    %965 = vdwg.mxu0
    %966 = vmatpush.msra.mxu0 %v346
    %967 = vmatpush.msra.mxu0 %v338
    %968 = vmatpush.msra.mxu0 %v330
    %969 = vmatpush.msra.mxu0 %v322
    %970 = vmatpush.msra.mxu0 %v314
    %971 = vmatpush.msra.mxu0 %v306
    %972 = vmatpush.msra.mxu0 %v298
    %973 = vmatpush.msra.mxu0 %v290
    %974 = vmatpush.msra.mxu0 %v282
    %975 = vmatpush.msra.mxu0 %v274
    %976 = vmatpush.msra.mxu0 %v266
    %977 = vmatpush.msra.mxu0 %v258
    %978 = vmatpush.msra.mxu0 %v250
    %979 = vmatpush.msra.mxu0 %v242
    %980 = vmatpush.msra.mxu0 %v234
    %981 = vmatpush.msra.mxu0 %v226
    %982 = vmatmul.f32.gmra.mxu0 %v816
    %v983 = vpop.f32.mrf.mxu0
    %v984 = vadd.f32 %v964, %v983
    %985 = vdwg.mxu0
    %986 = vmatpush.msra.mxu0 %v219
    %987 = vmatpush.msra.mxu0 %v211
    %988 = vmatpush.msra.mxu0 %v203
    %989 = vmatpush.msra.mxu0 %v195
    %990 = vmatpush.msra.mxu0 %v187
    %991 = vmatpush.msra.mxu0 %v179
    %992 = vmatpush.msra.mxu0 %v171
    %993 = vmatpush.msra.mxu0 %v163
    %994 = vmatpush.msra.mxu0 %v155
    %995 = vmatpush.msra.mxu0 %v147
    %996 = vmatpush.msra.mxu0 %v139
    %997 = vmatpush.msra.mxu0 %v131
    %998 = vmatpush.msra.mxu0 %v123
    %999 = vmatpush.msra.mxu0 %v115
    %1000 = vmatpush.msra.mxu0 %v107
    %1001 = vmatpush.msra.mxu0 %v99
    %1002 = vmatmul.f32.gmra.mxu0 %v815
    %v1003 = vpop.f32.mrf.mxu0
    %v1004 = vadd.f32 0.0, %v1003
    %1005 = vdwg.mxu0
    %1006 = vmatpush.msra.mxu0 %v347
    %1007 = vmatpush.msra.mxu0 %v339
    %1008 = vmatpush.msra.mxu0 %v331
    %1009 = vmatpush.msra.mxu0 %v323
    %1010 = vmatpush.msra.mxu0 %v315
    %1011 = vmatpush.msra.mxu0 %v307
    %1012 = vmatpush.msra.mxu0 %v299
    %1013 = vmatpush.msra.mxu0 %v291
    %1014 = vmatpush.msra.mxu0 %v283
    %1015 = vmatpush.msra.mxu0 %v275
    %1016 = vmatpush.msra.mxu0 %v267
    %1017 = vmatpush.msra.mxu0 %v259
    %1018 = vmatpush.msra.mxu0 %v251
    %1019 = vmatpush.msra.mxu0 %v243
    %1020 = vmatpush.msra.mxu0 %v235
    %1021 = vmatpush.msra.mxu0 %v227
    %1022 = vmatmul.f32.gmra.mxu0 %v816
    %v1023 = vpop.f32.mrf.mxu0
    %v1024 = vadd.f32 %v1004, %v1023
    %1025 = vdwg.mxu0
    %1026 = vmatpush.msra.mxu0 %v220
    %1027 = vmatpush.msra.mxu0 %v212
    %1028 = vmatpush.msra.mxu0 %v204
    %1029 = vmatpush.msra.mxu0 %v196
    %1030 = vmatpush.msra.mxu0 %v188
    %1031 = vmatpush.msra.mxu0 %v180
    %1032 = vmatpush.msra.mxu0 %v172
    %1033 = vmatpush.msra.mxu0 %v164
    %1034 = vmatpush.msra.mxu0 %v156
    %1035 = vmatpush.msra.mxu0 %v148
    %1036 = vmatpush.msra.mxu0 %v140
    %1037 = vmatpush.msra.mxu0 %v132
    %1038 = vmatpush.msra.mxu0 %v124
    %1039 = vmatpush.msra.mxu0 %v116
    %1040 = vmatpush.msra.mxu0 %v108
    %1041 = vmatpush.msra.mxu0 %v100
    %1042 = vmatmul.f32.gmra.mxu0 %v815
    %v1043 = vpop.f32.mrf.mxu0
    %v1044 = vadd.f32 0.0, %v1043
    %1045 = vdwg.mxu0
    %1046 = vmatpush.msra.mxu0 %v348
    %1047 = vmatpush.msra.mxu0 %v340
    %1048 = vmatpush.msra.mxu0 %v332
    %1049 = vmatpush.msra.mxu0 %v324
    %1050 = vmatpush.msra.mxu0 %v316
    %1051 = vmatpush.msra.mxu0 %v308
    %1052 = vmatpush.msra.mxu0 %v300
    %1053 = vmatpush.msra.mxu0 %v292
    %1054 = vmatpush.msra.mxu0 %v284
    %1055 = vmatpush.msra.mxu0 %v276
    %1056 = vmatpush.msra.mxu0 %v268
    %1057 = vmatpush.msra.mxu0 %v260
    %1058 = vmatpush.msra.mxu0 %v252
    %1059 = vmatpush.msra.mxu0 %v244
    %1060 = vmatpush.msra.mxu0 %v236
    %1061 = vmatpush.msra.mxu0 %v228
    %1062 = vmatmul.f32.gmra.mxu0 %v816
    %v1063 = vpop.f32.mrf.mxu0
    %v1064 = vadd.f32 %v1044, %v1063
    %1065 = vdwg.mxu0
    %1066 = vmatpush.msra.mxu0 %v221
    %1067 = vmatpush.msra.mxu0 %v213
    %1068 = vmatpush.msra.mxu0 %v205
    %1069 = vmatpush.msra.mxu0 %v197
    %1070 = vmatpush.msra.mxu0 %v189
    %1071 = vmatpush.msra.mxu0 %v181
    %1072 = vmatpush.msra.mxu0 %v173
    %1073 = vmatpush.msra.mxu0 %v165
    %1074 = vmatpush.msra.mxu0 %v157
    %1075 = vmatpush.msra.mxu0 %v149
    %1076 = vmatpush.msra.mxu0 %v141
    %1077 = vmatpush.msra.mxu0 %v133
    %1078 = vmatpush.msra.mxu0 %v125
    %1079 = vmatpush.msra.mxu0 %v117
    %1080 = vmatpush.msra.mxu0 %v109
    %1081 = vmatpush.msra.mxu0 %v101
    %1082 = vmatmul.f32.gmra.mxu0 %v815
    %v1083 = vpop.f32.mrf.mxu0
    %v1084 = vadd.f32 0.0, %v1083
    %1085 = vdwg.mxu0
    %1086 = vmatpush.msra.mxu0 %v349
    %1087 = vmatpush.msra.mxu0 %v341
    %1088 = vmatpush.msra.mxu0 %v333
    %1089 = vmatpush.msra.mxu0 %v325
    %1090 = vmatpush.msra.mxu0 %v317
    %1091 = vmatpush.msra.mxu0 %v309
    %1092 = vmatpush.msra.mxu0 %v301
    %1093 = vmatpush.msra.mxu0 %v293
    %1094 = vmatpush.msra.mxu0 %v285
    %1095 = vmatpush.msra.mxu0 %v277
    %1096 = vmatpush.msra.mxu0 %v269
    %1097 = vmatpush.msra.mxu0 %v261
    %1098 = vmatpush.msra.mxu0 %v253
    %1099 = vmatpush.msra.mxu0 %v245
    %1100 = vmatpush.msra.mxu0 %v237
    %1101 = vmatpush.msra.mxu0 %v229
    %1102 = vmatmul.f32.gmra.mxu0 %v816
    %v1103 = vpop.f32.mrf.mxu0
    %v1104 = vadd.f32 %v1084, %v1103
    %1105 = vdwg.mxu0
    %1106 = vmatpush.msra.mxu0 %v222
    %1107 = vmatpush.msra.mxu0 %v214
    %1108 = vmatpush.msra.mxu0 %v206
    %1109 = vmatpush.msra.mxu0 %v198
    %1110 = vmatpush.msra.mxu0 %v190
    %1111 = vmatpush.msra.mxu0 %v182
    %1112 = vmatpush.msra.mxu0 %v174
    %1113 = vmatpush.msra.mxu0 %v166
    %1114 = vmatpush.msra.mxu0 %v158
    %1115 = vmatpush.msra.mxu0 %v150
    %1116 = vmatpush.msra.mxu0 %v142
    %1117 = vmatpush.msra.mxu0 %v134
    %1118 = vmatpush.msra.mxu0 %v126
    %1119 = vmatpush.msra.mxu0 %v118
    %1120 = vmatpush.msra.mxu0 %v110
    %1121 = vmatpush.msra.mxu0 %v102
    %1122 = vmatmul.f32.gmra.mxu0 %v815
    %v1123 = vpop.f32.mrf.mxu0
    %v1124 = vadd.f32 0.0, %v1123
    %1125 = vdwg.mxu0
    %1126 = vmatpush.msra.mxu0 %v350
    %1127 = vmatpush.msra.mxu0 %v342
    %1128 = vmatpush.msra.mxu0 %v334
    %1129 = vmatpush.msra.mxu0 %v326
    %1130 = vmatpush.msra.mxu0 %v318
    %1131 = vmatpush.msra.mxu0 %v310
    %1132 = vmatpush.msra.mxu0 %v302
    %1133 = vmatpush.msra.mxu0 %v294
    %1134 = vmatpush.msra.mxu0 %v286
    %1135 = vmatpush.msra.mxu0 %v278
    %1136 = vmatpush.msra.mxu0 %v270
    %1137 = vmatpush.msra.mxu0 %v262
    %1138 = vmatpush.msra.mxu0 %v254
    %1139 = vmatpush.msra.mxu0 %v246
    %1140 = vmatpush.msra.mxu0 %v238
    %1141 = vmatpush.msra.mxu0 %v230
    %1142 = vmatmul.f32.gmra.mxu0 %v816
    %v1143 = vpop.f32.mrf.mxu0
    %v1144 = vadd.f32 %v1124, %v1143
    %1145 = vdwg.mxu0
    %v1146 = vadd.f32 %v818, %v864
    %v1147 = vadd.f32 %v819, %v904
    %v1148 = vadd.f32 %v820, %v944
    %v1149 = vadd.f32 %v821, %v984
    %v1150 = vadd.f32 %v822, %v1024
    %v1151 = vadd.f32 %v823, %v1064
    %v1152 = vadd.f32 %v824, %v1104
    %v1153 = vadd.f32 %v825, %v1144
    %v1154 = vxor.u32 %v1146, 2147483648
    %v1155 = vxor.u32 %v1147, 2147483648
    %v1156 = vmul.f32 %v1154, 1.442695
    %v1157 = vpow.pop %v1156
    %v1158 = vmul.f32 %v1155, 1.442695
    %v1159 = vpow.pop %v1158
    %v1160 = vadd.f32 %v1157, 1.0
    %v1161 = vadd.f32 %v1159, 1.0
    %v1162 = vrcp.pop %v1160
    %v1163 = vmul.f32 %v1160, %v1162
    %v1164 = vsub.f32 1.0, %v1163
    %v1165 = vmul.f32 %v1162, %v1164
    %v1166 = vadd.f32 %v1162, %v1165
    %vm1167 = vweird.f32 %v1160
    %vm1168 = vweird.f32 %v1162
    %vm1169 = vmor %vm1167, %vm1168
    %v1170 = vsel %vm1169, %v1162, %v1166
    %v1171 = vand.u32 2147483647, %v1160
    %vm1172 = vcmp.eq.f32.partialorder %v1171, 8.507059e+37
    %v1173 = vand.u32 %v1160, 2147483648
    %v1174 = vor.u32 1.1754944e-38, %v1173
    %v1175 = vsel %vm1172, %v1174, %v1170
    %v1176 = vmul.f32 1.0, %v1175
    %v1177 = vrcp.pop %v1161
    %v1178 = vmul.f32 %v1161, %v1177
    %v1179 = vsub.f32 1.0, %v1178
    %v1180 = vmul.f32 %v1177, %v1179
    %v1181 = vadd.f32 %v1177, %v1180
    %vm1182 = vweird.f32 %v1161
    %vm1183 = vweird.f32 %v1177
    %vm1184 = vmor %vm1182, %vm1183
    %v1185 = vsel %vm1184, %v1177, %v1181
    %v1186 = vand.u32 2147483647, %v1161
    %vm1187 = vcmp.eq.f32.partialorder %v1186, 8.507059e+37
    %v1188 = vand.u32 %v1161, 2147483648
    %v1189 = vor.u32 1.1754944e-38, %v1188
    %v1190 = vsel %vm1187, %v1189, %v1185
    %v1191 = vmul.f32 1.0, %v1190
    %v1192 = vxor.u32 %v1148, 2147483648
    %v1193 = vxor.u32 %v1149, 2147483648
    %v1194 = vmul.f32 %v1192, 1.442695
    %v1195 = vpow.pop %v1194
    %v1196 = vmul.f32 %v1193, 1.442695
    %v1197 = vpow.pop %v1196
    %v1198 = vadd.f32 %v1195, 1.0
    %v1199 = vadd.f32 %v1197, 1.0
    %v1200 = vrcp.pop %v1198
    %v1201 = vmul.f32 %v1198, %v1200
    %v1202 = vsub.f32 1.0, %v1201
    %v1203 = vmul.f32 %v1200, %v1202
    %v1204 = vadd.f32 %v1200, %v1203
    %vm1205 = vweird.f32 %v1198
    %vm1206 = vweird.f32 %v1200
    %vm1207 = vmor %vm1205, %vm1206
    %v1208 = vsel %vm1207, %v1200, %v1204
    %v1209 = vand.u32 2147483647, %v1198
    %vm1210 = vcmp.eq.f32.partialorder %v1209, 8.507059e+37
    %v1211 = vand.u32 %v1198, 2147483648
    %v1212 = vor.u32 1.1754944e-38, %v1211
    %v1213 = vsel %vm1210, %v1212, %v1208
    %v1214 = vmul.f32 1.0, %v1213
    %v1215 = vrcp.pop %v1199
    %v1216 = vmul.f32 %v1199, %v1215
    %v1217 = vsub.f32 1.0, %v1216
    %v1218 = vmul.f32 %v1215, %v1217
    %v1219 = vadd.f32 %v1215, %v1218
    %vm1220 = vweird.f32 %v1199
    %vm1221 = vweird.f32 %v1215
    %vm1222 = vmor %vm1220, %vm1221
    %v1223 = vsel %vm1222, %v1215, %v1219
    %v1224 = vand.u32 2147483647, %v1199
    %vm1225 = vcmp.eq.f32.partialorder %v1224, 8.507059e+37
    %v1226 = vand.u32 %v1199, 2147483648
    %v1227 = vor.u32 1.1754944e-38, %v1226
    %v1228 = vsel %vm1225, %v1227, %v1223
    %v1229 = vmul.f32 1.0, %v1228
    %v1230 = vtanh.pop %v1150
    %v1231 = vtanh.pop %v1151
    %v1232 = vxor.u32 %v1152, 2147483648
    %v1233 = vxor.u32 %v1153, 2147483648
    %v1234 = vmul.f32 %v1232, 1.442695
    %v1235 = vpow.pop %v1234
    %v1236 = vmul.f32 %v1233, 1.442695
    %v1237 = vpow.pop %v1236
    %v1238 = vadd.f32 %v1235, 1.0
    %v1239 = vadd.f32 %v1237, 1.0
    %v1240 = vrcp.pop %v1238
    %v1241 = vmul.f32 %v1238, %v1240
    %v1242 = vsub.f32 1.0, %v1241
    %v1243 = vmul.f32 %v1240, %v1242
    %v1244 = vadd.f32 %v1240, %v1243
    %vm1245 = vweird.f32 %v1238
    %vm1246 = vweird.f32 %v1240
    %vm1247 = vmor %vm1245, %vm1246
    %v1248 = vsel %vm1247, %v1240, %v1244
    %v1249 = vand.u32 2147483647, %v1238
    %vm1250 = vcmp.eq.f32.partialorder %v1249, 8.507059e+37
    %v1251 = vand.u32 %v1238, 2147483648
    %v1252 = vor.u32 1.1754944e-38, %v1251
    %v1253 = vsel %vm1250, %v1252, %v1248
    %v1254 = vmul.f32 1.0, %v1253
    %v1255 = vrcp.pop %v1239
    %v1256 = vmul.f32 %v1239, %v1255
    %v1257 = vsub.f32 1.0, %v1256
    %v1258 = vmul.f32 %v1255, %v1257
    %v1259 = vadd.f32 %v1255, %v1258
    %vm1260 = vweird.f32 %v1239
    %vm1261 = vweird.f32 %v1255
    %vm1262 = vmor %vm1260, %vm1261
    %v1263 = vsel %vm1262, %v1255, %v1259
    %v1264 = vand.u32 2147483647, %v1239
    %vm1265 = vcmp.eq.f32.partialorder %v1264, 8.507059e+37
    %v1266 = vand.u32 %v1239, 2147483648
    %v1267 = vor.u32 1.1754944e-38, %v1266
    %v1268 = vsel %vm1265, %v1267, %v1263
    %v1269 = vmul.f32 1.0, %v1268
    %v1270 = vmul.f32 %v1214, %v811
    %v1271 = vmul.f32 %v1229, %v812
    %v1272 = vmul.f32 %v1176, %v1230
    %v1273 = vmul.f32 %v1191, %v1231
    %v1274 = vadd.f32 %v1270, %v1272
    %v1275 = vadd.f32 %v1271, %v1273
    %v1276 = vtanh.pop %v1274
    %v1277 = vtanh.pop %v1275
    %v1278 = vmul.f32 %v1254, %v1276
    %v1279 = vmul.f32 %v1269, %v1277
    %s1280 = scalar_lea.vmem [#allocation4], 128
    %v1281 = vld [vmem:[%s1280] sm:$0xff]
    %v1282 = vld [vmem:[%s1280 + $0x8] sm:$0xff]
    %v1283 = vld [vmem:[%s1280 + $0x10] sm:$0xff]
    %v1284 = vld [vmem:[%s1280 + $0x18] sm:$0xff]
    %v1285 = vld [vmem:[%s1280 + $0x20] sm:$0xff]
    %v1286 = vld [vmem:[%s1280 + $0x28] sm:$0xff]
    %v1287 = vld [vmem:[%s1280 + $0x30] sm:$0xff]
    %v1288 = vld [vmem:[%s1280 + $0x38] sm:$0xff]
    %1289 = vmatpush.msra.mxu0 %v215
    %1290 = vmatpush.msra.mxu0 %v207
    %1291 = vmatpush.msra.mxu0 %v199
    %1292 = vmatpush.msra.mxu0 %v191
    %1293 = vmatpush.msra.mxu0 %v183
    %1294 = vmatpush.msra.mxu0 %v175
    %1295 = vmatpush.msra.mxu0 %v167
    %1296 = vmatpush.msra.mxu0 %v159
    %1297 = vmatpush.msra.mxu0 %v151
    %1298 = vmatpush.msra.mxu0 %v143
    %1299 = vmatpush.msra.mxu0 %v135
    %1300 = vmatpush.msra.mxu0 %v127
    %1301 = vmatpush.msra.mxu0 %v119
    %1302 = vmatpush.msra.mxu0 %v111
    %1303 = vmatpush.msra.mxu0 %v103
    %1304 = vmatpush.msra.mxu0 %v95
    %1305 = vmatmul.f32.gmra.mxu0 %v1278
    %v1306 = vpop.f32.mrf.mxu0
    %v1307 = vadd.f32 0.0, %v1306
    %1308 = vdwg.mxu0
    %1309 = vmatpush.msra.mxu0 %v343
    %1310 = vmatpush.msra.mxu0 %v335
    %1311 = vmatpush.msra.mxu0 %v327
    %1312 = vmatpush.msra.mxu0 %v319
    %1313 = vmatpush.msra.mxu0 %v311
    %1314 = vmatpush.msra.mxu0 %v303
    %1315 = vmatpush.msra.mxu0 %v295
    %1316 = vmatpush.msra.mxu0 %v287
    %1317 = vmatpush.msra.mxu0 %v279
    %1318 = vmatpush.msra.mxu0 %v271
    %1319 = vmatpush.msra.mxu0 %v263
    %1320 = vmatpush.msra.mxu0 %v255
    %1321 = vmatpush.msra.mxu0 %v247
    %1322 = vmatpush.msra.mxu0 %v239
    %1323 = vmatpush.msra.mxu0 %v231
    %1324 = vmatpush.msra.mxu0 %v223
    %1325 = vmatmul.f32.gmra.mxu0 %v1279
    %v1326 = vpop.f32.mrf.mxu0
    %v1327 = vadd.f32 %v1307, %v1326
    %1328 = vdwg.mxu0
    %1329 = vmatpush.msra.mxu0 %v216
    %1330 = vmatpush.msra.mxu0 %v208
    %1331 = vmatpush.msra.mxu0 %v200
    %1332 = vmatpush.msra.mxu0 %v192
    %1333 = vmatpush.msra.mxu0 %v184
    %1334 = vmatpush.msra.mxu0 %v176
    %1335 = vmatpush.msra.mxu0 %v168
    %1336 = vmatpush.msra.mxu0 %v160
    %1337 = vmatpush.msra.mxu0 %v152
    %1338 = vmatpush.msra.mxu0 %v144
    %1339 = vmatpush.msra.mxu0 %v136
    %1340 = vmatpush.msra.mxu0 %v128
    %1341 = vmatpush.msra.mxu0 %v120
    %1342 = vmatpush.msra.mxu0 %v112
    %1343 = vmatpush.msra.mxu0 %v104
    %1344 = vmatpush.msra.mxu0 %v96
    %1345 = vmatmul.f32.gmra.mxu0 %v1278
    %v1346 = vpop.f32.mrf.mxu0
    %v1347 = vadd.f32 0.0, %v1346
    %1348 = vdwg.mxu0
    %1349 = vmatpush.msra.mxu0 %v344
    %1350 = vmatpush.msra.mxu0 %v336
    %1351 = vmatpush.msra.mxu0 %v328
    %1352 = vmatpush.msra.mxu0 %v320
    %1353 = vmatpush.msra.mxu0 %v312
    %1354 = vmatpush.msra.mxu0 %v304
    %1355 = vmatpush.msra.mxu0 %v296
    %1356 = vmatpush.msra.mxu0 %v288
    %1357 = vmatpush.msra.mxu0 %v280
    %1358 = vmatpush.msra.mxu0 %v272
    %1359 = vmatpush.msra.mxu0 %v264
    %1360 = vmatpush.msra.mxu0 %v256
    %1361 = vmatpush.msra.mxu0 %v248
    %1362 = vmatpush.msra.mxu0 %v240
    %1363 = vmatpush.msra.mxu0 %v232
    %1364 = vmatpush.msra.mxu0 %v224
    %1365 = vmatmul.f32.gmra.mxu0 %v1279
    %v1366 = vpop.f32.mrf.mxu0
    %v1367 = vadd.f32 %v1347, %v1366
    %1368 = vdwg.mxu0
    %1369 = vmatpush.msra.mxu0 %v217
    %1370 = vmatpush.msra.mxu0 %v209
    %1371 = vmatpush.msra.mxu0 %v201
    %1372 = vmatpush.msra.mxu0 %v193
    %1373 = vmatpush.msra.mxu0 %v185
    %1374 = vmatpush.msra.mxu0 %v177
    %1375 = vmatpush.msra.mxu0 %v169
    %1376 = vmatpush.msra.mxu0 %v161
    %1377 = vmatpush.msra.mxu0 %v153
    %1378 = vmatpush.msra.mxu0 %v145
    %1379 = vmatpush.msra.mxu0 %v137
    %1380 = vmatpush.msra.mxu0 %v129
    %1381 = vmatpush.msra.mxu0 %v121
    %1382 = vmatpush.msra.mxu0 %v113
    %1383 = vmatpush.msra.mxu0 %v105
    %1384 = vmatpush.msra.mxu0 %v97
    %1385 = vmatmul.f32.gmra.mxu0 %v1278
    %v1386 = vpop.f32.mrf.mxu0
    %v1387 = vadd.f32 0.0, %v1386
    %1388 = vdwg.mxu0
    %1389 = vmatpush.msra.mxu0 %v345
    %1390 = vmatpush.msra.mxu0 %v337
    %1391 = vmatpush.msra.mxu0 %v329
    %1392 = vmatpush.msra.mxu0 %v321
    %1393 = vmatpush.msra.mxu0 %v313
    %1394 = vmatpush.msra.mxu0 %v305
    %1395 = vmatpush.msra.mxu0 %v297
    %1396 = vmatpush.msra.mxu0 %v289
    %1397 = vmatpush.msra.mxu0 %v281
    %1398 = vmatpush.msra.mxu0 %v273
    %1399 = vmatpush.msra.mxu0 %v265
    %1400 = vmatpush.msra.mxu0 %v257
    %1401 = vmatpush.msra.mxu0 %v249
    %1402 = vmatpush.msra.mxu0 %v241
    %1403 = vmatpush.msra.mxu0 %v233
    %1404 = vmatpush.msra.mxu0 %v225
    %1405 = vmatmul.f32.gmra.mxu0 %v1279
    %v1406 = vpop.f32.mrf.mxu0
    %v1407 = vadd.f32 %v1387, %v1406
    %1408 = vdwg.mxu0
    %1409 = vmatpush.msra.mxu0 %v218
    %1410 = vmatpush.msra.mxu0 %v210
    %1411 = vmatpush.msra.mxu0 %v202
    %1412 = vmatpush.msra.mxu0 %v194
    %1413 = vmatpush.msra.mxu0 %v186
    %1414 = vmatpush.msra.mxu0 %v178
    %1415 = vmatpush.msra.mxu0 %v170
    %1416 = vmatpush.msra.mxu0 %v162
    %1417 = vmatpush.msra.mxu0 %v154
    %1418 = vmatpush.msra.mxu0 %v146
    %1419 = vmatpush.msra.mxu0 %v138
    %1420 = vmatpush.msra.mxu0 %v130
    %1421 = vmatpush.msra.mxu0 %v122
    %1422 = vmatpush.msra.mxu0 %v114
    %1423 = vmatpush.msra.mxu0 %v106
    %1424 = vmatpush.msra.mxu0 %v98
    %1425 = vmatmul.f32.gmra.mxu0 %v1278
    %v1426 = vpop.f32.mrf.mxu0
    %v1427 = vadd.f32 0.0, %v1426
    %1428 = vdwg.mxu0
    %1429 = vmatpush.msra.mxu0 %v346
    %1430 = vmatpush.msra.mxu0 %v338
    %1431 = vmatpush.msra.mxu0 %v330
    %1432 = vmatpush.msra.mxu0 %v322
    %1433 = vmatpush.msra.mxu0 %v314
    %1434 = vmatpush.msra.mxu0 %v306
    %1435 = vmatpush.msra.mxu0 %v298
    %1436 = vmatpush.msra.mxu0 %v290
    %1437 = vmatpush.msra.mxu0 %v282
    %1438 = vmatpush.msra.mxu0 %v274
    %1439 = vmatpush.msra.mxu0 %v266
    %1440 = vmatpush.msra.mxu0 %v258
    %1441 = vmatpush.msra.mxu0 %v250
    %1442 = vmatpush.msra.mxu0 %v242
    %1443 = vmatpush.msra.mxu0 %v234
    %1444 = vmatpush.msra.mxu0 %v226
    %1445 = vmatmul.f32.gmra.mxu0 %v1279
    %v1446 = vpop.f32.mrf.mxu0
    %v1447 = vadd.f32 %v1427, %v1446
    %1448 = vdwg.mxu0
    %1449 = vmatpush.msra.mxu0 %v219
    %1450 = vmatpush.msra.mxu0 %v211
    %1451 = vmatpush.msra.mxu0 %v203
    %1452 = vmatpush.msra.mxu0 %v195
    %1453 = vmatpush.msra.mxu0 %v187
    %1454 = vmatpush.msra.mxu0 %v179
    %1455 = vmatpush.msra.mxu0 %v171
    %1456 = vmatpush.msra.mxu0 %v163
    %1457 = vmatpush.msra.mxu0 %v155
    %1458 = vmatpush.msra.mxu0 %v147
    %1459 = vmatpush.msra.mxu0 %v139
    %1460 = vmatpush.msra.mxu0 %v131
    %1461 = vmatpush.msra.mxu0 %v123
    %1462 = vmatpush.msra.mxu0 %v115
    %1463 = vmatpush.msra.mxu0 %v107
    %1464 = vmatpush.msra.mxu0 %v99
    %1465 = vmatmul.f32.gmra.mxu0 %v1278
    %v1466 = vpop.f32.mrf.mxu0
    %v1467 = vadd.f32 0.0, %v1466
    %1468 = vdwg.mxu0
    %1469 = vmatpush.msra.mxu0 %v347
    %1470 = vmatpush.msra.mxu0 %v339
    %1471 = vmatpush.msra.mxu0 %v331
    %1472 = vmatpush.msra.mxu0 %v323
    %1473 = vmatpush.msra.mxu0 %v315
    %1474 = vmatpush.msra.mxu0 %v307
    %1475 = vmatpush.msra.mxu0 %v299
    %1476 = vmatpush.msra.mxu0 %v291
    %1477 = vmatpush.msra.mxu0 %v283
    %1478 = vmatpush.msra.mxu0 %v275
    %1479 = vmatpush.msra.mxu0 %v267
    %1480 = vmatpush.msra.mxu0 %v259
    %1481 = vmatpush.msra.mxu0 %v251
    %1482 = vmatpush.msra.mxu0 %v243
    %1483 = vmatpush.msra.mxu0 %v235
    %1484 = vmatpush.msra.mxu0 %v227
    %1485 = vmatmul.f32.gmra.mxu0 %v1279
    %v1486 = vpop.f32.mrf.mxu0
    %v1487 = vadd.f32 %v1467, %v1486
    %1488 = vdwg.mxu0
    %1489 = vmatpush.msra.mxu0 %v220
    %1490 = vmatpush.msra.mxu0 %v212
    %1491 = vmatpush.msra.mxu0 %v204
    %1492 = vmatpush.msra.mxu0 %v196
    %1493 = vmatpush.msra.mxu0 %v188
    %1494 = vmatpush.msra.mxu0 %v180
    %1495 = vmatpush.msra.mxu0 %v172
    %1496 = vmatpush.msra.mxu0 %v164
    %1497 = vmatpush.msra.mxu0 %v156
    %1498 = vmatpush.msra.mxu0 %v148
    %1499 = vmatpush.msra.mxu0 %v140
    %1500 = vmatpush.msra.mxu0 %v132
    %1501 = vmatpush.msra.mxu0 %v124
    %1502 = vmatpush.msra.mxu0 %v116
    %1503 = vmatpush.msra.mxu0 %v108
    %1504 = vmatpush.msra.mxu0 %v100
    %1505 = vmatmul.f32.gmra.mxu0 %v1278
    %v1506 = vpop.f32.mrf.mxu0
    %v1507 = vadd.f32 0.0, %v1506
    %1508 = vdwg.mxu0
    %1509 = vmatpush.msra.mxu0 %v348
    %1510 = vmatpush.msra.mxu0 %v340
    %1511 = vmatpush.msra.mxu0 %v332
    %1512 = vmatpush.msra.mxu0 %v324
    %1513 = vmatpush.msra.mxu0 %v316
    %1514 = vmatpush.msra.mxu0 %v308
    %1515 = vmatpush.msra.mxu0 %v300
    %1516 = vmatpush.msra.mxu0 %v292
    %1517 = vmatpush.msra.mxu0 %v284
    %1518 = vmatpush.msra.mxu0 %v276
    %1519 = vmatpush.msra.mxu0 %v268
    %1520 = vmatpush.msra.mxu0 %v260
    %1521 = vmatpush.msra.mxu0 %v252
    %1522 = vmatpush.msra.mxu0 %v244
    %1523 = vmatpush.msra.mxu0 %v236
    %1524 = vmatpush.msra.mxu0 %v228
    %1525 = vmatmul.f32.gmra.mxu0 %v1279
    %v1526 = vpop.f32.mrf.mxu0
    %v1527 = vadd.f32 %v1507, %v1526
    %1528 = vdwg.mxu0
    %1529 = vmatpush.msra.mxu0 %v221
    %1530 = vmatpush.msra.mxu0 %v213
    %1531 = vmatpush.msra.mxu0 %v205
    %1532 = vmatpush.msra.mxu0 %v197
    %1533 = vmatpush.msra.mxu0 %v189
    %1534 = vmatpush.msra.mxu0 %v181
    %1535 = vmatpush.msra.mxu0 %v173
    %1536 = vmatpush.msra.mxu0 %v165
    %1537 = vmatpush.msra.mxu0 %v157
    %1538 = vmatpush.msra.mxu0 %v149
    %1539 = vmatpush.msra.mxu0 %v141
    %1540 = vmatpush.msra.mxu0 %v133
    %1541 = vmatpush.msra.mxu0 %v125
    %1542 = vmatpush.msra.mxu0 %v117
    %1543 = vmatpush.msra.mxu0 %v109
    %1544 = vmatpush.msra.mxu0 %v101
    %1545 = vmatmul.f32.gmra.mxu0 %v1278
    %v1546 = vpop.f32.mrf.mxu0
    %v1547 = vadd.f32 0.0, %v1546
    %1548 = vdwg.mxu0
    %1549 = vmatpush.msra.mxu0 %v349
    %1550 = vmatpush.msra.mxu0 %v341
    %1551 = vmatpush.msra.mxu0 %v333
    %1552 = vmatpush.msra.mxu0 %v325
    %1553 = vmatpush.msra.mxu0 %v317
    %1554 = vmatpush.msra.mxu0 %v309
    %1555 = vmatpush.msra.mxu0 %v301
    %1556 = vmatpush.msra.mxu0 %v293
    %1557 = vmatpush.msra.mxu0 %v285
    %1558 = vmatpush.msra.mxu0 %v277
    %1559 = vmatpush.msra.mxu0 %v269
    %1560 = vmatpush.msra.mxu0 %v261
    %1561 = vmatpush.msra.mxu0 %v253
    %1562 = vmatpush.msra.mxu0 %v245
    %1563 = vmatpush.msra.mxu0 %v237
    %1564 = vmatpush.msra.mxu0 %v229
    %1565 = vmatmul.f32.gmra.mxu0 %v1279
    %v1566 = vpop.f32.mrf.mxu0
    %v1567 = vadd.f32 %v1547, %v1566
    %1568 = vdwg.mxu0
    %1569 = vmatpush.msra.mxu0 %v222
    %1570 = vmatpush.msra.mxu0 %v214
    %1571 = vmatpush.msra.mxu0 %v206
    %1572 = vmatpush.msra.mxu0 %v198
    %1573 = vmatpush.msra.mxu0 %v190
    %1574 = vmatpush.msra.mxu0 %v182
    %1575 = vmatpush.msra.mxu0 %v174
    %1576 = vmatpush.msra.mxu0 %v166
    %1577 = vmatpush.msra.mxu0 %v158
    %1578 = vmatpush.msra.mxu0 %v150
    %1579 = vmatpush.msra.mxu0 %v142
    %1580 = vmatpush.msra.mxu0 %v134
    %1581 = vmatpush.msra.mxu0 %v126
    %1582 = vmatpush.msra.mxu0 %v118
    %1583 = vmatpush.msra.mxu0 %v110
    %1584 = vmatpush.msra.mxu0 %v102
    %1585 = vmatmul.f32.gmra.mxu0 %v1278
    %v1586 = vpop.f32.mrf.mxu0
    %v1587 = vadd.f32 0.0, %v1586
    %1588 = vdwg.mxu0
    %1589 = vmatpush.msra.mxu0 %v350
    %1590 = vmatpush.msra.mxu0 %v342
    %1591 = vmatpush.msra.mxu0 %v334
    %1592 = vmatpush.msra.mxu0 %v326
    %1593 = vmatpush.msra.mxu0 %v318
    %1594 = vmatpush.msra.mxu0 %v310
    %1595 = vmatpush.msra.mxu0 %v302
    %1596 = vmatpush.msra.mxu0 %v294
    %1597 = vmatpush.msra.mxu0 %v286
    %1598 = vmatpush.msra.mxu0 %v278
    %1599 = vmatpush.msra.mxu0 %v270
    %1600 = vmatpush.msra.mxu0 %v262
    %1601 = vmatpush.msra.mxu0 %v254
    %1602 = vmatpush.msra.mxu0 %v246
    %1603 = vmatpush.msra.mxu0 %v238
    %1604 = vmatpush.msra.mxu0 %v230
    %1605 = vmatmul.f32.gmra.mxu0 %v1279
    %v1606 = vpop.f32.mrf.mxu0
    %v1607 = vadd.f32 %v1587, %v1606
    %1608 = vdwg.mxu0
    %v1609 = vadd.f32 %v1281, %v1327
    %v1610 = vadd.f32 %v1282, %v1367
    %v1611 = vadd.f32 %v1283, %v1407
    %v1612 = vadd.f32 %v1284, %v1447
    %v1613 = vadd.f32 %v1285, %v1487
    %v1614 = vadd.f32 %v1286, %v1527
    %v1615 = vadd.f32 %v1287, %v1567
    %v1616 = vadd.f32 %v1288, %v1607
    %v1617 = vxor.u32 %v1609, 2147483648
    %v1618 = vxor.u32 %v1610, 2147483648
    %v1619 = vmul.f32 %v1617, 1.442695
    %v1620 = vpow.pop %v1619
    %v1621 = vmul.f32 %v1618, 1.442695
    %v1622 = vpow.pop %v1621
    %v1623 = vadd.f32 %v1620, 1.0
    %v1624 = vadd.f32 %v1622, 1.0
    %v1625 = vrcp.pop %v1623
    %v1626 = vmul.f32 %v1623, %v1625
    %v1627 = vsub.f32 1.0, %v1626
    %v1628 = vmul.f32 %v1625, %v1627
    %v1629 = vadd.f32 %v1625, %v1628
    %vm1630 = vweird.f32 %v1623
    %vm1631 = vweird.f32 %v1625
    %vm1632 = vmor %vm1630, %vm1631
    %v1633 = vsel %vm1632, %v1625, %v1629
    %v1634 = vand.u32 2147483647, %v1623
    %vm1635 = vcmp.eq.f32.partialorder %v1634, 8.507059e+37
    %v1636 = vand.u32 %v1623, 2147483648
    %v1637 = vor.u32 1.1754944e-38, %v1636
    %v1638 = vsel %vm1635, %v1637, %v1633
    %v1639 = vmul.f32 1.0, %v1638
    %v1640 = vrcp.pop %v1624
    %v1641 = vmul.f32 %v1624, %v1640
    %v1642 = vsub.f32 1.0, %v1641
    %v1643 = vmul.f32 %v1640, %v1642
    %v1644 = vadd.f32 %v1640, %v1643
    %vm1645 = vweird.f32 %v1624
    %vm1646 = vweird.f32 %v1640
    %vm1647 = vmor %vm1645, %vm1646
    %v1648 = vsel %vm1647, %v1640, %v1644
    %v1649 = vand.u32 2147483647, %v1624
    %vm1650 = vcmp.eq.f32.partialorder %v1649, 8.507059e+37
    %v1651 = vand.u32 %v1624, 2147483648
    %v1652 = vor.u32 1.1754944e-38, %v1651
    %v1653 = vsel %vm1650, %v1652, %v1648
    %v1654 = vmul.f32 1.0, %v1653
    %v1655 = vxor.u32 %v1611, 2147483648
    %v1656 = vxor.u32 %v1612, 2147483648
    %v1657 = vmul.f32 %v1655, 1.442695
    %v1658 = vpow.pop %v1657
    %v1659 = vmul.f32 %v1656, 1.442695
    %v1660 = vpow.pop %v1659
    %v1661 = vadd.f32 %v1658, 1.0
    %v1662 = vadd.f32 %v1660, 1.0
    %v1663 = vrcp.pop %v1661
    %v1664 = vmul.f32 %v1661, %v1663
    %v1665 = vsub.f32 1.0, %v1664
    %v1666 = vmul.f32 %v1663, %v1665
    %v1667 = vadd.f32 %v1663, %v1666
    %vm1668 = vweird.f32 %v1661
    %vm1669 = vweird.f32 %v1663
    %vm1670 = vmor %vm1668, %vm1669
    %v1671 = vsel %vm1670, %v1663, %v1667
    %v1672 = vand.u32 2147483647, %v1661
    %vm1673 = vcmp.eq.f32.partialorder %v1672, 8.507059e+37
    %v1674 = vand.u32 %v1661, 2147483648
    %v1675 = vor.u32 1.1754944e-38, %v1674
    %v1676 = vsel %vm1673, %v1675, %v1671
    %v1677 = vmul.f32 1.0, %v1676
    %v1678 = vrcp.pop %v1662
    %v1679 = vmul.f32 %v1662, %v1678
    %v1680 = vsub.f32 1.0, %v1679
    %v1681 = vmul.f32 %v1678, %v1680
    %v1682 = vadd.f32 %v1678, %v1681
    %vm1683 = vweird.f32 %v1662
    %vm1684 = vweird.f32 %v1678
    %vm1685 = vmor %vm1683, %vm1684
    %v1686 = vsel %vm1685, %v1678, %v1682
    %v1687 = vand.u32 2147483647, %v1662
    %vm1688 = vcmp.eq.f32.partialorder %v1687, 8.507059e+37
    %v1689 = vand.u32 %v1662, 2147483648
    %v1690 = vor.u32 1.1754944e-38, %v1689
    %v1691 = vsel %vm1688, %v1690, %v1686
    %v1692 = vmul.f32 1.0, %v1691
    %v1693 = vtanh.pop %v1613
    %v1694 = vtanh.pop %v1614
    %v1695 = vxor.u32 %v1615, 2147483648
    %v1696 = vxor.u32 %v1616, 2147483648
    %v1697 = vmul.f32 %v1695, 1.442695
    %v1698 = vpow.pop %v1697
    %v1699 = vmul.f32 %v1696, 1.442695
    %v1700 = vpow.pop %v1699
    %v1701 = vadd.f32 %v1698, 1.0
    %v1702 = vadd.f32 %v1700, 1.0
    %v1703 = vrcp.pop %v1701
    %v1704 = vmul.f32 %v1701, %v1703
    %v1705 = vsub.f32 1.0, %v1704
    %v1706 = vmul.f32 %v1703, %v1705
    %v1707 = vadd.f32 %v1703, %v1706
    %vm1708 = vweird.f32 %v1701
    %vm1709 = vweird.f32 %v1703
    %vm1710 = vmor %vm1708, %vm1709
    %v1711 = vsel %vm1710, %v1703, %v1707
    %v1712 = vand.u32 2147483647, %v1701
    %vm1713 = vcmp.eq.f32.partialorder %v1712, 8.507059e+37
    %v1714 = vand.u32 %v1701, 2147483648
    %v1715 = vor.u32 1.1754944e-38, %v1714
    %v1716 = vsel %vm1713, %v1715, %v1711
    %v1717 = vmul.f32 1.0, %v1716
    %v1718 = vrcp.pop %v1702
    %v1719 = vmul.f32 %v1702, %v1718
    %v1720 = vsub.f32 1.0, %v1719
    %v1721 = vmul.f32 %v1718, %v1720
    %v1722 = vadd.f32 %v1718, %v1721
    %vm1723 = vweird.f32 %v1702
    %vm1724 = vweird.f32 %v1718
    %vm1725 = vmor %vm1723, %vm1724
    %v1726 = vsel %vm1725, %v1718, %v1722
    %v1727 = vand.u32 2147483647, %v1702
    %vm1728 = vcmp.eq.f32.partialorder %v1727, 8.507059e+37
    %v1729 = vand.u32 %v1702, 2147483648
    %v1730 = vor.u32 1.1754944e-38, %v1729
    %v1731 = vsel %vm1728, %v1730, %v1726
    %v1732 = vmul.f32 1.0, %v1731
    %v1733 = vmul.f32 %v1677, %v1274
    %v1734 = vmul.f32 %v1692, %v1275
    %v1735 = vmul.f32 %v1639, %v1693
    %v1736 = vmul.f32 %v1654, %v1694
    %v1737 = vadd.f32 %v1733, %v1735
    %v1738 = vadd.f32 %v1734, %v1736
    %v1739 = vtanh.pop %v1737
    %v1740 = vtanh.pop %v1738
    %v1741 = vmul.f32 %v1717, %v1739
    %v1742 = vmul.f32 %v1732, %v1740
    %s1743 = scalar_lea.vmem [#allocation4], 192
    %v1744 = vld [vmem:[%s1743] sm:$0xff]
    %v1745 = vld [vmem:[%s1743 + $0x8] sm:$0xff]
    %v1746 = vld [vmem:[%s1743 + $0x10] sm:$0xff]
    %v1747 = vld [vmem:[%s1743 + $0x18] sm:$0xff]
    %v1748 = vld [vmem:[%s1743 + $0x20] sm:$0xff]
    %v1749 = vld [vmem:[%s1743 + $0x28] sm:$0xff]
    %v1750 = vld [vmem:[%s1743 + $0x30] sm:$0xff]
    %v1751 = vld [vmem:[%s1743 + $0x38] sm:$0xff]
    %1752 = vmatpush.msra.mxu0 %v215
    %1753 = vmatpush.msra.mxu0 %v207
    %1754 = vmatpush.msra.mxu0 %v199
    %1755 = vmatpush.msra.mxu0 %v191
    %1756 = vmatpush.msra.mxu0 %v183
    %1757 = vmatpush.msra.mxu0 %v175
    %1758 = vmatpush.msra.mxu0 %v167
    %1759 = vmatpush.msra.mxu0 %v159
    %1760 = vmatpush.msra.mxu0 %v151
    %1761 = vmatpush.msra.mxu0 %v143
    %1762 = vmatpush.msra.mxu0 %v135
    %1763 = vmatpush.msra.mxu0 %v127
    %1764 = vmatpush.msra.mxu0 %v119
    %1765 = vmatpush.msra.mxu0 %v111
    %1766 = vmatpush.msra.mxu0 %v103
    %1767 = vmatpush.msra.mxu0 %v95
    %1768 = vmatmul.f32.gmra.mxu0 %v1741
    %v1769 = vpop.f32.mrf.mxu0
    %v1770 = vadd.f32 0.0, %v1769
    %1771 = vdwg.mxu0
    %1772 = vmatpush.msra.mxu0 %v343
    %1773 = vmatpush.msra.mxu0 %v335
    %1774 = vmatpush.msra.mxu0 %v327
    %1775 = vmatpush.msra.mxu0 %v319
    %1776 = vmatpush.msra.mxu0 %v311
    %1777 = vmatpush.msra.mxu0 %v303
    %1778 = vmatpush.msra.mxu0 %v295
    %1779 = vmatpush.msra.mxu0 %v287
    %1780 = vmatpush.msra.mxu0 %v279
    %1781 = vmatpush.msra.mxu0 %v271
    %1782 = vmatpush.msra.mxu0 %v263
    %1783 = vmatpush.msra.mxu0 %v255
    %1784 = vmatpush.msra.mxu0 %v247
    %1785 = vmatpush.msra.mxu0 %v239
    %1786 = vmatpush.msra.mxu0 %v231
    %1787 = vmatpush.msra.mxu0 %v223
    %1788 = vmatmul.f32.gmra.mxu0 %v1742
    %v1789 = vpop.f32.mrf.mxu0
    %v1790 = vadd.f32 %v1770, %v1789
    %1791 = vdwg.mxu0
    %1792 = vmatpush.msra.mxu0 %v216
    %1793 = vmatpush.msra.mxu0 %v208
    %1794 = vmatpush.msra.mxu0 %v200
    %1795 = vmatpush.msra.mxu0 %v192
    %1796 = vmatpush.msra.mxu0 %v184
    %1797 = vmatpush.msra.mxu0 %v176
    %1798 = vmatpush.msra.mxu0 %v168
    %1799 = vmatpush.msra.mxu0 %v160
    %1800 = vmatpush.msra.mxu0 %v152
    %1801 = vmatpush.msra.mxu0 %v144
    %1802 = vmatpush.msra.mxu0 %v136
    %1803 = vmatpush.msra.mxu0 %v128
    %1804 = vmatpush.msra.mxu0 %v120
    %1805 = vmatpush.msra.mxu0 %v112
    %1806 = vmatpush.msra.mxu0 %v104
    %1807 = vmatpush.msra.mxu0 %v96
    %1808 = vmatmul.f32.gmra.mxu0 %v1741
    %v1809 = vpop.f32.mrf.mxu0
    %v1810 = vadd.f32 0.0, %v1809
    %1811 = vdwg.mxu0
    %1812 = vmatpush.msra.mxu0 %v344
    %1813 = vmatpush.msra.mxu0 %v336
    %1814 = vmatpush.msra.mxu0 %v328
    %1815 = vmatpush.msra.mxu0 %v320
    %1816 = vmatpush.msra.mxu0 %v312
    %1817 = vmatpush.msra.mxu0 %v304
    %1818 = vmatpush.msra.mxu0 %v296
    %1819 = vmatpush.msra.mxu0 %v288
    %1820 = vmatpush.msra.mxu0 %v280
    %1821 = vmatpush.msra.mxu0 %v272
    %1822 = vmatpush.msra.mxu0 %v264
    %1823 = vmatpush.msra.mxu0 %v256
    %1824 = vmatpush.msra.mxu0 %v248
    %1825 = vmatpush.msra.mxu0 %v240
    %1826 = vmatpush.msra.mxu0 %v232
    %1827 = vmatpush.msra.mxu0 %v224
    %1828 = vmatmul.f32.gmra.mxu0 %v1742
    %v1829 = vpop.f32.mrf.mxu0
    %v1830 = vadd.f32 %v1810, %v1829
    %1831 = vdwg.mxu0
    %1832 = vmatpush.msra.mxu0 %v217
    %1833 = vmatpush.msra.mxu0 %v209
    %1834 = vmatpush.msra.mxu0 %v201
    %1835 = vmatpush.msra.mxu0 %v193
    %1836 = vmatpush.msra.mxu0 %v185
    %1837 = vmatpush.msra.mxu0 %v177
    %1838 = vmatpush.msra.mxu0 %v169
    %1839 = vmatpush.msra.mxu0 %v161
    %1840 = vmatpush.msra.mxu0 %v153
    %1841 = vmatpush.msra.mxu0 %v145
    %1842 = vmatpush.msra.mxu0 %v137
    %1843 = vmatpush.msra.mxu0 %v129
    %1844 = vmatpush.msra.mxu0 %v121
    %1845 = vmatpush.msra.mxu0 %v113
    %1846 = vmatpush.msra.mxu0 %v105
    %1847 = vmatpush.msra.mxu0 %v97
    %1848 = vmatmul.f32.gmra.mxu0 %v1741
    %v1849 = vpop.f32.mrf.mxu0
    %v1850 = vadd.f32 0.0, %v1849
    %1851 = vdwg.mxu0
    %1852 = vmatpush.msra.mxu0 %v345
    %1853 = vmatpush.msra.mxu0 %v337
    %1854 = vmatpush.msra.mxu0 %v329
    %1855 = vmatpush.msra.mxu0 %v321
    %1856 = vmatpush.msra.mxu0 %v313
    %1857 = vmatpush.msra.mxu0 %v305
    %1858 = vmatpush.msra.mxu0 %v297
    %1859 = vmatpush.msra.mxu0 %v289
    %1860 = vmatpush.msra.mxu0 %v281
    %1861 = vmatpush.msra.mxu0 %v273
    %1862 = vmatpush.msra.mxu0 %v265
    %1863 = vmatpush.msra.mxu0 %v257
    %1864 = vmatpush.msra.mxu0 %v249
    %1865 = vmatpush.msra.mxu0 %v241
    %1866 = vmatpush.msra.mxu0 %v233
    %1867 = vmatpush.msra.mxu0 %v225
    %1868 = vmatmul.f32.gmra.mxu0 %v1742
    %v1869 = vpop.f32.mrf.mxu0
    %v1870 = vadd.f32 %v1850, %v1869
    %1871 = vdwg.mxu0
    %1872 = vmatpush.msra.mxu0 %v218
    %1873 = vmatpush.msra.mxu0 %v210
    %1874 = vmatpush.msra.mxu0 %v202
    %1875 = vmatpush.msra.mxu0 %v194
    %1876 = vmatpush.msra.mxu0 %v186
    %1877 = vmatpush.msra.mxu0 %v178
    %1878 = vmatpush.msra.mxu0 %v170
    %1879 = vmatpush.msra.mxu0 %v162
    %1880 = vmatpush.msra.mxu0 %v154
    %1881 = vmatpush.msra.mxu0 %v146
    %1882 = vmatpush.msra.mxu0 %v138
    %1883 = vmatpush.msra.mxu0 %v130
    %1884 = vmatpush.msra.mxu0 %v122
    %1885 = vmatpush.msra.mxu0 %v114
    %1886 = vmatpush.msra.mxu0 %v106
    %1887 = vmatpush.msra.mxu0 %v98
    %1888 = vmatmul.f32.gmra.mxu0 %v1741
    %v1889 = vpop.f32.mrf.mxu0
    %v1890 = vadd.f32 0.0, %v1889
    %1891 = vdwg.mxu0
    %1892 = vmatpush.msra.mxu0 %v346
    %1893 = vmatpush.msra.mxu0 %v338
    %1894 = vmatpush.msra.mxu0 %v330
    %1895 = vmatpush.msra.mxu0 %v322
    %1896 = vmatpush.msra.mxu0 %v314
    %1897 = vmatpush.msra.mxu0 %v306
    %1898 = vmatpush.msra.mxu0 %v298
    %1899 = vmatpush.msra.mxu0 %v290
    %1900 = vmatpush.msra.mxu0 %v282
    %1901 = vmatpush.msra.mxu0 %v274
    %1902 = vmatpush.msra.mxu0 %v266
    %1903 = vmatpush.msra.mxu0 %v258
    %1904 = vmatpush.msra.mxu0 %v250
    %1905 = vmatpush.msra.mxu0 %v242
    %1906 = vmatpush.msra.mxu0 %v234
    %1907 = vmatpush.msra.mxu0 %v226
    %1908 = vmatmul.f32.gmra.mxu0 %v1742
    %v1909 = vpop.f32.mrf.mxu0
    %v1910 = vadd.f32 %v1890, %v1909
    %1911 = vdwg.mxu0
    %1912 = vmatpush.msra.mxu0 %v219
    %1913 = vmatpush.msra.mxu0 %v211
    %1914 = vmatpush.msra.mxu0 %v203
    %1915 = vmatpush.msra.mxu0 %v195
    %1916 = vmatpush.msra.mxu0 %v187
    %1917 = vmatpush.msra.mxu0 %v179
    %1918 = vmatpush.msra.mxu0 %v171
    %1919 = vmatpush.msra.mxu0 %v163
    %1920 = vmatpush.msra.mxu0 %v155
    %1921 = vmatpush.msra.mxu0 %v147
    %1922 = vmatpush.msra.mxu0 %v139
    %1923 = vmatpush.msra.mxu0 %v131
    %1924 = vmatpush.msra.mxu0 %v123
    %1925 = vmatpush.msra.mxu0 %v115
    %1926 = vmatpush.msra.mxu0 %v107
    %1927 = vmatpush.msra.mxu0 %v99
    %1928 = vmatmul.f32.gmra.mxu0 %v1741
    %v1929 = vpop.f32.mrf.mxu0
    %v1930 = vadd.f32 0.0, %v1929
    %1931 = vdwg.mxu0
    %1932 = vmatpush.msra.mxu0 %v347
    %1933 = vmatpush.msra.mxu0 %v339
    %1934 = vmatpush.msra.mxu0 %v331
    %1935 = vmatpush.msra.mxu0 %v323
    %1936 = vmatpush.msra.mxu0 %v315
    %1937 = vmatpush.msra.mxu0 %v307
    %1938 = vmatpush.msra.mxu0 %v299
    %1939 = vmatpush.msra.mxu0 %v291
    %1940 = vmatpush.msra.mxu0 %v283
    %1941 = vmatpush.msra.mxu0 %v275
    %1942 = vmatpush.msra.mxu0 %v267
    %1943 = vmatpush.msra.mxu0 %v259
    %1944 = vmatpush.msra.mxu0 %v251
    %1945 = vmatpush.msra.mxu0 %v243
    %1946 = vmatpush.msra.mxu0 %v235
    %1947 = vmatpush.msra.mxu0 %v227
    %1948 = vmatmul.f32.gmra.mxu0 %v1742
    %v1949 = vpop.f32.mrf.mxu0
    %v1950 = vadd.f32 %v1930, %v1949
    %1951 = vdwg.mxu0
    %1952 = vmatpush.msra.mxu0 %v220
    %1953 = vmatpush.msra.mxu0 %v212
    %1954 = vmatpush.msra.mxu0 %v204
    %1955 = vmatpush.msra.mxu0 %v196
    %1956 = vmatpush.msra.mxu0 %v188
    %1957 = vmatpush.msra.mxu0 %v180
    %1958 = vmatpush.msra.mxu0 %v172
    %1959 = vmatpush.msra.mxu0 %v164
    %1960 = vmatpush.msra.mxu0 %v156
    %1961 = vmatpush.msra.mxu0 %v148
    %1962 = vmatpush.msra.mxu0 %v140
    %1963 = vmatpush.msra.mxu0 %v132
    %1964 = vmatpush.msra.mxu0 %v124
    %1965 = vmatpush.msra.mxu0 %v116
    %1966 = vmatpush.msra.mxu0 %v108
    %1967 = vmatpush.msra.mxu0 %v100
    %1968 = vmatmul.f32.gmra.mxu0 %v1741
    %v1969 = vpop.f32.mrf.mxu0
    %v1970 = vadd.f32 0.0, %v1969
    %1971 = vdwg.mxu0
    %1972 = vmatpush.msra.mxu0 %v348
    %1973 = vmatpush.msra.mxu0 %v340
    %1974 = vmatpush.msra.mxu0 %v332
    %1975 = vmatpush.msra.mxu0 %v324
    %1976 = vmatpush.msra.mxu0 %v316
    %1977 = vmatpush.msra.mxu0 %v308
    %1978 = vmatpush.msra.mxu0 %v300
    %1979 = vmatpush.msra.mxu0 %v292
    %1980 = vmatpush.msra.mxu0 %v284
    %1981 = vmatpush.msra.mxu0 %v276
    %1982 = vmatpush.msra.mxu0 %v268
    %1983 = vmatpush.msra.mxu0 %v260
    %1984 = vmatpush.msra.mxu0 %v252
    %1985 = vmatpush.msra.mxu0 %v244
    %1986 = vmatpush.msra.mxu0 %v236
    %1987 = vmatpush.msra.mxu0 %v228
    %1988 = vmatmul.f32.gmra.mxu0 %v1742
    %v1989 = vpop.f32.mrf.mxu0
    %v1990 = vadd.f32 %v1970, %v1989
    %1991 = vdwg.mxu0
    %1992 = vmatpush.msra.mxu0 %v221
    %1993 = vmatpush.msra.mxu0 %v213
    %1994 = vmatpush.msra.mxu0 %v205
    %1995 = vmatpush.msra.mxu0 %v197
    %1996 = vmatpush.msra.mxu0 %v189
    %1997 = vmatpush.msra.mxu0 %v181
    %1998 = vmatpush.msra.mxu0 %v173
    %1999 = vmatpush.msra.mxu0 %v165
    %2000 = vmatpush.msra.mxu0 %v157
    %2001 = vmatpush.msra.mxu0 %v149
    %2002 = vmatpush.msra.mxu0 %v141
    %2003 = vmatpush.msra.mxu0 %v133
    %2004 = vmatpush.msra.mxu0 %v125
    %2005 = vmatpush.msra.mxu0 %v117
    %2006 = vmatpush.msra.mxu0 %v109
    %2007 = vmatpush.msra.mxu0 %v101
    %2008 = vmatmul.f32.gmra.mxu0 %v1741
    %v2009 = vpop.f32.mrf.mxu0
    %v2010 = vadd.f32 0.0, %v2009
    %2011 = vdwg.mxu0
    %2012 = vmatpush.msra.mxu0 %v349
    %2013 = vmatpush.msra.mxu0 %v341
    %2014 = vmatpush.msra.mxu0 %v333
    %2015 = vmatpush.msra.mxu0 %v325
    %2016 = vmatpush.msra.mxu0 %v317
    %2017 = vmatpush.msra.mxu0 %v309
    %2018 = vmatpush.msra.mxu0 %v301
    %2019 = vmatpush.msra.mxu0 %v293
    %2020 = vmatpush.msra.mxu0 %v285
    %2021 = vmatpush.msra.mxu0 %v277
    %2022 = vmatpush.msra.mxu0 %v269
    %2023 = vmatpush.msra.mxu0 %v261
    %2024 = vmatpush.msra.mxu0 %v253
    %2025 = vmatpush.msra.mxu0 %v245
    %2026 = vmatpush.msra.mxu0 %v237
    %2027 = vmatpush.msra.mxu0 %v229
    %2028 = vmatmul.f32.gmra.mxu0 %v1742
    %v2029 = vpop.f32.mrf.mxu0
    %v2030 = vadd.f32 %v2010, %v2029
    %2031 = vdwg.mxu0
    %2032 = vmatpush.msra.mxu0 %v222
    %2033 = vmatpush.msra.mxu0 %v214
    %2034 = vmatpush.msra.mxu0 %v206
    %2035 = vmatpush.msra.mxu0 %v198
    %2036 = vmatpush.msra.mxu0 %v190
    %2037 = vmatpush.msra.mxu0 %v182
    %2038 = vmatpush.msra.mxu0 %v174
    %2039 = vmatpush.msra.mxu0 %v166
    %2040 = vmatpush.msra.mxu0 %v158
    %2041 = vmatpush.msra.mxu0 %v150
    %2042 = vmatpush.msra.mxu0 %v142
    %2043 = vmatpush.msra.mxu0 %v134
    %2044 = vmatpush.msra.mxu0 %v126
    %2045 = vmatpush.msra.mxu0 %v118
    %2046 = vmatpush.msra.mxu0 %v110
    %2047 = vmatpush.msra.mxu0 %v102
    %2048 = vmatmul.f32.gmra.mxu0 %v1741
    %v2049 = vpop.f32.mrf.mxu0
    %v2050 = vadd.f32 0.0, %v2049
    %2051 = vdwg.mxu0
    %2052 = vmatpush.msra.mxu0 %v350
    %2053 = vmatpush.msra.mxu0 %v342
    %2054 = vmatpush.msra.mxu0 %v334
    %2055 = vmatpush.msra.mxu0 %v326
    %2056 = vmatpush.msra.mxu0 %v318
    %2057 = vmatpush.msra.mxu0 %v310
    %2058 = vmatpush.msra.mxu0 %v302
    %2059 = vmatpush.msra.mxu0 %v294
    %2060 = vmatpush.msra.mxu0 %v286
    %2061 = vmatpush.msra.mxu0 %v278
    %2062 = vmatpush.msra.mxu0 %v270
    %2063 = vmatpush.msra.mxu0 %v262
    %2064 = vmatpush.msra.mxu0 %v254
    %2065 = vmatpush.msra.mxu0 %v246
    %2066 = vmatpush.msra.mxu0 %v238
    %2067 = vmatpush.msra.mxu0 %v230
    %2068 = vmatmul.f32.gmra.mxu0 %v1742
    %v2069 = vpop.f32.mrf.mxu0
    %v2070 = vadd.f32 %v2050, %v2069
    %2071 = vdwg.mxu0
    %v2072 = vadd.f32 %v1744, %v1790
    %v2073 = vadd.f32 %v1745, %v1830
    %v2074 = vadd.f32 %v1746, %v1870
    %v2075 = vadd.f32 %v1747, %v1910
    %v2076 = vadd.f32 %v1748, %v1950
    %v2077 = vadd.f32 %v1749, %v1990
    %v2078 = vadd.f32 %v1750, %v2030
    %v2079 = vadd.f32 %v1751, %v2070
    %v2080 = vxor.u32 %v2072, 2147483648
    %v2081 = vxor.u32 %v2073, 2147483648
    %v2082 = vmul.f32 %v2080, 1.442695
    %v2083 = vpow.pop %v2082
    %v2084 = vmul.f32 %v2081, 1.442695
    %v2085 = vpow.pop %v2084
    %v2086 = vadd.f32 %v2083, 1.0
    %v2087 = vadd.f32 %v2085, 1.0
    %v2088 = vrcp.pop %v2086
    %v2089 = vmul.f32 %v2086, %v2088
    %v2090 = vsub.f32 1.0, %v2089
    %v2091 = vmul.f32 %v2088, %v2090
    %v2092 = vadd.f32 %v2088, %v2091
    %vm2093 = vweird.f32 %v2086
    %vm2094 = vweird.f32 %v2088
    %vm2095 = vmor %vm2093, %vm2094
    %v2096 = vsel %vm2095, %v2088, %v2092
    %v2097 = vand.u32 2147483647, %v2086
    %vm2098 = vcmp.eq.f32.partialorder %v2097, 8.507059e+37
    %v2099 = vand.u32 %v2086, 2147483648
    %v2100 = vor.u32 1.1754944e-38, %v2099
    %v2101 = vsel %vm2098, %v2100, %v2096
    %v2102 = vmul.f32 1.0, %v2101
    %v2103 = vrcp.pop %v2087
    %v2104 = vmul.f32 %v2087, %v2103
    %v2105 = vsub.f32 1.0, %v2104
    %v2106 = vmul.f32 %v2103, %v2105
    %v2107 = vadd.f32 %v2103, %v2106
    %vm2108 = vweird.f32 %v2087
    %vm2109 = vweird.f32 %v2103
    %vm2110 = vmor %vm2108, %vm2109
    %v2111 = vsel %vm2110, %v2103, %v2107
    %v2112 = vand.u32 2147483647, %v2087
    %vm2113 = vcmp.eq.f32.partialorder %v2112, 8.507059e+37
    %v2114 = vand.u32 %v2087, 2147483648
    %v2115 = vor.u32 1.1754944e-38, %v2114
    %v2116 = vsel %vm2113, %v2115, %v2111
    %v2117 = vmul.f32 1.0, %v2116
    %v2118 = vxor.u32 %v2074, 2147483648
    %v2119 = vxor.u32 %v2075, 2147483648
    %v2120 = vmul.f32 %v2118, 1.442695
    %v2121 = vpow.pop %v2120
    %v2122 = vmul.f32 %v2119, 1.442695
    %v2123 = vpow.pop %v2122
    %v2124 = vadd.f32 %v2121, 1.0
    %v2125 = vadd.f32 %v2123, 1.0
    %v2126 = vrcp.pop %v2124
    %v2127 = vmul.f32 %v2124, %v2126
    %v2128 = vsub.f32 1.0, %v2127
    %v2129 = vmul.f32 %v2126, %v2128
    %v2130 = vadd.f32 %v2126, %v2129
    %vm2131 = vweird.f32 %v2124
    %vm2132 = vweird.f32 %v2126
    %vm2133 = vmor %vm2131, %vm2132
    %v2134 = vsel %vm2133, %v2126, %v2130
    %v2135 = vand.u32 2147483647, %v2124
    %vm2136 = vcmp.eq.f32.partialorder %v2135, 8.507059e+37
    %v2137 = vand.u32 %v2124, 2147483648
    %v2138 = vor.u32 1.1754944e-38, %v2137
    %v2139 = vsel %vm2136, %v2138, %v2134
    %v2140 = vmul.f32 1.0, %v2139
    %v2141 = vrcp.pop %v2125
    %v2142 = vmul.f32 %v2125, %v2141
    %v2143 = vsub.f32 1.0, %v2142
    %v2144 = vmul.f32 %v2141, %v2143
    %v2145 = vadd.f32 %v2141, %v2144
    %vm2146 = vweird.f32 %v2125
    %vm2147 = vweird.f32 %v2141
    %vm2148 = vmor %vm2146, %vm2147
    %v2149 = vsel %vm2148, %v2141, %v2145
    %v2150 = vand.u32 2147483647, %v2125
    %vm2151 = vcmp.eq.f32.partialorder %v2150, 8.507059e+37
    %v2152 = vand.u32 %v2125, 2147483648
    %v2153 = vor.u32 1.1754944e-38, %v2152
    %v2154 = vsel %vm2151, %v2153, %v2149
    %v2155 = vmul.f32 1.0, %v2154
    %v2156 = vtanh.pop %v2076
    %v2157 = vtanh.pop %v2077
    %v2158 = vxor.u32 %v2078, 2147483648
    %v2159 = vxor.u32 %v2079, 2147483648
    %v2160 = vmul.f32 %v2158, 1.442695
    %v2161 = vpow.pop %v2160
    %v2162 = vmul.f32 %v2159, 1.442695
    %v2163 = vpow.pop %v2162
    %v2164 = vadd.f32 %v2161, 1.0
    %v2165 = vadd.f32 %v2163, 1.0
    %v2166 = vrcp.pop %v2164
    %v2167 = vmul.f32 %v2164, %v2166
    %v2168 = vsub.f32 1.0, %v2167
    %v2169 = vmul.f32 %v2166, %v2168
    %v2170 = vadd.f32 %v2166, %v2169
    %vm2171 = vweird.f32 %v2164
    %vm2172 = vweird.f32 %v2166
    %vm2173 = vmor %vm2171, %vm2172
    %v2174 = vsel %vm2173, %v2166, %v2170
    %v2175 = vand.u32 2147483647, %v2164
    %vm2176 = vcmp.eq.f32.partialorder %v2175, 8.507059e+37
    %v2177 = vand.u32 %v2164, 2147483648
    %v2178 = vor.u32 1.1754944e-38, %v2177
    %v2179 = vsel %vm2176, %v2178, %v2174
    %v2180 = vmul.f32 1.0, %v2179
    %v2181 = vrcp.pop %v2165
    %v2182 = vmul.f32 %v2165, %v2181
    %v2183 = vsub.f32 1.0, %v2182
    %v2184 = vmul.f32 %v2181, %v2183
    %v2185 = vadd.f32 %v2181, %v2184
    %vm2186 = vweird.f32 %v2165
    %vm2187 = vweird.f32 %v2181
    %vm2188 = vmor %vm2186, %vm2187
    %v2189 = vsel %vm2188, %v2181, %v2185
    %v2190 = vand.u32 2147483647, %v2165
    %vm2191 = vcmp.eq.f32.partialorder %v2190, 8.507059e+37
    %v2192 = vand.u32 %v2165, 2147483648
    %v2193 = vor.u32 1.1754944e-38, %v2192
    %v2194 = vsel %vm2191, %v2193, %v2189
    %v2195 = vmul.f32 1.0, %v2194
    %v2196 = vmul.f32 %v2140, %v1737
    %v2197 = vmul.f32 %v2155, %v1738
    %v2198 = vmul.f32 %v2102, %v2156
    %v2199 = vmul.f32 %v2117, %v2157
    %v2200 = vadd.f32 %v2196, %v2198
    %v2201 = vadd.f32 %v2197, %v2199
    %v2202 = vtanh.pop %v2200
    %v2203 = vtanh.pop %v2201
    %v2204 = vmul.f32 %v2180, %v2202
    %v2205 = vmul.f32 %v2195, %v2203
    %s2206 = scalar_lea.vmem [#allocation4], 256
    %v2207 = vld [vmem:[%s2206] sm:$0xff]
    %v2208 = vld [vmem:[%s2206 + $0x8] sm:$0xff]
    %v2209 = vld [vmem:[%s2206 + $0x10] sm:$0xff]
    %v2210 = vld [vmem:[%s2206 + $0x18] sm:$0xff]
    %v2211 = vld [vmem:[%s2206 + $0x20] sm:$0xff]
    %v2212 = vld [vmem:[%s2206 + $0x28] sm:$0xff]
    %v2213 = vld [vmem:[%s2206 + $0x30] sm:$0xff]
    %v2214 = vld [vmem:[%s2206 + $0x38] sm:$0xff]
    %2215 = vmatpush.msra.mxu0 %v215
    %2216 = vmatpush.msra.mxu0 %v207
    %2217 = vmatpush.msra.mxu0 %v199
    %2218 = vmatpush.msra.mxu0 %v191
    %2219 = vmatpush.msra.mxu0 %v183
    %2220 = vmatpush.msra.mxu0 %v175
    %2221 = vmatpush.msra.mxu0 %v167
    %2222 = vmatpush.msra.mxu0 %v159
    %2223 = vmatpush.msra.mxu0 %v151
    %2224 = vmatpush.msra.mxu0 %v143
    %2225 = vmatpush.msra.mxu0 %v135
    %2226 = vmatpush.msra.mxu0 %v127
    %2227 = vmatpush.msra.mxu0 %v119
    %2228 = vmatpush.msra.mxu0 %v111
    %2229 = vmatpush.msra.mxu0 %v103
    %2230 = vmatpush.msra.mxu0 %v95
    %2231 = vmatmul.f32.gmra.mxu0 %v2204
    %v2232 = vpop.f32.mrf.mxu0
    %v2233 = vadd.f32 0.0, %v2232
    %2234 = vdwg.mxu0
    %2235 = vmatpush.msra.mxu0 %v343
    %2236 = vmatpush.msra.mxu0 %v335
    %2237 = vmatpush.msra.mxu0 %v327
    %2238 = vmatpush.msra.mxu0 %v319
    %2239 = vmatpush.msra.mxu0 %v311
    %2240 = vmatpush.msra.mxu0 %v303
    %2241 = vmatpush.msra.mxu0 %v295
    %2242 = vmatpush.msra.mxu0 %v287
    %2243 = vmatpush.msra.mxu0 %v279
    %2244 = vmatpush.msra.mxu0 %v271
    %2245 = vmatpush.msra.mxu0 %v263
    %2246 = vmatpush.msra.mxu0 %v255
    %2247 = vmatpush.msra.mxu0 %v247
    %2248 = vmatpush.msra.mxu0 %v239
    %2249 = vmatpush.msra.mxu0 %v231
    %2250 = vmatpush.msra.mxu0 %v223
    %2251 = vmatmul.f32.gmra.mxu0 %v2205
    %v2252 = vpop.f32.mrf.mxu0
    %v2253 = vadd.f32 %v2233, %v2252
    %2254 = vdwg.mxu0
    %2255 = vmatpush.msra.mxu0 %v216
    %2256 = vmatpush.msra.mxu0 %v208
    %2257 = vmatpush.msra.mxu0 %v200
    %2258 = vmatpush.msra.mxu0 %v192
    %2259 = vmatpush.msra.mxu0 %v184
    %2260 = vmatpush.msra.mxu0 %v176
    %2261 = vmatpush.msra.mxu0 %v168
    %2262 = vmatpush.msra.mxu0 %v160
    %2263 = vmatpush.msra.mxu0 %v152
    %2264 = vmatpush.msra.mxu0 %v144
    %2265 = vmatpush.msra.mxu0 %v136
    %2266 = vmatpush.msra.mxu0 %v128
    %2267 = vmatpush.msra.mxu0 %v120
    %2268 = vmatpush.msra.mxu0 %v112
    %2269 = vmatpush.msra.mxu0 %v104
    %2270 = vmatpush.msra.mxu0 %v96
    %2271 = vmatmul.f32.gmra.mxu0 %v2204
    %v2272 = vpop.f32.mrf.mxu0
    %v2273 = vadd.f32 0.0, %v2272
    %2274 = vdwg.mxu0
    %2275 = vmatpush.msra.mxu0 %v344
    %2276 = vmatpush.msra.mxu0 %v336
    %2277 = vmatpush.msra.mxu0 %v328
    %2278 = vmatpush.msra.mxu0 %v320
    %2279 = vmatpush.msra.mxu0 %v312
    %2280 = vmatpush.msra.mxu0 %v304
    %2281 = vmatpush.msra.mxu0 %v296
    %2282 = vmatpush.msra.mxu0 %v288
    %2283 = vmatpush.msra.mxu0 %v280
    %2284 = vmatpush.msra.mxu0 %v272
    %2285 = vmatpush.msra.mxu0 %v264
    %2286 = vmatpush.msra.mxu0 %v256
    %2287 = vmatpush.msra.mxu0 %v248
    %2288 = vmatpush.msra.mxu0 %v240
    %2289 = vmatpush.msra.mxu0 %v232
    %2290 = vmatpush.msra.mxu0 %v224
    %2291 = vmatmul.f32.gmra.mxu0 %v2205
    %v2292 = vpop.f32.mrf.mxu0
    %v2293 = vadd.f32 %v2273, %v2292
    %2294 = vdwg.mxu0
    %2295 = vmatpush.msra.mxu0 %v217
    %2296 = vmatpush.msra.mxu0 %v209
    %2297 = vmatpush.msra.mxu0 %v201
    %2298 = vmatpush.msra.mxu0 %v193
    %2299 = vmatpush.msra.mxu0 %v185
    %2300 = vmatpush.msra.mxu0 %v177
    %2301 = vmatpush.msra.mxu0 %v169
    %2302 = vmatpush.msra.mxu0 %v161
    %2303 = vmatpush.msra.mxu0 %v153
    %2304 = vmatpush.msra.mxu0 %v145
    %2305 = vmatpush.msra.mxu0 %v137
    %2306 = vmatpush.msra.mxu0 %v129
    %2307 = vmatpush.msra.mxu0 %v121
    %2308 = vmatpush.msra.mxu0 %v113
    %2309 = vmatpush.msra.mxu0 %v105
    %2310 = vmatpush.msra.mxu0 %v97
    %2311 = vmatmul.f32.gmra.mxu0 %v2204
    %v2312 = vpop.f32.mrf.mxu0
    %v2313 = vadd.f32 0.0, %v2312
    %2314 = vdwg.mxu0
    %2315 = vmatpush.msra.mxu0 %v345
    %2316 = vmatpush.msra.mxu0 %v337
    %2317 = vmatpush.msra.mxu0 %v329
    %2318 = vmatpush.msra.mxu0 %v321
    %2319 = vmatpush.msra.mxu0 %v313
    %2320 = vmatpush.msra.mxu0 %v305
    %2321 = vmatpush.msra.mxu0 %v297
    %2322 = vmatpush.msra.mxu0 %v289
    %2323 = vmatpush.msra.mxu0 %v281
    %2324 = vmatpush.msra.mxu0 %v273
    %2325 = vmatpush.msra.mxu0 %v265
    %2326 = vmatpush.msra.mxu0 %v257
    %2327 = vmatpush.msra.mxu0 %v249
    %2328 = vmatpush.msra.mxu0 %v241
    %2329 = vmatpush.msra.mxu0 %v233
    %2330 = vmatpush.msra.mxu0 %v225
    %2331 = vmatmul.f32.gmra.mxu0 %v2205
    %v2332 = vpop.f32.mrf.mxu0
    %v2333 = vadd.f32 %v2313, %v2332
    %2334 = vdwg.mxu0
    %2335 = vmatpush.msra.mxu0 %v218
    %2336 = vmatpush.msra.mxu0 %v210
    %2337 = vmatpush.msra.mxu0 %v202
    %2338 = vmatpush.msra.mxu0 %v194
    %2339 = vmatpush.msra.mxu0 %v186
    %2340 = vmatpush.msra.mxu0 %v178
    %2341 = vmatpush.msra.mxu0 %v170
    %2342 = vmatpush.msra.mxu0 %v162
    %2343 = vmatpush.msra.mxu0 %v154
    %2344 = vmatpush.msra.mxu0 %v146
    %2345 = vmatpush.msra.mxu0 %v138
    %2346 = vmatpush.msra.mxu0 %v130
    %2347 = vmatpush.msra.mxu0 %v122
    %2348 = vmatpush.msra.mxu0 %v114
    %2349 = vmatpush.msra.mxu0 %v106
    %2350 = vmatpush.msra.mxu0 %v98
    %2351 = vmatmul.f32.gmra.mxu0 %v2204
    %v2352 = vpop.f32.mrf.mxu0
    %v2353 = vadd.f32 0.0, %v2352
    %2354 = vdwg.mxu0
    %2355 = vmatpush.msra.mxu0 %v346
    %2356 = vmatpush.msra.mxu0 %v338
    %2357 = vmatpush.msra.mxu0 %v330
    %2358 = vmatpush.msra.mxu0 %v322
    %2359 = vmatpush.msra.mxu0 %v314
    %2360 = vmatpush.msra.mxu0 %v306
    %2361 = vmatpush.msra.mxu0 %v298
    %2362 = vmatpush.msra.mxu0 %v290
    %2363 = vmatpush.msra.mxu0 %v282
    %2364 = vmatpush.msra.mxu0 %v274
    %2365 = vmatpush.msra.mxu0 %v266
    %2366 = vmatpush.msra.mxu0 %v258
    %2367 = vmatpush.msra.mxu0 %v250
    %2368 = vmatpush.msra.mxu0 %v242
    %2369 = vmatpush.msra.mxu0 %v234
    %2370 = vmatpush.msra.mxu0 %v226
    %2371 = vmatmul.f32.gmra.mxu0 %v2205
    %v2372 = vpop.f32.mrf.mxu0
    %v2373 = vadd.f32 %v2353, %v2372
    %2374 = vdwg.mxu0
    %2375 = vmatpush.msra.mxu0 %v219
    %2376 = vmatpush.msra.mxu0 %v211
    %2377 = vmatpush.msra.mxu0 %v203
    %2378 = vmatpush.msra.mxu0 %v195
    %2379 = vmatpush.msra.mxu0 %v187
    %2380 = vmatpush.msra.mxu0 %v179
    %2381 = vmatpush.msra.mxu0 %v171
    %2382 = vmatpush.msra.mxu0 %v163
    %2383 = vmatpush.msra.mxu0 %v155
    %2384 = vmatpush.msra.mxu0 %v147
    %2385 = vmatpush.msra.mxu0 %v139
    %2386 = vmatpush.msra.mxu0 %v131
    %2387 = vmatpush.msra.mxu0 %v123
    %2388 = vmatpush.msra.mxu0 %v115
    %2389 = vmatpush.msra.mxu0 %v107
    %2390 = vmatpush.msra.mxu0 %v99
    %2391 = vmatmul.f32.gmra.mxu0 %v2204
    %v2392 = vpop.f32.mrf.mxu0
    %v2393 = vadd.f32 0.0, %v2392
    %2394 = vdwg.mxu0
    %2395 = vmatpush.msra.mxu0 %v347
    %2396 = vmatpush.msra.mxu0 %v339
    %2397 = vmatpush.msra.mxu0 %v331
    %2398 = vmatpush.msra.mxu0 %v323
    %2399 = vmatpush.msra.mxu0 %v315
    %2400 = vmatpush.msra.mxu0 %v307
    %2401 = vmatpush.msra.mxu0 %v299
    %2402 = vmatpush.msra.mxu0 %v291
    %2403 = vmatpush.msra.mxu0 %v283
    %2404 = vmatpush.msra.mxu0 %v275
    %2405 = vmatpush.msra.mxu0 %v267
    %2406 = vmatpush.msra.mxu0 %v259
    %2407 = vmatpush.msra.mxu0 %v251
    %2408 = vmatpush.msra.mxu0 %v243
    %2409 = vmatpush.msra.mxu0 %v235
    %2410 = vmatpush.msra.mxu0 %v227
    %2411 = vmatmul.f32.gmra.mxu0 %v2205
    %v2412 = vpop.f32.mrf.mxu0
    %v2413 = vadd.f32 %v2393, %v2412
    %2414 = vdwg.mxu0
    %2415 = vmatpush.msra.mxu0 %v220
    %2416 = vmatpush.msra.mxu0 %v212
    %2417 = vmatpush.msra.mxu0 %v204
    %2418 = vmatpush.msra.mxu0 %v196
    %2419 = vmatpush.msra.mxu0 %v188
    %2420 = vmatpush.msra.mxu0 %v180
    %2421 = vmatpush.msra.mxu0 %v172
    %2422 = vmatpush.msra.mxu0 %v164
    %2423 = vmatpush.msra.mxu0 %v156
    %2424 = vmatpush.msra.mxu0 %v148
    %2425 = vmatpush.msra.mxu0 %v140
    %2426 = vmatpush.msra.mxu0 %v132
    %2427 = vmatpush.msra.mxu0 %v124
    %2428 = vmatpush.msra.mxu0 %v116
    %2429 = vmatpush.msra.mxu0 %v108
    %2430 = vmatpush.msra.mxu0 %v100
    %2431 = vmatmul.f32.gmra.mxu0 %v2204
    %v2432 = vpop.f32.mrf.mxu0
    %v2433 = vadd.f32 0.0, %v2432
    %2434 = vdwg.mxu0
    %2435 = vmatpush.msra.mxu0 %v348
    %2436 = vmatpush.msra.mxu0 %v340
    %2437 = vmatpush.msra.mxu0 %v332
    %2438 = vmatpush.msra.mxu0 %v324
    %2439 = vmatpush.msra.mxu0 %v316
    %2440 = vmatpush.msra.mxu0 %v308
    %2441 = vmatpush.msra.mxu0 %v300
    %2442 = vmatpush.msra.mxu0 %v292
    %2443 = vmatpush.msra.mxu0 %v284
    %2444 = vmatpush.msra.mxu0 %v276
    %2445 = vmatpush.msra.mxu0 %v268
    %2446 = vmatpush.msra.mxu0 %v260
    %2447 = vmatpush.msra.mxu0 %v252
    %2448 = vmatpush.msra.mxu0 %v244
    %2449 = vmatpush.msra.mxu0 %v236
    %2450 = vmatpush.msra.mxu0 %v228
    %2451 = vmatmul.f32.gmra.mxu0 %v2205
    %v2452 = vpop.f32.mrf.mxu0
    %v2453 = vadd.f32 %v2433, %v2452
    %2454 = vdwg.mxu0
    %2455 = vmatpush.msra.mxu0 %v221
    %2456 = vmatpush.msra.mxu0 %v213
    %2457 = vmatpush.msra.mxu0 %v205
    %2458 = vmatpush.msra.mxu0 %v197
    %2459 = vmatpush.msra.mxu0 %v189
    %2460 = vmatpush.msra.mxu0 %v181
    %2461 = vmatpush.msra.mxu0 %v173
    %2462 = vmatpush.msra.mxu0 %v165
    %2463 = vmatpush.msra.mxu0 %v157
    %2464 = vmatpush.msra.mxu0 %v149
    %2465 = vmatpush.msra.mxu0 %v141
    %2466 = vmatpush.msra.mxu0 %v133
    %2467 = vmatpush.msra.mxu0 %v125
    %2468 = vmatpush.msra.mxu0 %v117
    %2469 = vmatpush.msra.mxu0 %v109
    %2470 = vmatpush.msra.mxu0 %v101
    %2471 = vmatmul.f32.gmra.mxu0 %v2204
    %v2472 = vpop.f32.mrf.mxu0
    %v2473 = vadd.f32 0.0, %v2472
    %2474 = vdwg.mxu0
    %2475 = vmatpush.msra.mxu0 %v349
    %2476 = vmatpush.msra.mxu0 %v341
    %2477 = vmatpush.msra.mxu0 %v333
    %2478 = vmatpush.msra.mxu0 %v325
    %2479 = vmatpush.msra.mxu0 %v317
    %2480 = vmatpush.msra.mxu0 %v309
    %2481 = vmatpush.msra.mxu0 %v301
    %2482 = vmatpush.msra.mxu0 %v293
    %2483 = vmatpush.msra.mxu0 %v285
    %2484 = vmatpush.msra.mxu0 %v277
    %2485 = vmatpush.msra.mxu0 %v269
    %2486 = vmatpush.msra.mxu0 %v261
    %2487 = vmatpush.msra.mxu0 %v253
    %2488 = vmatpush.msra.mxu0 %v245
    %2489 = vmatpush.msra.mxu0 %v237
    %2490 = vmatpush.msra.mxu0 %v229
    %2491 = vmatmul.f32.gmra.mxu0 %v2205
    %v2492 = vpop.f32.mrf.mxu0
    %v2493 = vadd.f32 %v2473, %v2492
    %2494 = vdwg.mxu0
    %2495 = vmatpush.msra.mxu0 %v222
    %2496 = vmatpush.msra.mxu0 %v214
    %2497 = vmatpush.msra.mxu0 %v206
    %2498 = vmatpush.msra.mxu0 %v198
    %2499 = vmatpush.msra.mxu0 %v190
    %2500 = vmatpush.msra.mxu0 %v182
    %2501 = vmatpush.msra.mxu0 %v174
    %2502 = vmatpush.msra.mxu0 %v166
    %2503 = vmatpush.msra.mxu0 %v158
    %2504 = vmatpush.msra.mxu0 %v150
    %2505 = vmatpush.msra.mxu0 %v142
    %2506 = vmatpush.msra.mxu0 %v134
    %2507 = vmatpush.msra.mxu0 %v126
    %2508 = vmatpush.msra.mxu0 %v118
    %2509 = vmatpush.msra.mxu0 %v110
    %2510 = vmatpush.msra.mxu0 %v102
    %2511 = vmatmul.f32.gmra.mxu0 %v2204
    %v2512 = vpop.f32.mrf.mxu0
    %v2513 = vadd.f32 0.0, %v2512
    %2514 = vdwg.mxu0
    %2515 = vmatpush.msra.mxu0 %v350
    %2516 = vmatpush.msra.mxu0 %v342
    %2517 = vmatpush.msra.mxu0 %v334
    %2518 = vmatpush.msra.mxu0 %v326
    %2519 = vmatpush.msra.mxu0 %v318
    %2520 = vmatpush.msra.mxu0 %v310
    %2521 = vmatpush.msra.mxu0 %v302
    %2522 = vmatpush.msra.mxu0 %v294
    %2523 = vmatpush.msra.mxu0 %v286
    %2524 = vmatpush.msra.mxu0 %v278
    %2525 = vmatpush.msra.mxu0 %v270
    %2526 = vmatpush.msra.mxu0 %v262
    %2527 = vmatpush.msra.mxu0 %v254
    %2528 = vmatpush.msra.mxu0 %v246
    %2529 = vmatpush.msra.mxu0 %v238
    %2530 = vmatpush.msra.mxu0 %v230
    %2531 = vmatmul.f32.gmra.mxu0 %v2205
    %v2532 = vpop.f32.mrf.mxu0
    %v2533 = vadd.f32 %v2513, %v2532
    %2534 = vdwg.mxu0
    %v2535 = vadd.f32 %v2207, %v2253
    %v2536 = vadd.f32 %v2208, %v2293
    %v2537 = vadd.f32 %v2209, %v2333
    %v2538 = vadd.f32 %v2210, %v2373
    %v2539 = vadd.f32 %v2211, %v2413
    %v2540 = vadd.f32 %v2212, %v2453
    %v2541 = vadd.f32 %v2213, %v2493
    %v2542 = vadd.f32 %v2214, %v2533
    %v2543 = vxor.u32 %v2535, 2147483648
    %v2544 = vxor.u32 %v2536, 2147483648
    %v2545 = vmul.f32 %v2543, 1.442695
    %v2546 = vpow.pop %v2545
    %v2547 = vmul.f32 %v2544, 1.442695
    %v2548 = vpow.pop %v2547
    %v2549 = vadd.f32 %v2546, 1.0
    %v2550 = vadd.f32 %v2548, 1.0
    %v2551 = vrcp.pop %v2549
    %v2552 = vmul.f32 %v2549, %v2551
    %v2553 = vsub.f32 1.0, %v2552
    %v2554 = vmul.f32 %v2551, %v2553
    %v2555 = vadd.f32 %v2551, %v2554
    %vm2556 = vweird.f32 %v2549
    %vm2557 = vweird.f32 %v2551
    %vm2558 = vmor %vm2556, %vm2557
    %v2559 = vsel %vm2558, %v2551, %v2555
    %v2560 = vand.u32 2147483647, %v2549
    %vm2561 = vcmp.eq.f32.partialorder %v2560, 8.507059e+37
    %v2562 = vand.u32 %v2549, 2147483648
    %v2563 = vor.u32 1.1754944e-38, %v2562
    %v2564 = vsel %vm2561, %v2563, %v2559
    %v2565 = vmul.f32 1.0, %v2564
    %v2566 = vrcp.pop %v2550
    %v2567 = vmul.f32 %v2550, %v2566
    %v2568 = vsub.f32 1.0, %v2567
    %v2569 = vmul.f32 %v2566, %v2568
    %v2570 = vadd.f32 %v2566, %v2569
    %vm2571 = vweird.f32 %v2550
    %vm2572 = vweird.f32 %v2566
    %vm2573 = vmor %vm2571, %vm2572
    %v2574 = vsel %vm2573, %v2566, %v2570
    %v2575 = vand.u32 2147483647, %v2550
    %vm2576 = vcmp.eq.f32.partialorder %v2575, 8.507059e+37
    %v2577 = vand.u32 %v2550, 2147483648
    %v2578 = vor.u32 1.1754944e-38, %v2577
    %v2579 = vsel %vm2576, %v2578, %v2574
    %v2580 = vmul.f32 1.0, %v2579
    %v2581 = vxor.u32 %v2537, 2147483648
    %v2582 = vxor.u32 %v2538, 2147483648
    %v2583 = vmul.f32 %v2581, 1.442695
    %v2584 = vpow.pop %v2583
    %v2585 = vmul.f32 %v2582, 1.442695
    %v2586 = vpow.pop %v2585
    %v2587 = vadd.f32 %v2584, 1.0
    %v2588 = vadd.f32 %v2586, 1.0
    %v2589 = vrcp.pop %v2587
    %v2590 = vmul.f32 %v2587, %v2589
    %v2591 = vsub.f32 1.0, %v2590
    %v2592 = vmul.f32 %v2589, %v2591
    %v2593 = vadd.f32 %v2589, %v2592
    %vm2594 = vweird.f32 %v2587
    %vm2595 = vweird.f32 %v2589
    %vm2596 = vmor %vm2594, %vm2595
    %v2597 = vsel %vm2596, %v2589, %v2593
    %v2598 = vand.u32 2147483647, %v2587
    %vm2599 = vcmp.eq.f32.partialorder %v2598, 8.507059e+37
    %v2600 = vand.u32 %v2587, 2147483648
    %v2601 = vor.u32 1.1754944e-38, %v2600
    %v2602 = vsel %vm2599, %v2601, %v2597
    %v2603 = vmul.f32 1.0, %v2602
    %v2604 = vrcp.pop %v2588
    %v2605 = vmul.f32 %v2588, %v2604
    %v2606 = vsub.f32 1.0, %v2605
    %v2607 = vmul.f32 %v2604, %v2606
    %v2608 = vadd.f32 %v2604, %v2607
    %vm2609 = vweird.f32 %v2588
    %vm2610 = vweird.f32 %v2604
    %vm2611 = vmor %vm2609, %vm2610
    %v2612 = vsel %vm2611, %v2604, %v2608
    %v2613 = vand.u32 2147483647, %v2588
    %vm2614 = vcmp.eq.f32.partialorder %v2613, 8.507059e+37
    %v2615 = vand.u32 %v2588, 2147483648
    %v2616 = vor.u32 1.1754944e-38, %v2615
    %v2617 = vsel %vm2614, %v2616, %v2612
    %v2618 = vmul.f32 1.0, %v2617
    %v2619 = vtanh.pop %v2539
    %v2620 = vtanh.pop %v2540
    %v2621 = vxor.u32 %v2541, 2147483648
    %v2622 = vxor.u32 %v2542, 2147483648
    %v2623 = vmul.f32 %v2621, 1.442695
    %v2624 = vpow.pop %v2623
    %v2625 = vmul.f32 %v2622, 1.442695
    %v2626 = vpow.pop %v2625
    %v2627 = vadd.f32 %v2624, 1.0
    %v2628 = vadd.f32 %v2626, 1.0
    %v2629 = vrcp.pop %v2627
    %v2630 = vmul.f32 %v2627, %v2629
    %v2631 = vsub.f32 1.0, %v2630
    %v2632 = vmul.f32 %v2629, %v2631
    %v2633 = vadd.f32 %v2629, %v2632
    %vm2634 = vweird.f32 %v2627
    %vm2635 = vweird.f32 %v2629
    %vm2636 = vmor %vm2634, %vm2635
    %v2637 = vsel %vm2636, %v2629, %v2633
    %v2638 = vand.u32 2147483647, %v2627
    %vm2639 = vcmp.eq.f32.partialorder %v2638, 8.507059e+37
    %v2640 = vand.u32 %v2627, 2147483648
    %v2641 = vor.u32 1.1754944e-38, %v2640
    %v2642 = vsel %vm2639, %v2641, %v2637
    %v2643 = vmul.f32 1.0, %v2642
    %v2644 = vrcp.pop %v2628
    %v2645 = vmul.f32 %v2628, %v2644
    %v2646 = vsub.f32 1.0, %v2645
    %v2647 = vmul.f32 %v2644, %v2646
    %v2648 = vadd.f32 %v2644, %v2647
    %vm2649 = vweird.f32 %v2628
    %vm2650 = vweird.f32 %v2644
    %vm2651 = vmor %vm2649, %vm2650
    %v2652 = vsel %vm2651, %v2644, %v2648
    %v2653 = vand.u32 2147483647, %v2628
    %vm2654 = vcmp.eq.f32.partialorder %v2653, 8.507059e+37
    %v2655 = vand.u32 %v2628, 2147483648
    %v2656 = vor.u32 1.1754944e-38, %v2655
    %v2657 = vsel %vm2654, %v2656, %v2652
    %v2658 = vmul.f32 1.0, %v2657
    %v2659 = vmul.f32 %v2603, %v2200
    %v2660 = vmul.f32 %v2618, %v2201
    %v2661 = vmul.f32 %v2565, %v2619
    %v2662 = vmul.f32 %v2580, %v2620
    %v2663 = vadd.f32 %v2659, %v2661
    %v2664 = vadd.f32 %v2660, %v2662
    %v2665 = vtanh.pop %v2663
    %v2666 = vtanh.pop %v2664
    %v2667 = vmul.f32 %v2643, %v2665
    %v2668 = vmul.f32 %v2658, %v2666
    %s2669 = scalar_lea.vmem [#allocation4], 320
    %v2670 = vld [vmem:[%s2669] sm:$0xff]
    %v2671 = vld [vmem:[%s2669 + $0x8] sm:$0xff]
    %v2672 = vld [vmem:[%s2669 + $0x10] sm:$0xff]
    %v2673 = vld [vmem:[%s2669 + $0x18] sm:$0xff]
    %v2674 = vld [vmem:[%s2669 + $0x20] sm:$0xff]
    %v2675 = vld [vmem:[%s2669 + $0x28] sm:$0xff]
    %v2676 = vld [vmem:[%s2669 + $0x30] sm:$0xff]
    %v2677 = vld [vmem:[%s2669 + $0x38] sm:$0xff]
    %2678 = vmatpush.msra.mxu0 %v215
    %2679 = vmatpush.msra.mxu0 %v207
    %2680 = vmatpush.msra.mxu0 %v199
    %2681 = vmatpush.msra.mxu0 %v191
    %2682 = vmatpush.msra.mxu0 %v183
    %2683 = vmatpush.msra.mxu0 %v175
    %2684 = vmatpush.msra.mxu0 %v167
    %2685 = vmatpush.msra.mxu0 %v159
    %2686 = vmatpush.msra.mxu0 %v151
    %2687 = vmatpush.msra.mxu0 %v143
    %2688 = vmatpush.msra.mxu0 %v135
    %2689 = vmatpush.msra.mxu0 %v127
    %2690 = vmatpush.msra.mxu0 %v119
    %2691 = vmatpush.msra.mxu0 %v111
    %2692 = vmatpush.msra.mxu0 %v103
    %2693 = vmatpush.msra.mxu0 %v95
    %2694 = vmatmul.f32.gmra.mxu0 %v2667
    %v2695 = vpop.f32.mrf.mxu0
    %v2696 = vadd.f32 0.0, %v2695
    %2697 = vdwg.mxu0
    %2698 = vmatpush.msra.mxu0 %v343
    %2699 = vmatpush.msra.mxu0 %v335
    %2700 = vmatpush.msra.mxu0 %v327
    %2701 = vmatpush.msra.mxu0 %v319
    %2702 = vmatpush.msra.mxu0 %v311
    %2703 = vmatpush.msra.mxu0 %v303
    %2704 = vmatpush.msra.mxu0 %v295
    %2705 = vmatpush.msra.mxu0 %v287
    %2706 = vmatpush.msra.mxu0 %v279
    %2707 = vmatpush.msra.mxu0 %v271
    %2708 = vmatpush.msra.mxu0 %v263
    %2709 = vmatpush.msra.mxu0 %v255
    %2710 = vmatpush.msra.mxu0 %v247
    %2711 = vmatpush.msra.mxu0 %v239
    %2712 = vmatpush.msra.mxu0 %v231
    %2713 = vmatpush.msra.mxu0 %v223
    %2714 = vmatmul.f32.gmra.mxu0 %v2668
    %v2715 = vpop.f32.mrf.mxu0
    %v2716 = vadd.f32 %v2696, %v2715
    %2717 = vdwg.mxu0
    %2718 = vmatpush.msra.mxu0 %v216
    %2719 = vmatpush.msra.mxu0 %v208
    %2720 = vmatpush.msra.mxu0 %v200
    %2721 = vmatpush.msra.mxu0 %v192
    %2722 = vmatpush.msra.mxu0 %v184
    %2723 = vmatpush.msra.mxu0 %v176
    %2724 = vmatpush.msra.mxu0 %v168
    %2725 = vmatpush.msra.mxu0 %v160
    %2726 = vmatpush.msra.mxu0 %v152
    %2727 = vmatpush.msra.mxu0 %v144
    %2728 = vmatpush.msra.mxu0 %v136
    %2729 = vmatpush.msra.mxu0 %v128
    %2730 = vmatpush.msra.mxu0 %v120
    %2731 = vmatpush.msra.mxu0 %v112
    %2732 = vmatpush.msra.mxu0 %v104
    %2733 = vmatpush.msra.mxu0 %v96
    %2734 = vmatmul.f32.gmra.mxu0 %v2667
    %v2735 = vpop.f32.mrf.mxu0
    %v2736 = vadd.f32 0.0, %v2735
    %2737 = vdwg.mxu0
    %2738 = vmatpush.msra.mxu0 %v344
    %2739 = vmatpush.msra.mxu0 %v336
    %2740 = vmatpush.msra.mxu0 %v328
    %2741 = vmatpush.msra.mxu0 %v320
    %2742 = vmatpush.msra.mxu0 %v312
    %2743 = vmatpush.msra.mxu0 %v304
    %2744 = vmatpush.msra.mxu0 %v296
    %2745 = vmatpush.msra.mxu0 %v288
    %2746 = vmatpush.msra.mxu0 %v280
    %2747 = vmatpush.msra.mxu0 %v272
    %2748 = vmatpush.msra.mxu0 %v264
    %2749 = vmatpush.msra.mxu0 %v256
    %2750 = vmatpush.msra.mxu0 %v248
    %2751 = vmatpush.msra.mxu0 %v240
    %2752 = vmatpush.msra.mxu0 %v232
    %2753 = vmatpush.msra.mxu0 %v224
    %2754 = vmatmul.f32.gmra.mxu0 %v2668
    %v2755 = vpop.f32.mrf.mxu0
    %v2756 = vadd.f32 %v2736, %v2755
    %2757 = vdwg.mxu0
    %2758 = vmatpush.msra.mxu0 %v217
    %2759 = vmatpush.msra.mxu0 %v209
    %2760 = vmatpush.msra.mxu0 %v201
    %2761 = vmatpush.msra.mxu0 %v193
    %2762 = vmatpush.msra.mxu0 %v185
    %2763 = vmatpush.msra.mxu0 %v177
    %2764 = vmatpush.msra.mxu0 %v169
    %2765 = vmatpush.msra.mxu0 %v161
    %2766 = vmatpush.msra.mxu0 %v153
    %2767 = vmatpush.msra.mxu0 %v145
    %2768 = vmatpush.msra.mxu0 %v137
    %2769 = vmatpush.msra.mxu0 %v129
    %2770 = vmatpush.msra.mxu0 %v121
    %2771 = vmatpush.msra.mxu0 %v113
    %2772 = vmatpush.msra.mxu0 %v105
    %2773 = vmatpush.msra.mxu0 %v97
    %2774 = vmatmul.f32.gmra.mxu0 %v2667
    %v2775 = vpop.f32.mrf.mxu0
    %v2776 = vadd.f32 0.0, %v2775
    %2777 = vdwg.mxu0
    %2778 = vmatpush.msra.mxu0 %v345
    %2779 = vmatpush.msra.mxu0 %v337
    %2780 = vmatpush.msra.mxu0 %v329
    %2781 = vmatpush.msra.mxu0 %v321
    %2782 = vmatpush.msra.mxu0 %v313
    %2783 = vmatpush.msra.mxu0 %v305
    %2784 = vmatpush.msra.mxu0 %v297
    %2785 = vmatpush.msra.mxu0 %v289
    %2786 = vmatpush.msra.mxu0 %v281
    %2787 = vmatpush.msra.mxu0 %v273
    %2788 = vmatpush.msra.mxu0 %v265
    %2789 = vmatpush.msra.mxu0 %v257
    %2790 = vmatpush.msra.mxu0 %v249
    %2791 = vmatpush.msra.mxu0 %v241
    %2792 = vmatpush.msra.mxu0 %v233
    %2793 = vmatpush.msra.mxu0 %v225
    %2794 = vmatmul.f32.gmra.mxu0 %v2668
    %v2795 = vpop.f32.mrf.mxu0
    %v2796 = vadd.f32 %v2776, %v2795
    %2797 = vdwg.mxu0
    %2798 = vmatpush.msra.mxu0 %v218
    %2799 = vmatpush.msra.mxu0 %v210
    %2800 = vmatpush.msra.mxu0 %v202
    %2801 = vmatpush.msra.mxu0 %v194
    %2802 = vmatpush.msra.mxu0 %v186
    %2803 = vmatpush.msra.mxu0 %v178
    %2804 = vmatpush.msra.mxu0 %v170
    %2805 = vmatpush.msra.mxu0 %v162
    %2806 = vmatpush.msra.mxu0 %v154
    %2807 = vmatpush.msra.mxu0 %v146
    %2808 = vmatpush.msra.mxu0 %v138
    %2809 = vmatpush.msra.mxu0 %v130
    %2810 = vmatpush.msra.mxu0 %v122
    %2811 = vmatpush.msra.mxu0 %v114
    %2812 = vmatpush.msra.mxu0 %v106
    %2813 = vmatpush.msra.mxu0 %v98
    %2814 = vmatmul.f32.gmra.mxu0 %v2667
    %v2815 = vpop.f32.mrf.mxu0
    %v2816 = vadd.f32 0.0, %v2815
    %2817 = vdwg.mxu0
    %2818 = vmatpush.msra.mxu0 %v346
    %2819 = vmatpush.msra.mxu0 %v338
    %2820 = vmatpush.msra.mxu0 %v330
    %2821 = vmatpush.msra.mxu0 %v322
    %2822 = vmatpush.msra.mxu0 %v314
    %2823 = vmatpush.msra.mxu0 %v306
    %2824 = vmatpush.msra.mxu0 %v298
    %2825 = vmatpush.msra.mxu0 %v290
    %2826 = vmatpush.msra.mxu0 %v282
    %2827 = vmatpush.msra.mxu0 %v274
    %2828 = vmatpush.msra.mxu0 %v266
    %2829 = vmatpush.msra.mxu0 %v258
    %2830 = vmatpush.msra.mxu0 %v250
    %2831 = vmatpush.msra.mxu0 %v242
    %2832 = vmatpush.msra.mxu0 %v234
    %2833 = vmatpush.msra.mxu0 %v226
    %2834 = vmatmul.f32.gmra.mxu0 %v2668
    %v2835 = vpop.f32.mrf.mxu0
    %v2836 = vadd.f32 %v2816, %v2835
    %2837 = vdwg.mxu0
    %2838 = vmatpush.msra.mxu0 %v219
    %2839 = vmatpush.msra.mxu0 %v211
    %2840 = vmatpush.msra.mxu0 %v203
    %2841 = vmatpush.msra.mxu0 %v195
    %2842 = vmatpush.msra.mxu0 %v187
    %2843 = vmatpush.msra.mxu0 %v179
    %2844 = vmatpush.msra.mxu0 %v171
    %2845 = vmatpush.msra.mxu0 %v163
    %2846 = vmatpush.msra.mxu0 %v155
    %2847 = vmatpush.msra.mxu0 %v147
    %2848 = vmatpush.msra.mxu0 %v139
    %2849 = vmatpush.msra.mxu0 %v131
    %2850 = vmatpush.msra.mxu0 %v123
    %2851 = vmatpush.msra.mxu0 %v115
    %2852 = vmatpush.msra.mxu0 %v107
    %2853 = vmatpush.msra.mxu0 %v99
    %2854 = vmatmul.f32.gmra.mxu0 %v2667
    %v2855 = vpop.f32.mrf.mxu0
    %v2856 = vadd.f32 0.0, %v2855
    %2857 = vdwg.mxu0
    %2858 = vmatpush.msra.mxu0 %v347
    %2859 = vmatpush.msra.mxu0 %v339
    %2860 = vmatpush.msra.mxu0 %v331
    %2861 = vmatpush.msra.mxu0 %v323
    %2862 = vmatpush.msra.mxu0 %v315
    %2863 = vmatpush.msra.mxu0 %v307
    %2864 = vmatpush.msra.mxu0 %v299
    %2865 = vmatpush.msra.mxu0 %v291
    %2866 = vmatpush.msra.mxu0 %v283
    %2867 = vmatpush.msra.mxu0 %v275
    %2868 = vmatpush.msra.mxu0 %v267
    %2869 = vmatpush.msra.mxu0 %v259
    %2870 = vmatpush.msra.mxu0 %v251
    %2871 = vmatpush.msra.mxu0 %v243
    %2872 = vmatpush.msra.mxu0 %v235
    %2873 = vmatpush.msra.mxu0 %v227
    %2874 = vmatmul.f32.gmra.mxu0 %v2668
    %v2875 = vpop.f32.mrf.mxu0
    %v2876 = vadd.f32 %v2856, %v2875
    %2877 = vdwg.mxu0
    %2878 = vmatpush.msra.mxu0 %v220
    %2879 = vmatpush.msra.mxu0 %v212
    %2880 = vmatpush.msra.mxu0 %v204
    %2881 = vmatpush.msra.mxu0 %v196
    %2882 = vmatpush.msra.mxu0 %v188
    %2883 = vmatpush.msra.mxu0 %v180
    %2884 = vmatpush.msra.mxu0 %v172
    %2885 = vmatpush.msra.mxu0 %v164
    %2886 = vmatpush.msra.mxu0 %v156
    %2887 = vmatpush.msra.mxu0 %v148
    %2888 = vmatpush.msra.mxu0 %v140
    %2889 = vmatpush.msra.mxu0 %v132
    %2890 = vmatpush.msra.mxu0 %v124
    %2891 = vmatpush.msra.mxu0 %v116
    %2892 = vmatpush.msra.mxu0 %v108
    %2893 = vmatpush.msra.mxu0 %v100
    %2894 = vmatmul.f32.gmra.mxu0 %v2667
    %v2895 = vpop.f32.mrf.mxu0
    %v2896 = vadd.f32 0.0, %v2895
    %2897 = vdwg.mxu0
    %2898 = vmatpush.msra.mxu0 %v348
    %2899 = vmatpush.msra.mxu0 %v340
    %2900 = vmatpush.msra.mxu0 %v332
    %2901 = vmatpush.msra.mxu0 %v324
    %2902 = vmatpush.msra.mxu0 %v316
    %2903 = vmatpush.msra.mxu0 %v308
    %2904 = vmatpush.msra.mxu0 %v300
    %2905 = vmatpush.msra.mxu0 %v292
    %2906 = vmatpush.msra.mxu0 %v284
    %2907 = vmatpush.msra.mxu0 %v276
    %2908 = vmatpush.msra.mxu0 %v268
    %2909 = vmatpush.msra.mxu0 %v260
    %2910 = vmatpush.msra.mxu0 %v252
    %2911 = vmatpush.msra.mxu0 %v244
    %2912 = vmatpush.msra.mxu0 %v236
    %2913 = vmatpush.msra.mxu0 %v228
    %2914 = vmatmul.f32.gmra.mxu0 %v2668
    %v2915 = vpop.f32.mrf.mxu0
    %v2916 = vadd.f32 %v2896, %v2915
    %2917 = vdwg.mxu0
    %2918 = vmatpush.msra.mxu0 %v221
    %2919 = vmatpush.msra.mxu0 %v213
    %2920 = vmatpush.msra.mxu0 %v205
    %2921 = vmatpush.msra.mxu0 %v197
    %2922 = vmatpush.msra.mxu0 %v189
    %2923 = vmatpush.msra.mxu0 %v181
    %2924 = vmatpush.msra.mxu0 %v173
    %2925 = vmatpush.msra.mxu0 %v165
    %2926 = vmatpush.msra.mxu0 %v157
    %2927 = vmatpush.msra.mxu0 %v149
    %2928 = vmatpush.msra.mxu0 %v141
    %2929 = vmatpush.msra.mxu0 %v133
    %2930 = vmatpush.msra.mxu0 %v125
    %2931 = vmatpush.msra.mxu0 %v117
    %2932 = vmatpush.msra.mxu0 %v109
    %2933 = vmatpush.msra.mxu0 %v101
    %2934 = vmatmul.f32.gmra.mxu0 %v2667
    %v2935 = vpop.f32.mrf.mxu0
    %v2936 = vadd.f32 0.0, %v2935
    %2937 = vdwg.mxu0
    %2938 = vmatpush.msra.mxu0 %v349
    %2939 = vmatpush.msra.mxu0 %v341
    %2940 = vmatpush.msra.mxu0 %v333
    %2941 = vmatpush.msra.mxu0 %v325
    %2942 = vmatpush.msra.mxu0 %v317
    %2943 = vmatpush.msra.mxu0 %v309
    %2944 = vmatpush.msra.mxu0 %v301
    %2945 = vmatpush.msra.mxu0 %v293
    %2946 = vmatpush.msra.mxu0 %v285
    %2947 = vmatpush.msra.mxu0 %v277
    %2948 = vmatpush.msra.mxu0 %v269
    %2949 = vmatpush.msra.mxu0 %v261
    %2950 = vmatpush.msra.mxu0 %v253
    %2951 = vmatpush.msra.mxu0 %v245
    %2952 = vmatpush.msra.mxu0 %v237
    %2953 = vmatpush.msra.mxu0 %v229
    %2954 = vmatmul.f32.gmra.mxu0 %v2668
    %v2955 = vpop.f32.mrf.mxu0
    %v2956 = vadd.f32 %v2936, %v2955
    %2957 = vdwg.mxu0
    %2958 = vmatpush.msra.mxu0 %v222
    %2959 = vmatpush.msra.mxu0 %v214
    %2960 = vmatpush.msra.mxu0 %v206
    %2961 = vmatpush.msra.mxu0 %v198
    %2962 = vmatpush.msra.mxu0 %v190
    %2963 = vmatpush.msra.mxu0 %v182
    %2964 = vmatpush.msra.mxu0 %v174
    %2965 = vmatpush.msra.mxu0 %v166
    %2966 = vmatpush.msra.mxu0 %v158
    %2967 = vmatpush.msra.mxu0 %v150
    %2968 = vmatpush.msra.mxu0 %v142
    %2969 = vmatpush.msra.mxu0 %v134
    %2970 = vmatpush.msra.mxu0 %v126
    %2971 = vmatpush.msra.mxu0 %v118
    %2972 = vmatpush.msra.mxu0 %v110
    %2973 = vmatpush.msra.mxu0 %v102
    %2974 = vmatmul.f32.gmra.mxu0 %v2667
    %v2975 = vpop.f32.mrf.mxu0
    %v2976 = vadd.f32 0.0, %v2975
    %2977 = vdwg.mxu0
    %2978 = vmatpush.msra.mxu0 %v350
    %2979 = vmatpush.msra.mxu0 %v342
    %2980 = vmatpush.msra.mxu0 %v334
    %2981 = vmatpush.msra.mxu0 %v326
    %2982 = vmatpush.msra.mxu0 %v318
    %2983 = vmatpush.msra.mxu0 %v310
    %2984 = vmatpush.msra.mxu0 %v302
    %2985 = vmatpush.msra.mxu0 %v294
    %2986 = vmatpush.msra.mxu0 %v286
    %2987 = vmatpush.msra.mxu0 %v278
    %2988 = vmatpush.msra.mxu0 %v270
    %2989 = vmatpush.msra.mxu0 %v262
    %2990 = vmatpush.msra.mxu0 %v254
    %2991 = vmatpush.msra.mxu0 %v246
    %2992 = vmatpush.msra.mxu0 %v238
    %2993 = vmatpush.msra.mxu0 %v230
    %2994 = vmatmul.f32.gmra.mxu0 %v2668
    %v2995 = vpop.f32.mrf.mxu0
    %v2996 = vadd.f32 %v2976, %v2995
    %2997 = vdwg.mxu0
    %v2998 = vadd.f32 %v2670, %v2716
    %v2999 = vadd.f32 %v2671, %v2756
    %v3000 = vadd.f32 %v2672, %v2796
    %v3001 = vadd.f32 %v2673, %v2836
    %v3002 = vadd.f32 %v2674, %v2876
    %v3003 = vadd.f32 %v2675, %v2916
    %v3004 = vadd.f32 %v2676, %v2956
    %v3005 = vadd.f32 %v2677, %v2996
    %v3006 = vxor.u32 %v2998, 2147483648
    %v3007 = vxor.u32 %v2999, 2147483648
    %v3008 = vmul.f32 %v3006, 1.442695
    %v3009 = vpow.pop %v3008
    %v3010 = vmul.f32 %v3007, 1.442695
    %v3011 = vpow.pop %v3010
    %v3012 = vadd.f32 %v3009, 1.0
    %v3013 = vadd.f32 %v3011, 1.0
    %v3014 = vrcp.pop %v3012
    %v3015 = vmul.f32 %v3012, %v3014
    %v3016 = vsub.f32 1.0, %v3015
    %v3017 = vmul.f32 %v3014, %v3016
    %v3018 = vadd.f32 %v3014, %v3017
    %vm3019 = vweird.f32 %v3012
    %vm3020 = vweird.f32 %v3014
    %vm3021 = vmor %vm3019, %vm3020
    %v3022 = vsel %vm3021, %v3014, %v3018
    %v3023 = vand.u32 2147483647, %v3012
    %vm3024 = vcmp.eq.f32.partialorder %v3023, 8.507059e+37
    %v3025 = vand.u32 %v3012, 2147483648
    %v3026 = vor.u32 1.1754944e-38, %v3025
    %v3027 = vsel %vm3024, %v3026, %v3022
    %v3028 = vmul.f32 1.0, %v3027
    %v3029 = vrcp.pop %v3013
    %v3030 = vmul.f32 %v3013, %v3029
    %v3031 = vsub.f32 1.0, %v3030
    %v3032 = vmul.f32 %v3029, %v3031
    %v3033 = vadd.f32 %v3029, %v3032
    %vm3034 = vweird.f32 %v3013
    %vm3035 = vweird.f32 %v3029
    %vm3036 = vmor %vm3034, %vm3035
    %v3037 = vsel %vm3036, %v3029, %v3033
    %v3038 = vand.u32 2147483647, %v3013
    %vm3039 = vcmp.eq.f32.partialorder %v3038, 8.507059e+37
    %v3040 = vand.u32 %v3013, 2147483648
    %v3041 = vor.u32 1.1754944e-38, %v3040
    %v3042 = vsel %vm3039, %v3041, %v3037
    %v3043 = vmul.f32 1.0, %v3042
    %v3044 = vxor.u32 %v3000, 2147483648
    %v3045 = vxor.u32 %v3001, 2147483648
    %v3046 = vmul.f32 %v3044, 1.442695
    %v3047 = vpow.pop %v3046
    %v3048 = vmul.f32 %v3045, 1.442695
    %v3049 = vpow.pop %v3048
    %v3050 = vadd.f32 %v3047, 1.0
    %v3051 = vadd.f32 %v3049, 1.0
    %v3052 = vrcp.pop %v3050
    %v3053 = vmul.f32 %v3050, %v3052
    %v3054 = vsub.f32 1.0, %v3053
    %v3055 = vmul.f32 %v3052, %v3054
    %v3056 = vadd.f32 %v3052, %v3055
    %vm3057 = vweird.f32 %v3050
    %vm3058 = vweird.f32 %v3052
    %vm3059 = vmor %vm3057, %vm3058
    %v3060 = vsel %vm3059, %v3052, %v3056
    %v3061 = vand.u32 2147483647, %v3050
    %vm3062 = vcmp.eq.f32.partialorder %v3061, 8.507059e+37
    %v3063 = vand.u32 %v3050, 2147483648
    %v3064 = vor.u32 1.1754944e-38, %v3063
    %v3065 = vsel %vm3062, %v3064, %v3060
    %v3066 = vmul.f32 1.0, %v3065
    %v3067 = vrcp.pop %v3051
    %v3068 = vmul.f32 %v3051, %v3067
    %v3069 = vsub.f32 1.0, %v3068
    %v3070 = vmul.f32 %v3067, %v3069
    %v3071 = vadd.f32 %v3067, %v3070
    %vm3072 = vweird.f32 %v3051
    %vm3073 = vweird.f32 %v3067
    %vm3074 = vmor %vm3072, %vm3073
    %v3075 = vsel %vm3074, %v3067, %v3071
    %v3076 = vand.u32 2147483647, %v3051
    %vm3077 = vcmp.eq.f32.partialorder %v3076, 8.507059e+37
    %v3078 = vand.u32 %v3051, 2147483648
    %v3079 = vor.u32 1.1754944e-38, %v3078
    %v3080 = vsel %vm3077, %v3079, %v3075
    %v3081 = vmul.f32 1.0, %v3080
    %v3082 = vtanh.pop %v3002
    %v3083 = vtanh.pop %v3003
    %v3084 = vxor.u32 %v3004, 2147483648
    %v3085 = vxor.u32 %v3005, 2147483648
    %v3086 = vmul.f32 %v3084, 1.442695
    %v3087 = vpow.pop %v3086
    %v3088 = vmul.f32 %v3085, 1.442695
    %v3089 = vpow.pop %v3088
    %v3090 = vadd.f32 %v3087, 1.0
    %v3091 = vadd.f32 %v3089, 1.0
    %v3092 = vrcp.pop %v3090
    %v3093 = vmul.f32 %v3090, %v3092
    %v3094 = vsub.f32 1.0, %v3093
    %v3095 = vmul.f32 %v3092, %v3094
    %v3096 = vadd.f32 %v3092, %v3095
    %vm3097 = vweird.f32 %v3090
    %vm3098 = vweird.f32 %v3092
    %vm3099 = vmor %vm3097, %vm3098
    %v3100 = vsel %vm3099, %v3092, %v3096
    %v3101 = vand.u32 2147483647, %v3090
    %vm3102 = vcmp.eq.f32.partialorder %v3101, 8.507059e+37
    %v3103 = vand.u32 %v3090, 2147483648
    %v3104 = vor.u32 1.1754944e-38, %v3103
    %v3105 = vsel %vm3102, %v3104, %v3100
    %v3106 = vmul.f32 1.0, %v3105
    %v3107 = vrcp.pop %v3091
    %v3108 = vmul.f32 %v3091, %v3107
    %v3109 = vsub.f32 1.0, %v3108
    %v3110 = vmul.f32 %v3107, %v3109
    %v3111 = vadd.f32 %v3107, %v3110
    %vm3112 = vweird.f32 %v3091
    %vm3113 = vweird.f32 %v3107
    %vm3114 = vmor %vm3112, %vm3113
    %v3115 = vsel %vm3114, %v3107, %v3111
    %v3116 = vand.u32 2147483647, %v3091
    %vm3117 = vcmp.eq.f32.partialorder %v3116, 8.507059e+37
    %v3118 = vand.u32 %v3091, 2147483648
    %v3119 = vor.u32 1.1754944e-38, %v3118
    %v3120 = vsel %vm3117, %v3119, %v3115
    %v3121 = vmul.f32 1.0, %v3120
    %v3122 = vmul.f32 %v3066, %v2663
    %v3123 = vmul.f32 %v3081, %v2664
    %v3124 = vmul.f32 %v3028, %v3082
    %v3125 = vmul.f32 %v3043, %v3083
    %v3126 = vadd.f32 %v3122, %v3124
    %v3127 = vadd.f32 %v3123, %v3125
    %v3128 = vtanh.pop %v3126
    %v3129 = vtanh.pop %v3127
    %v3130 = vmul.f32 %v3106, %v3128
    %v3131 = vmul.f32 %v3121, %v3129
    %s3132 = scalar_lea.vmem [#allocation4], 384
    %v3133 = vld [vmem:[%s3132] sm:$0xff]
    %v3134 = vld [vmem:[%s3132 + $0x8] sm:$0xff]
    %v3135 = vld [vmem:[%s3132 + $0x10] sm:$0xff]
    %v3136 = vld [vmem:[%s3132 + $0x18] sm:$0xff]
    %v3137 = vld [vmem:[%s3132 + $0x20] sm:$0xff]
    %v3138 = vld [vmem:[%s3132 + $0x28] sm:$0xff]
    %v3139 = vld [vmem:[%s3132 + $0x30] sm:$0xff]
    %v3140 = vld [vmem:[%s3132 + $0x38] sm:$0xff]
    %3141 = vmatpush.msra.mxu0 %v215
    %3142 = vmatpush.msra.mxu0 %v207
    %3143 = vmatpush.msra.mxu0 %v199
    %3144 = vmatpush.msra.mxu0 %v191
    %3145 = vmatpush.msra.mxu0 %v183
    %3146 = vmatpush.msra.mxu0 %v175
    %3147 = vmatpush.msra.mxu0 %v167
    %3148 = vmatpush.msra.mxu0 %v159
    %3149 = vmatpush.msra.mxu0 %v151
    %3150 = vmatpush.msra.mxu0 %v143
    %3151 = vmatpush.msra.mxu0 %v135
    %3152 = vmatpush.msra.mxu0 %v127
    %3153 = vmatpush.msra.mxu0 %v119
    %3154 = vmatpush.msra.mxu0 %v111
    %3155 = vmatpush.msra.mxu0 %v103
    %3156 = vmatpush.msra.mxu0 %v95
    %3157 = vmatmul.f32.gmra.mxu0 %v3130
    %v3158 = vpop.f32.mrf.mxu0
    %v3159 = vadd.f32 0.0, %v3158
    %3160 = vdwg.mxu0
    %3161 = vmatpush.msra.mxu0 %v343
    %3162 = vmatpush.msra.mxu0 %v335
    %3163 = vmatpush.msra.mxu0 %v327
    %3164 = vmatpush.msra.mxu0 %v319
    %3165 = vmatpush.msra.mxu0 %v311
    %3166 = vmatpush.msra.mxu0 %v303
    %3167 = vmatpush.msra.mxu0 %v295
    %3168 = vmatpush.msra.mxu0 %v287
    %3169 = vmatpush.msra.mxu0 %v279
    %3170 = vmatpush.msra.mxu0 %v271
    %3171 = vmatpush.msra.mxu0 %v263
    %3172 = vmatpush.msra.mxu0 %v255
    %3173 = vmatpush.msra.mxu0 %v247
    %3174 = vmatpush.msra.mxu0 %v239
    %3175 = vmatpush.msra.mxu0 %v231
    %3176 = vmatpush.msra.mxu0 %v223
    %3177 = vmatmul.f32.gmra.mxu0 %v3131
    %v3178 = vpop.f32.mrf.mxu0
    %v3179 = vadd.f32 %v3159, %v3178
    %3180 = vdwg.mxu0
    %3181 = vmatpush.msra.mxu0 %v216
    %3182 = vmatpush.msra.mxu0 %v208
    %3183 = vmatpush.msra.mxu0 %v200
    %3184 = vmatpush.msra.mxu0 %v192
    %3185 = vmatpush.msra.mxu0 %v184
    %3186 = vmatpush.msra.mxu0 %v176
    %3187 = vmatpush.msra.mxu0 %v168
    %3188 = vmatpush.msra.mxu0 %v160
    %3189 = vmatpush.msra.mxu0 %v152
    %3190 = vmatpush.msra.mxu0 %v144
    %3191 = vmatpush.msra.mxu0 %v136
    %3192 = vmatpush.msra.mxu0 %v128
    %3193 = vmatpush.msra.mxu0 %v120
    %3194 = vmatpush.msra.mxu0 %v112
    %3195 = vmatpush.msra.mxu0 %v104
    %3196 = vmatpush.msra.mxu0 %v96
    %3197 = vmatmul.f32.gmra.mxu0 %v3130
    %v3198 = vpop.f32.mrf.mxu0
    %v3199 = vadd.f32 0.0, %v3198
    %3200 = vdwg.mxu0
    %3201 = vmatpush.msra.mxu0 %v344
    %3202 = vmatpush.msra.mxu0 %v336
    %3203 = vmatpush.msra.mxu0 %v328
    %3204 = vmatpush.msra.mxu0 %v320
    %3205 = vmatpush.msra.mxu0 %v312
    %3206 = vmatpush.msra.mxu0 %v304
    %3207 = vmatpush.msra.mxu0 %v296
    %3208 = vmatpush.msra.mxu0 %v288
    %3209 = vmatpush.msra.mxu0 %v280
    %3210 = vmatpush.msra.mxu0 %v272
    %3211 = vmatpush.msra.mxu0 %v264
    %3212 = vmatpush.msra.mxu0 %v256
    %3213 = vmatpush.msra.mxu0 %v248
    %3214 = vmatpush.msra.mxu0 %v240
    %3215 = vmatpush.msra.mxu0 %v232
    %3216 = vmatpush.msra.mxu0 %v224
    %3217 = vmatmul.f32.gmra.mxu0 %v3131
    %v3218 = vpop.f32.mrf.mxu0
    %v3219 = vadd.f32 %v3199, %v3218
    %3220 = vdwg.mxu0
    %3221 = vmatpush.msra.mxu0 %v217
    %3222 = vmatpush.msra.mxu0 %v209
    %3223 = vmatpush.msra.mxu0 %v201
    %3224 = vmatpush.msra.mxu0 %v193
    %3225 = vmatpush.msra.mxu0 %v185
    %3226 = vmatpush.msra.mxu0 %v177
    %3227 = vmatpush.msra.mxu0 %v169
    %3228 = vmatpush.msra.mxu0 %v161
    %3229 = vmatpush.msra.mxu0 %v153
    %3230 = vmatpush.msra.mxu0 %v145
    %3231 = vmatpush.msra.mxu0 %v137
    %3232 = vmatpush.msra.mxu0 %v129
    %3233 = vmatpush.msra.mxu0 %v121
    %3234 = vmatpush.msra.mxu0 %v113
    %3235 = vmatpush.msra.mxu0 %v105
    %3236 = vmatpush.msra.mxu0 %v97
    %3237 = vmatmul.f32.gmra.mxu0 %v3130
    %v3238 = vpop.f32.mrf.mxu0
    %v3239 = vadd.f32 0.0, %v3238
    %3240 = vdwg.mxu0
    %3241 = vmatpush.msra.mxu0 %v345
    %3242 = vmatpush.msra.mxu0 %v337
    %3243 = vmatpush.msra.mxu0 %v329
    %3244 = vmatpush.msra.mxu0 %v321
    %3245 = vmatpush.msra.mxu0 %v313
    %3246 = vmatpush.msra.mxu0 %v305
    %3247 = vmatpush.msra.mxu0 %v297
    %3248 = vmatpush.msra.mxu0 %v289
    %3249 = vmatpush.msra.mxu0 %v281
    %3250 = vmatpush.msra.mxu0 %v273
    %3251 = vmatpush.msra.mxu0 %v265
    %3252 = vmatpush.msra.mxu0 %v257
    %3253 = vmatpush.msra.mxu0 %v249
    %3254 = vmatpush.msra.mxu0 %v241
    %3255 = vmatpush.msra.mxu0 %v233
    %3256 = vmatpush.msra.mxu0 %v225
    %3257 = vmatmul.f32.gmra.mxu0 %v3131
    %v3258 = vpop.f32.mrf.mxu0
    %v3259 = vadd.f32 %v3239, %v3258
    %3260 = vdwg.mxu0
    %3261 = vmatpush.msra.mxu0 %v218
    %3262 = vmatpush.msra.mxu0 %v210
    %3263 = vmatpush.msra.mxu0 %v202
    %3264 = vmatpush.msra.mxu0 %v194
    %3265 = vmatpush.msra.mxu0 %v186
    %3266 = vmatpush.msra.mxu0 %v178
    %3267 = vmatpush.msra.mxu0 %v170
    %3268 = vmatpush.msra.mxu0 %v162
    %3269 = vmatpush.msra.mxu0 %v154
    %3270 = vmatpush.msra.mxu0 %v146
    %3271 = vmatpush.msra.mxu0 %v138
    %3272 = vmatpush.msra.mxu0 %v130
    %3273 = vmatpush.msra.mxu0 %v122
    %3274 = vmatpush.msra.mxu0 %v114
    %3275 = vmatpush.msra.mxu0 %v106
    %3276 = vmatpush.msra.mxu0 %v98
    %3277 = vmatmul.f32.gmra.mxu0 %v3130
    %v3278 = vpop.f32.mrf.mxu0
    %v3279 = vadd.f32 0.0, %v3278
    %3280 = vdwg.mxu0
    %3281 = vmatpush.msra.mxu0 %v346
    %3282 = vmatpush.msra.mxu0 %v338
    %3283 = vmatpush.msra.mxu0 %v330
    %3284 = vmatpush.msra.mxu0 %v322
    %3285 = vmatpush.msra.mxu0 %v314
    %3286 = vmatpush.msra.mxu0 %v306
    %3287 = vmatpush.msra.mxu0 %v298
    %3288 = vmatpush.msra.mxu0 %v290
    %3289 = vmatpush.msra.mxu0 %v282
    %3290 = vmatpush.msra.mxu0 %v274
    %3291 = vmatpush.msra.mxu0 %v266
    %3292 = vmatpush.msra.mxu0 %v258
    %3293 = vmatpush.msra.mxu0 %v250
    %3294 = vmatpush.msra.mxu0 %v242
    %3295 = vmatpush.msra.mxu0 %v234
    %3296 = vmatpush.msra.mxu0 %v226
    %3297 = vmatmul.f32.gmra.mxu0 %v3131
    %v3298 = vpop.f32.mrf.mxu0
    %v3299 = vadd.f32 %v3279, %v3298
    %3300 = vdwg.mxu0
    %3301 = vmatpush.msra.mxu0 %v219
    %3302 = vmatpush.msra.mxu0 %v211
    %3303 = vmatpush.msra.mxu0 %v203
    %3304 = vmatpush.msra.mxu0 %v195
    %3305 = vmatpush.msra.mxu0 %v187
    %3306 = vmatpush.msra.mxu0 %v179
    %3307 = vmatpush.msra.mxu0 %v171
    %3308 = vmatpush.msra.mxu0 %v163
    %3309 = vmatpush.msra.mxu0 %v155
    %3310 = vmatpush.msra.mxu0 %v147
    %3311 = vmatpush.msra.mxu0 %v139
    %3312 = vmatpush.msra.mxu0 %v131
    %3313 = vmatpush.msra.mxu0 %v123
    %3314 = vmatpush.msra.mxu0 %v115
    %3315 = vmatpush.msra.mxu0 %v107
    %3316 = vmatpush.msra.mxu0 %v99
    %3317 = vmatmul.f32.gmra.mxu0 %v3130
    %v3318 = vpop.f32.mrf.mxu0
    %v3319 = vadd.f32 0.0, %v3318
    %3320 = vdwg.mxu0
    %3321 = vmatpush.msra.mxu0 %v347
    %3322 = vmatpush.msra.mxu0 %v339
    %3323 = vmatpush.msra.mxu0 %v331
    %3324 = vmatpush.msra.mxu0 %v323
    %3325 = vmatpush.msra.mxu0 %v315
    %3326 = vmatpush.msra.mxu0 %v307
    %3327 = vmatpush.msra.mxu0 %v299
    %3328 = vmatpush.msra.mxu0 %v291
    %3329 = vmatpush.msra.mxu0 %v283
    %3330 = vmatpush.msra.mxu0 %v275
    %3331 = vmatpush.msra.mxu0 %v267
    %3332 = vmatpush.msra.mxu0 %v259
    %3333 = vmatpush.msra.mxu0 %v251
    %3334 = vmatpush.msra.mxu0 %v243
    %3335 = vmatpush.msra.mxu0 %v235
    %3336 = vmatpush.msra.mxu0 %v227
    %3337 = vmatmul.f32.gmra.mxu0 %v3131
    %v3338 = vpop.f32.mrf.mxu0
    %v3339 = vadd.f32 %v3319, %v3338
    %3340 = vdwg.mxu0
    %3341 = vmatpush.msra.mxu0 %v220
    %3342 = vmatpush.msra.mxu0 %v212
    %3343 = vmatpush.msra.mxu0 %v204
    %3344 = vmatpush.msra.mxu0 %v196
    %3345 = vmatpush.msra.mxu0 %v188
    %3346 = vmatpush.msra.mxu0 %v180
    %3347 = vmatpush.msra.mxu0 %v172
    %3348 = vmatpush.msra.mxu0 %v164
    %3349 = vmatpush.msra.mxu0 %v156
    %3350 = vmatpush.msra.mxu0 %v148
    %3351 = vmatpush.msra.mxu0 %v140
    %3352 = vmatpush.msra.mxu0 %v132
    %3353 = vmatpush.msra.mxu0 %v124
    %3354 = vmatpush.msra.mxu0 %v116
    %3355 = vmatpush.msra.mxu0 %v108
    %3356 = vmatpush.msra.mxu0 %v100
    %3357 = vmatmul.f32.gmra.mxu0 %v3130
    %v3358 = vpop.f32.mrf.mxu0
    %v3359 = vadd.f32 0.0, %v3358
    %3360 = vdwg.mxu0
    %3361 = vmatpush.msra.mxu0 %v348
    %3362 = vmatpush.msra.mxu0 %v340
    %3363 = vmatpush.msra.mxu0 %v332
    %3364 = vmatpush.msra.mxu0 %v324
    %3365 = vmatpush.msra.mxu0 %v316
    %3366 = vmatpush.msra.mxu0 %v308
    %3367 = vmatpush.msra.mxu0 %v300
    %3368 = vmatpush.msra.mxu0 %v292
    %3369 = vmatpush.msra.mxu0 %v284
    %3370 = vmatpush.msra.mxu0 %v276
    %3371 = vmatpush.msra.mxu0 %v268
    %3372 = vmatpush.msra.mxu0 %v260
    %3373 = vmatpush.msra.mxu0 %v252
    %3374 = vmatpush.msra.mxu0 %v244
    %3375 = vmatpush.msra.mxu0 %v236
    %3376 = vmatpush.msra.mxu0 %v228
    %3377 = vmatmul.f32.gmra.mxu0 %v3131
    %v3378 = vpop.f32.mrf.mxu0
    %v3379 = vadd.f32 %v3359, %v3378
    %3380 = vdwg.mxu0
    %3381 = vmatpush.msra.mxu0 %v221
    %3382 = vmatpush.msra.mxu0 %v213
    %3383 = vmatpush.msra.mxu0 %v205
    %3384 = vmatpush.msra.mxu0 %v197
    %3385 = vmatpush.msra.mxu0 %v189
    %3386 = vmatpush.msra.mxu0 %v181
    %3387 = vmatpush.msra.mxu0 %v173
    %3388 = vmatpush.msra.mxu0 %v165
    %3389 = vmatpush.msra.mxu0 %v157
    %3390 = vmatpush.msra.mxu0 %v149
    %3391 = vmatpush.msra.mxu0 %v141
    %3392 = vmatpush.msra.mxu0 %v133
    %3393 = vmatpush.msra.mxu0 %v125
    %3394 = vmatpush.msra.mxu0 %v117
    %3395 = vmatpush.msra.mxu0 %v109
    %3396 = vmatpush.msra.mxu0 %v101
    %3397 = vmatmul.f32.gmra.mxu0 %v3130
    %v3398 = vpop.f32.mrf.mxu0
    %v3399 = vadd.f32 0.0, %v3398
    %3400 = vdwg.mxu0
    %3401 = vmatpush.msra.mxu0 %v349
    %3402 = vmatpush.msra.mxu0 %v341
    %3403 = vmatpush.msra.mxu0 %v333
    %3404 = vmatpush.msra.mxu0 %v325
    %3405 = vmatpush.msra.mxu0 %v317
    %3406 = vmatpush.msra.mxu0 %v309
    %3407 = vmatpush.msra.mxu0 %v301
    %3408 = vmatpush.msra.mxu0 %v293
    %3409 = vmatpush.msra.mxu0 %v285
    %3410 = vmatpush.msra.mxu0 %v277
    %3411 = vmatpush.msra.mxu0 %v269
    %3412 = vmatpush.msra.mxu0 %v261
    %3413 = vmatpush.msra.mxu0 %v253
    %3414 = vmatpush.msra.mxu0 %v245
    %3415 = vmatpush.msra.mxu0 %v237
    %3416 = vmatpush.msra.mxu0 %v229
    %3417 = vmatmul.f32.gmra.mxu0 %v3131
    %v3418 = vpop.f32.mrf.mxu0
    %v3419 = vadd.f32 %v3399, %v3418
    %3420 = vdwg.mxu0
    %3421 = vmatpush.msra.mxu0 %v222
    %3422 = vmatpush.msra.mxu0 %v214
    %3423 = vmatpush.msra.mxu0 %v206
    %3424 = vmatpush.msra.mxu0 %v198
    %3425 = vmatpush.msra.mxu0 %v190
    %3426 = vmatpush.msra.mxu0 %v182
    %3427 = vmatpush.msra.mxu0 %v174
    %3428 = vmatpush.msra.mxu0 %v166
    %3429 = vmatpush.msra.mxu0 %v158
    %3430 = vmatpush.msra.mxu0 %v150
    %3431 = vmatpush.msra.mxu0 %v142
    %3432 = vmatpush.msra.mxu0 %v134
    %3433 = vmatpush.msra.mxu0 %v126
    %3434 = vmatpush.msra.mxu0 %v118
    %3435 = vmatpush.msra.mxu0 %v110
    %3436 = vmatpush.msra.mxu0 %v102
    %3437 = vmatmul.f32.gmra.mxu0 %v3130
    %v3438 = vpop.f32.mrf.mxu0
    %v3439 = vadd.f32 0.0, %v3438
    %3440 = vdwg.mxu0
    %3441 = vmatpush.msra.mxu0 %v350
    %3442 = vmatpush.msra.mxu0 %v342
    %3443 = vmatpush.msra.mxu0 %v334
    %3444 = vmatpush.msra.mxu0 %v326
    %3445 = vmatpush.msra.mxu0 %v318
    %3446 = vmatpush.msra.mxu0 %v310
    %3447 = vmatpush.msra.mxu0 %v302
    %3448 = vmatpush.msra.mxu0 %v294
    %3449 = vmatpush.msra.mxu0 %v286
    %3450 = vmatpush.msra.mxu0 %v278
    %3451 = vmatpush.msra.mxu0 %v270
    %3452 = vmatpush.msra.mxu0 %v262
    %3453 = vmatpush.msra.mxu0 %v254
    %3454 = vmatpush.msra.mxu0 %v246
    %3455 = vmatpush.msra.mxu0 %v238
    %3456 = vmatpush.msra.mxu0 %v230
    %3457 = vmatmul.f32.gmra.mxu0 %v3131
    %v3458 = vpop.f32.mrf.mxu0
    %v3459 = vadd.f32 %v3439, %v3458
    %3460 = vdwg.mxu0
    %v3461 = vadd.f32 %v3133, %v3179
    %v3462 = vadd.f32 %v3134, %v3219
    %v3463 = vadd.f32 %v3135, %v3259
    %v3464 = vadd.f32 %v3136, %v3299
    %v3465 = vadd.f32 %v3137, %v3339
    %v3466 = vadd.f32 %v3138, %v3379
    %v3467 = vadd.f32 %v3139, %v3419
    %v3468 = vadd.f32 %v3140, %v3459
    %v3469 = vxor.u32 %v3461, 2147483648
    %v3470 = vxor.u32 %v3462, 2147483648
    %v3471 = vmul.f32 %v3469, 1.442695
    %v3472 = vpow.pop %v3471
    %v3473 = vmul.f32 %v3470, 1.442695
    %v3474 = vpow.pop %v3473
    %v3475 = vadd.f32 %v3472, 1.0
    %v3476 = vadd.f32 %v3474, 1.0
    %v3477 = vrcp.pop %v3475
    %v3478 = vmul.f32 %v3475, %v3477
    %v3479 = vsub.f32 1.0, %v3478
    %v3480 = vmul.f32 %v3477, %v3479
    %v3481 = vadd.f32 %v3477, %v3480
    %vm3482 = vweird.f32 %v3475
    %vm3483 = vweird.f32 %v3477
    %vm3484 = vmor %vm3482, %vm3483
    %v3485 = vsel %vm3484, %v3477, %v3481
    %v3486 = vand.u32 2147483647, %v3475
    %vm3487 = vcmp.eq.f32.partialorder %v3486, 8.507059e+37
    %v3488 = vand.u32 %v3475, 2147483648
    %v3489 = vor.u32 1.1754944e-38, %v3488
    %v3490 = vsel %vm3487, %v3489, %v3485
    %v3491 = vmul.f32 1.0, %v3490
    %v3492 = vrcp.pop %v3476
    %v3493 = vmul.f32 %v3476, %v3492
    %v3494 = vsub.f32 1.0, %v3493
    %v3495 = vmul.f32 %v3492, %v3494
    %v3496 = vadd.f32 %v3492, %v3495
    %vm3497 = vweird.f32 %v3476
    %vm3498 = vweird.f32 %v3492
    %vm3499 = vmor %vm3497, %vm3498
    %v3500 = vsel %vm3499, %v3492, %v3496
    %v3501 = vand.u32 2147483647, %v3476
    %vm3502 = vcmp.eq.f32.partialorder %v3501, 8.507059e+37
    %v3503 = vand.u32 %v3476, 2147483648
    %v3504 = vor.u32 1.1754944e-38, %v3503
    %v3505 = vsel %vm3502, %v3504, %v3500
    %v3506 = vmul.f32 1.0, %v3505
    %v3507 = vxor.u32 %v3463, 2147483648
    %v3508 = vxor.u32 %v3464, 2147483648
    %v3509 = vmul.f32 %v3507, 1.442695
    %v3510 = vpow.pop %v3509
    %v3511 = vmul.f32 %v3508, 1.442695
    %v3512 = vpow.pop %v3511
    %v3513 = vadd.f32 %v3510, 1.0
    %v3514 = vadd.f32 %v3512, 1.0
    %v3515 = vrcp.pop %v3513
    %v3516 = vmul.f32 %v3513, %v3515
    %v3517 = vsub.f32 1.0, %v3516
    %v3518 = vmul.f32 %v3515, %v3517
    %v3519 = vadd.f32 %v3515, %v3518
    %vm3520 = vweird.f32 %v3513
    %vm3521 = vweird.f32 %v3515
    %vm3522 = vmor %vm3520, %vm3521
    %v3523 = vsel %vm3522, %v3515, %v3519
    %v3524 = vand.u32 2147483647, %v3513
    %vm3525 = vcmp.eq.f32.partialorder %v3524, 8.507059e+37
    %v3526 = vand.u32 %v3513, 2147483648
    %v3527 = vor.u32 1.1754944e-38, %v3526
    %v3528 = vsel %vm3525, %v3527, %v3523
    %v3529 = vmul.f32 1.0, %v3528
    %v3530 = vrcp.pop %v3514
    %v3531 = vmul.f32 %v3514, %v3530
    %v3532 = vsub.f32 1.0, %v3531
    %v3533 = vmul.f32 %v3530, %v3532
    %v3534 = vadd.f32 %v3530, %v3533
    %vm3535 = vweird.f32 %v3514
    %vm3536 = vweird.f32 %v3530
    %vm3537 = vmor %vm3535, %vm3536
    %v3538 = vsel %vm3537, %v3530, %v3534
    %v3539 = vand.u32 2147483647, %v3514
    %vm3540 = vcmp.eq.f32.partialorder %v3539, 8.507059e+37
    %v3541 = vand.u32 %v3514, 2147483648
    %v3542 = vor.u32 1.1754944e-38, %v3541
    %v3543 = vsel %vm3540, %v3542, %v3538
    %v3544 = vmul.f32 1.0, %v3543
    %v3545 = vtanh.pop %v3465
    %v3546 = vtanh.pop %v3466
    %v3547 = vxor.u32 %v3467, 2147483648
    %v3548 = vxor.u32 %v3468, 2147483648
    %v3549 = vmul.f32 %v3547, 1.442695
    %v3550 = vpow.pop %v3549
    %v3551 = vmul.f32 %v3548, 1.442695
    %v3552 = vpow.pop %v3551
    %v3553 = vadd.f32 %v3550, 1.0
    %v3554 = vadd.f32 %v3552, 1.0
    %v3555 = vrcp.pop %v3553
    %v3556 = vmul.f32 %v3553, %v3555
    %v3557 = vsub.f32 1.0, %v3556
    %v3558 = vmul.f32 %v3555, %v3557
    %v3559 = vadd.f32 %v3555, %v3558
    %vm3560 = vweird.f32 %v3553
    %vm3561 = vweird.f32 %v3555
    %vm3562 = vmor %vm3560, %vm3561
    %v3563 = vsel %vm3562, %v3555, %v3559
    %v3564 = vand.u32 2147483647, %v3553
    %vm3565 = vcmp.eq.f32.partialorder %v3564, 8.507059e+37
    %v3566 = vand.u32 %v3553, 2147483648
    %v3567 = vor.u32 1.1754944e-38, %v3566
    %v3568 = vsel %vm3565, %v3567, %v3563
    %v3569 = vmul.f32 1.0, %v3568
    %v3570 = vrcp.pop %v3554
    %v3571 = vmul.f32 %v3554, %v3570
    %v3572 = vsub.f32 1.0, %v3571
    %v3573 = vmul.f32 %v3570, %v3572
    %v3574 = vadd.f32 %v3570, %v3573
    %vm3575 = vweird.f32 %v3554
    %vm3576 = vweird.f32 %v3570
    %vm3577 = vmor %vm3575, %vm3576
    %v3578 = vsel %vm3577, %v3570, %v3574
    %v3579 = vand.u32 2147483647, %v3554
    %vm3580 = vcmp.eq.f32.partialorder %v3579, 8.507059e+37
    %v3581 = vand.u32 %v3554, 2147483648
    %v3582 = vor.u32 1.1754944e-38, %v3581
    %v3583 = vsel %vm3580, %v3582, %v3578
    %v3584 = vmul.f32 1.0, %v3583
    %v3585 = vmul.f32 %v3529, %v3126
    %v3586 = vmul.f32 %v3544, %v3127
    %v3587 = vmul.f32 %v3491, %v3545
    %v3588 = vmul.f32 %v3506, %v3546
    %v3589 = vadd.f32 %v3585, %v3587
    %v3590 = vadd.f32 %v3586, %v3588
    %v3591 = vtanh.pop %v3589
    %v3592 = vtanh.pop %v3590
    %v3593 = vmul.f32 %v3569, %v3591
    %v3594 = vmul.f32 %v3584, %v3592
    %s3595 = scalar_lea.vmem [#allocation4], 448
    %v3596 = vld [vmem:[%s3595] sm:$0xff]
    %v3597 = vld [vmem:[%s3595 + $0x8] sm:$0xff]
    %v3598 = vld [vmem:[%s3595 + $0x10] sm:$0xff]
    %v3599 = vld [vmem:[%s3595 + $0x18] sm:$0xff]
    %v3600 = vld [vmem:[%s3595 + $0x20] sm:$0xff]
    %v3601 = vld [vmem:[%s3595 + $0x28] sm:$0xff]
    %v3602 = vld [vmem:[%s3595 + $0x30] sm:$0xff]
    %v3603 = vld [vmem:[%s3595 + $0x38] sm:$0xff]
    %3604 = vmatpush.msra.mxu0 %v215
    %3605 = vmatpush.msra.mxu0 %v207
    %3606 = vmatpush.msra.mxu0 %v199
    %3607 = vmatpush.msra.mxu0 %v191
    %3608 = vmatpush.msra.mxu0 %v183
    %3609 = vmatpush.msra.mxu0 %v175
    %3610 = vmatpush.msra.mxu0 %v167
    %3611 = vmatpush.msra.mxu0 %v159
    %3612 = vmatpush.msra.mxu0 %v151
    %3613 = vmatpush.msra.mxu0 %v143
    %3614 = vmatpush.msra.mxu0 %v135
    %3615 = vmatpush.msra.mxu0 %v127
    %3616 = vmatpush.msra.mxu0 %v119
    %3617 = vmatpush.msra.mxu0 %v111
    %3618 = vmatpush.msra.mxu0 %v103
    %3619 = vmatpush.msra.mxu0 %v95
    %3620 = vmatmul.f32.gmra.mxu0 %v3593
    %v3621 = vpop.f32.mrf.mxu0
    %v3622 = vadd.f32 0.0, %v3621
    %3623 = vdwg.mxu0
    %3624 = vmatpush.msra.mxu0 %v343
    %3625 = vmatpush.msra.mxu0 %v335
    %3626 = vmatpush.msra.mxu0 %v327
    %3627 = vmatpush.msra.mxu0 %v319
    %3628 = vmatpush.msra.mxu0 %v311
    %3629 = vmatpush.msra.mxu0 %v303
    %3630 = vmatpush.msra.mxu0 %v295
    %3631 = vmatpush.msra.mxu0 %v287
    %3632 = vmatpush.msra.mxu0 %v279
    %3633 = vmatpush.msra.mxu0 %v271
    %3634 = vmatpush.msra.mxu0 %v263
    %3635 = vmatpush.msra.mxu0 %v255
    %3636 = vmatpush.msra.mxu0 %v247
    %3637 = vmatpush.msra.mxu0 %v239
    %3638 = vmatpush.msra.mxu0 %v231
    %3639 = vmatpush.msra.mxu0 %v223
    %3640 = vmatmul.f32.gmra.mxu0 %v3594
    %v3641 = vpop.f32.mrf.mxu0
    %v3642 = vadd.f32 %v3622, %v3641
    %3643 = vdwg.mxu0
    %3644 = vmatpush.msra.mxu0 %v216
    %3645 = vmatpush.msra.mxu0 %v208
    %3646 = vmatpush.msra.mxu0 %v200
    %3647 = vmatpush.msra.mxu0 %v192
    %3648 = vmatpush.msra.mxu0 %v184
    %3649 = vmatpush.msra.mxu0 %v176
    %3650 = vmatpush.msra.mxu0 %v168
    %3651 = vmatpush.msra.mxu0 %v160
    %3652 = vmatpush.msra.mxu0 %v152
    %3653 = vmatpush.msra.mxu0 %v144
    %3654 = vmatpush.msra.mxu0 %v136
    %3655 = vmatpush.msra.mxu0 %v128
    %3656 = vmatpush.msra.mxu0 %v120
    %3657 = vmatpush.msra.mxu0 %v112
    %3658 = vmatpush.msra.mxu0 %v104
    %3659 = vmatpush.msra.mxu0 %v96
    %3660 = vmatmul.f32.gmra.mxu0 %v3593
    %v3661 = vpop.f32.mrf.mxu0
    %v3662 = vadd.f32 0.0, %v3661
    %3663 = vdwg.mxu0
    %3664 = vmatpush.msra.mxu0 %v344
    %3665 = vmatpush.msra.mxu0 %v336
    %3666 = vmatpush.msra.mxu0 %v328
    %3667 = vmatpush.msra.mxu0 %v320
    %3668 = vmatpush.msra.mxu0 %v312
    %3669 = vmatpush.msra.mxu0 %v304
    %3670 = vmatpush.msra.mxu0 %v296
    %3671 = vmatpush.msra.mxu0 %v288
    %3672 = vmatpush.msra.mxu0 %v280
    %3673 = vmatpush.msra.mxu0 %v272
    %3674 = vmatpush.msra.mxu0 %v264
    %3675 = vmatpush.msra.mxu0 %v256
    %3676 = vmatpush.msra.mxu0 %v248
    %3677 = vmatpush.msra.mxu0 %v240
    %3678 = vmatpush.msra.mxu0 %v232
    %3679 = vmatpush.msra.mxu0 %v224
    %3680 = vmatmul.f32.gmra.mxu0 %v3594
    %v3681 = vpop.f32.mrf.mxu0
    %v3682 = vadd.f32 %v3662, %v3681
    %3683 = vdwg.mxu0
    %3684 = vmatpush.msra.mxu0 %v217
    %3685 = vmatpush.msra.mxu0 %v209
    %3686 = vmatpush.msra.mxu0 %v201
    %3687 = vmatpush.msra.mxu0 %v193
    %3688 = vmatpush.msra.mxu0 %v185
    %3689 = vmatpush.msra.mxu0 %v177
    %3690 = vmatpush.msra.mxu0 %v169
    %3691 = vmatpush.msra.mxu0 %v161
    %3692 = vmatpush.msra.mxu0 %v153
    %3693 = vmatpush.msra.mxu0 %v145
    %3694 = vmatpush.msra.mxu0 %v137
    %3695 = vmatpush.msra.mxu0 %v129
    %3696 = vmatpush.msra.mxu0 %v121
    %3697 = vmatpush.msra.mxu0 %v113
    %3698 = vmatpush.msra.mxu0 %v105
    %3699 = vmatpush.msra.mxu0 %v97
    %3700 = vmatmul.f32.gmra.mxu0 %v3593
    %v3701 = vpop.f32.mrf.mxu0
    %v3702 = vadd.f32 0.0, %v3701
    %3703 = vdwg.mxu0
    %3704 = vmatpush.msra.mxu0 %v345
    %3705 = vmatpush.msra.mxu0 %v337
    %3706 = vmatpush.msra.mxu0 %v329
    %3707 = vmatpush.msra.mxu0 %v321
    %3708 = vmatpush.msra.mxu0 %v313
    %3709 = vmatpush.msra.mxu0 %v305
    %3710 = vmatpush.msra.mxu0 %v297
    %3711 = vmatpush.msra.mxu0 %v289
    %3712 = vmatpush.msra.mxu0 %v281
    %3713 = vmatpush.msra.mxu0 %v273
    %3714 = vmatpush.msra.mxu0 %v265
    %3715 = vmatpush.msra.mxu0 %v257
    %3716 = vmatpush.msra.mxu0 %v249
    %3717 = vmatpush.msra.mxu0 %v241
    %3718 = vmatpush.msra.mxu0 %v233
    %3719 = vmatpush.msra.mxu0 %v225
    %3720 = vmatmul.f32.gmra.mxu0 %v3594
    %v3721 = vpop.f32.mrf.mxu0
    %v3722 = vadd.f32 %v3702, %v3721
    %3723 = vdwg.mxu0
    %3724 = vmatpush.msra.mxu0 %v218
    %3725 = vmatpush.msra.mxu0 %v210
    %3726 = vmatpush.msra.mxu0 %v202
    %3727 = vmatpush.msra.mxu0 %v194
    %3728 = vmatpush.msra.mxu0 %v186
    %3729 = vmatpush.msra.mxu0 %v178
    %3730 = vmatpush.msra.mxu0 %v170
    %3731 = vmatpush.msra.mxu0 %v162
    %3732 = vmatpush.msra.mxu0 %v154
    %3733 = vmatpush.msra.mxu0 %v146
    %3734 = vmatpush.msra.mxu0 %v138
    %3735 = vmatpush.msra.mxu0 %v130
    %3736 = vmatpush.msra.mxu0 %v122
    %3737 = vmatpush.msra.mxu0 %v114
    %3738 = vmatpush.msra.mxu0 %v106
    %3739 = vmatpush.msra.mxu0 %v98
    %3740 = vmatmul.f32.gmra.mxu0 %v3593
    %v3741 = vpop.f32.mrf.mxu0
    %v3742 = vadd.f32 0.0, %v3741
    %3743 = vdwg.mxu0
    %3744 = vmatpush.msra.mxu0 %v346
    %3745 = vmatpush.msra.mxu0 %v338
    %3746 = vmatpush.msra.mxu0 %v330
    %3747 = vmatpush.msra.mxu0 %v322
    %3748 = vmatpush.msra.mxu0 %v314
    %3749 = vmatpush.msra.mxu0 %v306
    %3750 = vmatpush.msra.mxu0 %v298
    %3751 = vmatpush.msra.mxu0 %v290
    %3752 = vmatpush.msra.mxu0 %v282
    %3753 = vmatpush.msra.mxu0 %v274
    %3754 = vmatpush.msra.mxu0 %v266
    %3755 = vmatpush.msra.mxu0 %v258
    %3756 = vmatpush.msra.mxu0 %v250
    %3757 = vmatpush.msra.mxu0 %v242
    %3758 = vmatpush.msra.mxu0 %v234
    %3759 = vmatpush.msra.mxu0 %v226
    %3760 = vmatmul.f32.gmra.mxu0 %v3594
    %v3761 = vpop.f32.mrf.mxu0
    %v3762 = vadd.f32 %v3742, %v3761
    %3763 = vdwg.mxu0
    %3764 = vmatpush.msra.mxu0 %v219
    %3765 = vmatpush.msra.mxu0 %v211
    %3766 = vmatpush.msra.mxu0 %v203
    %3767 = vmatpush.msra.mxu0 %v195
    %3768 = vmatpush.msra.mxu0 %v187
    %3769 = vmatpush.msra.mxu0 %v179
    %3770 = vmatpush.msra.mxu0 %v171
    %3771 = vmatpush.msra.mxu0 %v163
    %3772 = vmatpush.msra.mxu0 %v155
    %3773 = vmatpush.msra.mxu0 %v147
    %3774 = vmatpush.msra.mxu0 %v139
    %3775 = vmatpush.msra.mxu0 %v131
    %3776 = vmatpush.msra.mxu0 %v123
    %3777 = vmatpush.msra.mxu0 %v115
    %3778 = vmatpush.msra.mxu0 %v107
    %3779 = vmatpush.msra.mxu0 %v99
    %3780 = vmatmul.f32.gmra.mxu0 %v3593
    %v3781 = vpop.f32.mrf.mxu0
    %v3782 = vadd.f32 0.0, %v3781
    %3783 = vdwg.mxu0
    %3784 = vmatpush.msra.mxu0 %v347
    %3785 = vmatpush.msra.mxu0 %v339
    %3786 = vmatpush.msra.mxu0 %v331
    %3787 = vmatpush.msra.mxu0 %v323
    %3788 = vmatpush.msra.mxu0 %v315
    %3789 = vmatpush.msra.mxu0 %v307
    %3790 = vmatpush.msra.mxu0 %v299
    %3791 = vmatpush.msra.mxu0 %v291
    %3792 = vmatpush.msra.mxu0 %v283
    %3793 = vmatpush.msra.mxu0 %v275
    %3794 = vmatpush.msra.mxu0 %v267
    %3795 = vmatpush.msra.mxu0 %v259
    %3796 = vmatpush.msra.mxu0 %v251
    %3797 = vmatpush.msra.mxu0 %v243
    %3798 = vmatpush.msra.mxu0 %v235
    %3799 = vmatpush.msra.mxu0 %v227
    %3800 = vmatmul.f32.gmra.mxu0 %v3594
    %v3801 = vpop.f32.mrf.mxu0
    %v3802 = vadd.f32 %v3782, %v3801
    %3803 = vdwg.mxu0
    %3804 = vmatpush.msra.mxu0 %v220
    %3805 = vmatpush.msra.mxu0 %v212
    %3806 = vmatpush.msra.mxu0 %v204
    %3807 = vmatpush.msra.mxu0 %v196
    %3808 = vmatpush.msra.mxu0 %v188
    %3809 = vmatpush.msra.mxu0 %v180
    %3810 = vmatpush.msra.mxu0 %v172
    %3811 = vmatpush.msra.mxu0 %v164
    %3812 = vmatpush.msra.mxu0 %v156
    %3813 = vmatpush.msra.mxu0 %v148
    %3814 = vmatpush.msra.mxu0 %v140
    %3815 = vmatpush.msra.mxu0 %v132
    %3816 = vmatpush.msra.mxu0 %v124
    %3817 = vmatpush.msra.mxu0 %v116
    %3818 = vmatpush.msra.mxu0 %v108
    %3819 = vmatpush.msra.mxu0 %v100
    %3820 = vmatmul.f32.gmra.mxu0 %v3593
    %v3821 = vpop.f32.mrf.mxu0
    %v3822 = vadd.f32 0.0, %v3821
    %3823 = vdwg.mxu0
    %3824 = vmatpush.msra.mxu0 %v348
    %3825 = vmatpush.msra.mxu0 %v340
    %3826 = vmatpush.msra.mxu0 %v332
    %3827 = vmatpush.msra.mxu0 %v324
    %3828 = vmatpush.msra.mxu0 %v316
    %3829 = vmatpush.msra.mxu0 %v308
    %3830 = vmatpush.msra.mxu0 %v300
    %3831 = vmatpush.msra.mxu0 %v292
    %3832 = vmatpush.msra.mxu0 %v284
    %3833 = vmatpush.msra.mxu0 %v276
    %3834 = vmatpush.msra.mxu0 %v268
    %3835 = vmatpush.msra.mxu0 %v260
    %3836 = vmatpush.msra.mxu0 %v252
    %3837 = vmatpush.msra.mxu0 %v244
    %3838 = vmatpush.msra.mxu0 %v236
    %3839 = vmatpush.msra.mxu0 %v228
    %3840 = vmatmul.f32.gmra.mxu0 %v3594
    %v3841 = vpop.f32.mrf.mxu0
    %v3842 = vadd.f32 %v3822, %v3841
    %3843 = vdwg.mxu0
    %3844 = vmatpush.msra.mxu0 %v221
    %3845 = vmatpush.msra.mxu0 %v213
    %3846 = vmatpush.msra.mxu0 %v205
    %3847 = vmatpush.msra.mxu0 %v197
    %3848 = vmatpush.msra.mxu0 %v189
    %3849 = vmatpush.msra.mxu0 %v181
    %3850 = vmatpush.msra.mxu0 %v173
    %3851 = vmatpush.msra.mxu0 %v165
    %3852 = vmatpush.msra.mxu0 %v157
    %3853 = vmatpush.msra.mxu0 %v149
    %3854 = vmatpush.msra.mxu0 %v141
    %3855 = vmatpush.msra.mxu0 %v133
    %3856 = vmatpush.msra.mxu0 %v125
    %3857 = vmatpush.msra.mxu0 %v117
    %3858 = vmatpush.msra.mxu0 %v109
    %3859 = vmatpush.msra.mxu0 %v101
    %3860 = vmatmul.f32.gmra.mxu0 %v3593
    %v3861 = vpop.f32.mrf.mxu0
    %v3862 = vadd.f32 0.0, %v3861
    %3863 = vdwg.mxu0
    %3864 = vmatpush.msra.mxu0 %v349
    %3865 = vmatpush.msra.mxu0 %v341
    %3866 = vmatpush.msra.mxu0 %v333
    %3867 = vmatpush.msra.mxu0 %v325
    %3868 = vmatpush.msra.mxu0 %v317
    %3869 = vmatpush.msra.mxu0 %v309
    %3870 = vmatpush.msra.mxu0 %v301
    %3871 = vmatpush.msra.mxu0 %v293
    %3872 = vmatpush.msra.mxu0 %v285
    %3873 = vmatpush.msra.mxu0 %v277
    %3874 = vmatpush.msra.mxu0 %v269
    %3875 = vmatpush.msra.mxu0 %v261
    %3876 = vmatpush.msra.mxu0 %v253
    %3877 = vmatpush.msra.mxu0 %v245
    %3878 = vmatpush.msra.mxu0 %v237
    %3879 = vmatpush.msra.mxu0 %v229
    %3880 = vmatmul.f32.gmra.mxu0 %v3594
    %v3881 = vpop.f32.mrf.mxu0
    %v3882 = vadd.f32 %v3862, %v3881
    %3883 = vdwg.mxu0
    %3884 = vmatpush.msra.mxu0 %v222
    %3885 = vmatpush.msra.mxu0 %v214
    %3886 = vmatpush.msra.mxu0 %v206
    %3887 = vmatpush.msra.mxu0 %v198
    %3888 = vmatpush.msra.mxu0 %v190
    %3889 = vmatpush.msra.mxu0 %v182
    %3890 = vmatpush.msra.mxu0 %v174
    %3891 = vmatpush.msra.mxu0 %v166
    %3892 = vmatpush.msra.mxu0 %v158
    %3893 = vmatpush.msra.mxu0 %v150
    %3894 = vmatpush.msra.mxu0 %v142
    %3895 = vmatpush.msra.mxu0 %v134
    %3896 = vmatpush.msra.mxu0 %v126
    %3897 = vmatpush.msra.mxu0 %v118
    %3898 = vmatpush.msra.mxu0 %v110
    %3899 = vmatpush.msra.mxu0 %v102
    %3900 = vmatmul.f32.gmra.mxu0 %v3593
    %v3901 = vpop.f32.mrf.mxu0
    %v3902 = vadd.f32 0.0, %v3901
    %3903 = vdwg.mxu0
    %3904 = vmatpush.msra.mxu0 %v350
    %3905 = vmatpush.msra.mxu0 %v342
    %3906 = vmatpush.msra.mxu0 %v334
    %3907 = vmatpush.msra.mxu0 %v326
    %3908 = vmatpush.msra.mxu0 %v318
    %3909 = vmatpush.msra.mxu0 %v310
    %3910 = vmatpush.msra.mxu0 %v302
    %3911 = vmatpush.msra.mxu0 %v294
    %3912 = vmatpush.msra.mxu0 %v286
    %3913 = vmatpush.msra.mxu0 %v278
    %3914 = vmatpush.msra.mxu0 %v270
    %3915 = vmatpush.msra.mxu0 %v262
    %3916 = vmatpush.msra.mxu0 %v254
    %3917 = vmatpush.msra.mxu0 %v246
    %3918 = vmatpush.msra.mxu0 %v238
    %3919 = vmatpush.msra.mxu0 %v230
    %3920 = vmatmul.f32.gmra.mxu0 %v3594
    %v3921 = vpop.f32.mrf.mxu0
    %v3922 = vadd.f32 %v3902, %v3921
    %3923 = vdwg.mxu0
    %v3924 = vadd.f32 %v3596, %v3642
    %v3925 = vadd.f32 %v3597, %v3682
    %v3926 = vadd.f32 %v3598, %v3722
    %v3927 = vadd.f32 %v3599, %v3762
    %v3928 = vadd.f32 %v3600, %v3802
    %v3929 = vadd.f32 %v3601, %v3842
    %v3930 = vadd.f32 %v3602, %v3882
    %v3931 = vadd.f32 %v3603, %v3922
    %v3932 = vxor.u32 %v3924, 2147483648
    %v3933 = vxor.u32 %v3925, 2147483648
    %v3934 = vmul.f32 %v3932, 1.442695
    %v3935 = vpow.pop %v3934
    %v3936 = vmul.f32 %v3933, 1.442695
    %v3937 = vpow.pop %v3936
    %v3938 = vadd.f32 %v3935, 1.0
    %v3939 = vadd.f32 %v3937, 1.0
    %v3940 = vrcp.pop %v3938
    %v3941 = vmul.f32 %v3938, %v3940
    %v3942 = vsub.f32 1.0, %v3941
    %v3943 = vmul.f32 %v3940, %v3942
    %v3944 = vadd.f32 %v3940, %v3943
    %vm3945 = vweird.f32 %v3938
    %vm3946 = vweird.f32 %v3940
    %vm3947 = vmor %vm3945, %vm3946
    %v3948 = vsel %vm3947, %v3940, %v3944
    %v3949 = vand.u32 2147483647, %v3938
    %vm3950 = vcmp.eq.f32.partialorder %v3949, 8.507059e+37
    %v3951 = vand.u32 %v3938, 2147483648
    %v3952 = vor.u32 1.1754944e-38, %v3951
    %v3953 = vsel %vm3950, %v3952, %v3948
    %v3954 = vmul.f32 1.0, %v3953
    %v3955 = vrcp.pop %v3939
    %v3956 = vmul.f32 %v3939, %v3955
    %v3957 = vsub.f32 1.0, %v3956
    %v3958 = vmul.f32 %v3955, %v3957
    %v3959 = vadd.f32 %v3955, %v3958
    %vm3960 = vweird.f32 %v3939
    %vm3961 = vweird.f32 %v3955
    %vm3962 = vmor %vm3960, %vm3961
    %v3963 = vsel %vm3962, %v3955, %v3959
    %v3964 = vand.u32 2147483647, %v3939
    %vm3965 = vcmp.eq.f32.partialorder %v3964, 8.507059e+37
    %v3966 = vand.u32 %v3939, 2147483648
    %v3967 = vor.u32 1.1754944e-38, %v3966
    %v3968 = vsel %vm3965, %v3967, %v3963
    %v3969 = vmul.f32 1.0, %v3968
    %v3970 = vxor.u32 %v3926, 2147483648
    %v3971 = vxor.u32 %v3927, 2147483648
    %v3972 = vmul.f32 %v3970, 1.442695
    %v3973 = vpow.pop %v3972
    %v3974 = vmul.f32 %v3971, 1.442695
    %v3975 = vpow.pop %v3974
    %v3976 = vadd.f32 %v3973, 1.0
    %v3977 = vadd.f32 %v3975, 1.0
    %v3978 = vrcp.pop %v3976
    %v3979 = vmul.f32 %v3976, %v3978
    %v3980 = vsub.f32 1.0, %v3979
    %v3981 = vmul.f32 %v3978, %v3980
    %v3982 = vadd.f32 %v3978, %v3981
    %vm3983 = vweird.f32 %v3976
    %vm3984 = vweird.f32 %v3978
    %vm3985 = vmor %vm3983, %vm3984
    %v3986 = vsel %vm3985, %v3978, %v3982
    %v3987 = vand.u32 2147483647, %v3976
    %vm3988 = vcmp.eq.f32.partialorder %v3987, 8.507059e+37
    %v3989 = vand.u32 %v3976, 2147483648
    %v3990 = vor.u32 1.1754944e-38, %v3989
    %v3991 = vsel %vm3988, %v3990, %v3986
    %v3992 = vmul.f32 1.0, %v3991
    %v3993 = vrcp.pop %v3977
    %v3994 = vmul.f32 %v3977, %v3993
    %v3995 = vsub.f32 1.0, %v3994
    %v3996 = vmul.f32 %v3993, %v3995
    %v3997 = vadd.f32 %v3993, %v3996
    %vm3998 = vweird.f32 %v3977
    %vm3999 = vweird.f32 %v3993
    %vm4000 = vmor %vm3998, %vm3999
    %v4001 = vsel %vm4000, %v3993, %v3997
    %v4002 = vand.u32 2147483647, %v3977
    %vm4003 = vcmp.eq.f32.partialorder %v4002, 8.507059e+37
    %v4004 = vand.u32 %v3977, 2147483648
    %v4005 = vor.u32 1.1754944e-38, %v4004
    %v4006 = vsel %vm4003, %v4005, %v4001
    %v4007 = vmul.f32 1.0, %v4006
    %v4008 = vtanh.pop %v3928
    %v4009 = vtanh.pop %v3929
    %v4010 = vxor.u32 %v3930, 2147483648
    %v4011 = vxor.u32 %v3931, 2147483648
    %v4012 = vmul.f32 %v4010, 1.442695
    %v4013 = vpow.pop %v4012
    %v4014 = vmul.f32 %v4011, 1.442695
    %v4015 = vpow.pop %v4014
    %v4016 = vadd.f32 %v4013, 1.0
    %v4017 = vadd.f32 %v4015, 1.0
    %v4018 = vrcp.pop %v4016
    %v4019 = vmul.f32 %v4016, %v4018
    %v4020 = vsub.f32 1.0, %v4019
    %v4021 = vmul.f32 %v4018, %v4020
    %v4022 = vadd.f32 %v4018, %v4021
    %vm4023 = vweird.f32 %v4016
    %vm4024 = vweird.f32 %v4018
    %vm4025 = vmor %vm4023, %vm4024
    %v4026 = vsel %vm4025, %v4018, %v4022
    %v4027 = vand.u32 2147483647, %v4016
    %vm4028 = vcmp.eq.f32.partialorder %v4027, 8.507059e+37
    %v4029 = vand.u32 %v4016, 2147483648
    %v4030 = vor.u32 1.1754944e-38, %v4029
    %v4031 = vsel %vm4028, %v4030, %v4026
    %v4032 = vmul.f32 1.0, %v4031
    %v4033 = vrcp.pop %v4017
    %v4034 = vmul.f32 %v4017, %v4033
    %v4035 = vsub.f32 1.0, %v4034
    %v4036 = vmul.f32 %v4033, %v4035
    %v4037 = vadd.f32 %v4033, %v4036
    %vm4038 = vweird.f32 %v4017
    %vm4039 = vweird.f32 %v4033
    %vm4040 = vmor %vm4038, %vm4039
    %v4041 = vsel %vm4040, %v4033, %v4037
    %v4042 = vand.u32 2147483647, %v4017
    %vm4043 = vcmp.eq.f32.partialorder %v4042, 8.507059e+37
    %v4044 = vand.u32 %v4017, 2147483648
    %v4045 = vor.u32 1.1754944e-38, %v4044
    %v4046 = vsel %vm4043, %v4045, %v4041
    %v4047 = vmul.f32 1.0, %v4046
    %v4048 = vmul.f32 %v3992, %v3589
    %v4049 = vmul.f32 %v4007, %v3590
    %v4050 = vmul.f32 %v3954, %v4008
    %v4051 = vmul.f32 %v3969, %v4009
    %v4052 = vadd.f32 %v4048, %v4050
    %v4053 = vadd.f32 %v4049, %v4051
    %v4054 = vtanh.pop %v4052
    %v4055 = vtanh.pop %v4053
    %v4056 = vmul.f32 %v4032, %v4054
    %v4057 = vmul.f32 %v4047, %v4055
    %4058 = vst [vmem:[#allocation2] sm:$0xff] %v4056
    %4059 = vst [vmem:[#allocation2 + $0x8] sm:$0xff] %v4057
    %4060 = vst [vmem:[#allocation3] sm:$0xff] %v4052
    %4061 = vst [vmem:[#allocation3 + $0x8] sm:$0xff] %v4053
    // Predicated region
    $region46: #{tpu_custom_call.1} parent=1 // pred_check
      %p4062 = pneg %p87
    $region47: #{tpu_custom_call.1} parent=1 // pred_check_branch
      %4064 = sbr.rel (%p4062) target = $region49
    $region48: #{tpu_custom_call.1} parent=1 // pred_region
      %v4065 = vld [vmem:[#allocation9] sm:$0xff]
      %v4066 = vld [vmem:[#allocation9 + $0x8] sm:$0xff]
      %v4067 = vld [vmem:[#allocation9 + $0x10] sm:$0xff]
      %v4068 = vld [vmem:[#allocation9 + $0x18] sm:$0xff]
      %v4069 = vld [vmem:[#allocation9 + $0x20] sm:$0xff]
      %v4070 = vld [vmem:[#allocation9 + $0x28] sm:$0xff]
      %v4071 = vld [vmem:[#allocation9 + $0x30] sm:$0xff]
      %v4072 = vld [vmem:[#allocation9 + $0x38] sm:$0xff]
      %v4073 = vld [vmem:[#allocation9 + $0x40] sm:$0xff]
      %v4074 = vld [vmem:[#allocation9 + $0x48] sm:$0xff]
      %v4075 = vld [vmem:[#allocation9 + $0x50] sm:$0xff]
      %v4076 = vld [vmem:[#allocation9 + $0x58] sm:$0xff]
      %v4077 = vld [vmem:[#allocation9 + $0x60] sm:$0xff]
      %v4078 = vld [vmem:[#allocation9 + $0x68] sm:$0xff]
      %v4079 = vld [vmem:[#allocation9 + $0x70] sm:$0xff]
      %v4080 = vld [vmem:[#allocation9 + $0x78] sm:$0xff]
      %v4081 = vld [vmem:[#allocation9 + $0x80] sm:$0xff]
      %v4082 = vld [vmem:[#allocation9 + $0x88] sm:$0xff]
      %v4083 = vld [vmem:[#allocation9 + $0x90] sm:$0xff]
      %v4084 = vld [vmem:[#allocation9 + $0x98] sm:$0xff]
      %v4085 = vld [vmem:[#allocation9 + $0xa0] sm:$0xff]
      %v4086 = vld [vmem:[#allocation9 + $0xa8] sm:$0xff]
      %v4087 = vld [vmem:[#allocation9 + $0xb0] sm:$0xff]
      %v4088 = vld [vmem:[#allocation9 + $0xb8] sm:$0xff]
      %v4089 = vld [vmem:[#allocation9 + $0xc0] sm:$0xff]
      %v4090 = vld [vmem:[#allocation9 + $0xc8] sm:$0xff]
      %v4091 = vld [vmem:[#allocation9 + $0xd0] sm:$0xff]
      %v4092 = vld [vmem:[#allocation9 + $0xd8] sm:$0xff]
      %v4093 = vld [vmem:[#allocation9 + $0xe0] sm:$0xff]
      %v4094 = vld [vmem:[#allocation9 + $0xe8] sm:$0xff]
      %v4095 = vld [vmem:[#allocation9 + $0xf0] sm:$0xff]
      %v4096 = vld [vmem:[#allocation9 + $0xf8] sm:$0xff]
      %v4097 = vld [vmem:[#allocation9 + $0x100] sm:$0xff]
      %v4098 = vld [vmem:[#allocation9 + $0x108] sm:$0xff]
      %v4099 = vld [vmem:[#allocation9 + $0x110] sm:$0xff]
      %v4100 = vld [vmem:[#allocation9 + $0x118] sm:$0xff]
      %v4101 = vld [vmem:[#allocation9 + $0x120] sm:$0xff]
      %v4102 = vld [vmem:[#allocation9 + $0x128] sm:$0xff]
      %v4103 = vld [vmem:[#allocation9 + $0x130] sm:$0xff]
      %v4104 = vld [vmem:[#allocation9 + $0x138] sm:$0xff]
      %v4105 = vld [vmem:[#allocation9 + $0x140] sm:$0xff]
      %v4106 = vld [vmem:[#allocation9 + $0x148] sm:$0xff]
      %v4107 = vld [vmem:[#allocation9 + $0x150] sm:$0xff]
      %v4108 = vld [vmem:[#allocation9 + $0x158] sm:$0xff]
      %v4109 = vld [vmem:[#allocation9 + $0x160] sm:$0xff]
      %v4110 = vld [vmem:[#allocation9 + $0x168] sm:$0xff]
      %v4111 = vld [vmem:[#allocation9 + $0x170] sm:$0xff]
      %v4112 = vld [vmem:[#allocation9 + $0x178] sm:$0xff]
      %v4113 = vld [vmem:[#allocation9 + $0x180] sm:$0xff]
      %v4114 = vld [vmem:[#allocation9 + $0x188] sm:$0xff]
      %v4115 = vld [vmem:[#allocation9 + $0x190] sm:$0xff]
      %v4116 = vld [vmem:[#allocation9 + $0x198] sm:$0xff]
      %v4117 = vld [vmem:[#allocation9 + $0x1a0] sm:$0xff]
      %v4118 = vld [vmem:[#allocation9 + $0x1a8] sm:$0xff]
      %v4119 = vld [vmem:[#allocation9 + $0x1b0] sm:$0xff]
      %v4120 = vld [vmem:[#allocation9 + $0x1b8] sm:$0xff]
      %v4121 = vld [vmem:[#allocation9 + $0x1c0] sm:$0xff]
      %v4122 = vld [vmem:[#allocation9 + $0x1c8] sm:$0xff]
      %v4123 = vld [vmem:[#allocation9 + $0x1d0] sm:$0xff]
      %v4124 = vld [vmem:[#allocation9 + $0x1d8] sm:$0xff]
      %v4125 = vld [vmem:[#allocation9 + $0x1e0] sm:$0xff]
      %v4126 = vld [vmem:[#allocation9 + $0x1e8] sm:$0xff]
      %v4127 = vld [vmem:[#allocation9 + $0x1f0] sm:$0xff]
      %v4128 = vld [vmem:[#allocation9 + $0x1f8] sm:$0xff]
      %v4129 = vld [vmem:[%s3] sm:$0x3]
      %v4131 = vperm.slane %v4129, 0
      %v4132 = vperm.slane %v4129, 1
      %4135 = vmatpush.msra.mxu0 %v4095
      %4136 = vmatpush.msra.mxu0 %v4093
      %4137 = vmatpush.msra.mxu0 %v4091
      %4138 = vmatpush.msra.mxu0 %v4089
      %4139 = vmatpush.msra.mxu0 %v4087
      %4140 = vmatpush.msra.mxu0 %v4085
      %4141 = vmatpush.msra.mxu0 %v4083
      %4142 = vmatpush.msra.mxu0 %v4081
      %4143 = vmatpush.msra.mxu0 %v4079
      %4144 = vmatpush.msra.mxu0 %v4077
      %4145 = vmatpush.msra.mxu0 %v4075
      %4146 = vmatpush.msra.mxu0 %v4073
      %4147 = vmatpush.msra.mxu0 %v4071
      %4148 = vmatpush.msra.mxu0 %v4069
      %4149 = vmatpush.msra.mxu0 %v4067
      %4150 = vmatpush.msra.mxu0 %v4065
      %4151 = vmatmul.f32.gmra.mxu0 %v4056
      %v4152 = vpop.f32.mrf.mxu0
      %v4153 = vadd.f32 %v4131, %v4152
      %4154 = vdwg.mxu0
      %4155 = vmatpush.msra.mxu0 %v4127
      %4156 = vmatpush.msra.mxu0 %v4125
      %4157 = vmatpush.msra.mxu0 %v4123
      %4158 = vmatpush.msra.mxu0 %v4121
      %4159 = vmatpush.msra.mxu0 %v4119
      %4160 = vmatpush.msra.mxu0 %v4117
      %4161 = vmatpush.msra.mxu0 %v4115
      %4162 = vmatpush.msra.mxu0 %v4113
      %4163 = vmatpush.msra.mxu0 %v4111
      %4164 = vmatpush.msra.mxu0 %v4109
      %4165 = vmatpush.msra.mxu0 %v4107
      %4166 = vmatpush.msra.mxu0 %v4105
      %4167 = vmatpush.msra.mxu0 %v4103
      %4168 = vmatpush.msra.mxu0 %v4101
      %4169 = vmatpush.msra.mxu0 %v4099
      %4170 = vmatpush.msra.mxu0 %v4097
      %4171 = vmatmul.f32.gmra.mxu0 %v4057
      %v4172 = vpop.f32.mrf.mxu0
      %v4173 = vadd.f32 %v4153, %v4172
      %4174 = vdwg.mxu0
      %4175 = vmatpush.msra.mxu0 %v4096
      %4176 = vmatpush.msra.mxu0 %v4094
      %4177 = vmatpush.msra.mxu0 %v4092
      %4178 = vmatpush.msra.mxu0 %v4090
      %4179 = vmatpush.msra.mxu0 %v4088
      %4180 = vmatpush.msra.mxu0 %v4086
      %4181 = vmatpush.msra.mxu0 %v4084
      %4182 = vmatpush.msra.mxu0 %v4082
      %4183 = vmatpush.msra.mxu0 %v4080
      %4184 = vmatpush.msra.mxu0 %v4078
      %4185 = vmatpush.msra.mxu0 %v4076
      %4186 = vmatpush.msra.mxu0 %v4074
      %4187 = vmatpush.msra.mxu0 %v4072
      %4188 = vmatpush.msra.mxu0 %v4070
      %4189 = vmatpush.msra.mxu0 %v4068
      %4190 = vmatpush.msra.mxu0 %v4066
      %4191 = vmatmul.f32.gmra.mxu0 %v4056
      %v4192 = vpop.f32.mrf.mxu0
      %v4193 = vadd.f32 %v4132, %v4192
      %4194 = vdwg.mxu0
      %4195 = vmatpush.msra.mxu0 %v4128
      %4196 = vmatpush.msra.mxu0 %v4126
      %4197 = vmatpush.msra.mxu0 %v4124
      %4198 = vmatpush.msra.mxu0 %v4122
      %4199 = vmatpush.msra.mxu0 %v4120
      %4200 = vmatpush.msra.mxu0 %v4118
      %4201 = vmatpush.msra.mxu0 %v4116
      %4202 = vmatpush.msra.mxu0 %v4114
      %4203 = vmatpush.msra.mxu0 %v4112
      %4204 = vmatpush.msra.mxu0 %v4110
      %4205 = vmatpush.msra.mxu0 %v4108
      %4206 = vmatpush.msra.mxu0 %v4106
      %4207 = vmatpush.msra.mxu0 %v4104
      %4208 = vmatpush.msra.mxu0 %v4102
      %4209 = vmatpush.msra.mxu0 %v4100
      %4210 = vmatpush.msra.mxu0 %v4098
      %4211 = vmatmul.f32.gmra.mxu0 %v4057
      %v4212 = vpop.f32.mrf.mxu0
      %v4213 = vadd.f32 %v4193, %v4212
      %4214 = vdwg.mxu0
      %v4215 = vld [vmem:[#allocation10] sm:$0xff]
      %v4216 = vld [vmem:[#allocation10 + $0x8] sm:$0xff]
      %v4217 = vld [vmem:[#allocation10 + $0x10] sm:$0xff]
      %v4218 = vld [vmem:[#allocation10 + $0x18] sm:$0xff]
      %v4219 = vld [vmem:[#allocation10 + $0x20] sm:$0xff]
      %v4220 = vld [vmem:[#allocation10 + $0x28] sm:$0xff]
      %v4221 = vld [vmem:[#allocation10 + $0x30] sm:$0xff]
      %v4222 = vld [vmem:[#allocation10 + $0x38] sm:$0xff]
      %v4223 = vld [vmem:[#allocation10 + $0x40] sm:$0xff]
      %v4224 = vld [vmem:[#allocation10 + $0x48] sm:$0xff]
      %v4225 = vld [vmem:[#allocation10 + $0x50] sm:$0xff]
      %v4226 = vld [vmem:[#allocation10 + $0x58] sm:$0xff]
      %v4227 = vld [vmem:[#allocation10 + $0x60] sm:$0xff]
      %v4228 = vld [vmem:[#allocation10 + $0x68] sm:$0xff]
      %v4229 = vld [vmem:[#allocation10 + $0x70] sm:$0xff]
      %v4230 = vld [vmem:[#allocation10 + $0x78] sm:$0xff]
      %v4231 = vld [vmem:[#allocation10 + $0x80] sm:$0xff]
      %v4232 = vld [vmem:[#allocation10 + $0x88] sm:$0xff]
      %v4233 = vld [vmem:[#allocation10 + $0x90] sm:$0xff]
      %v4234 = vld [vmem:[#allocation10 + $0x98] sm:$0xff]
      %v4235 = vld [vmem:[#allocation10 + $0xa0] sm:$0xff]
      %v4236 = vld [vmem:[#allocation10 + $0xa8] sm:$0xff]
      %v4237 = vld [vmem:[#allocation10 + $0xb0] sm:$0xff]
      %v4238 = vld [vmem:[#allocation10 + $0xb8] sm:$0xff]
      %v4239 = vld [vmem:[#allocation10 + $0xc0] sm:$0xff]
      %v4240 = vld [vmem:[#allocation10 + $0xc8] sm:$0xff]
      %v4241 = vld [vmem:[#allocation10 + $0xd0] sm:$0xff]
      %v4242 = vld [vmem:[#allocation10 + $0xd8] sm:$0xff]
      %v4243 = vld [vmem:[#allocation10 + $0xe0] sm:$0xff]
      %v4244 = vld [vmem:[#allocation10 + $0xe8] sm:$0xff]
      %v4245 = vld [vmem:[#allocation10 + $0xf0] sm:$0xff]
      %v4246 = vld [vmem:[#allocation10 + $0xf8] sm:$0xff]
      %v4247 = vld [vmem:[%s5] sm:$0x1]
      %v4249 = vperm.slane %v4247, 0
      %4251 = vmatpush.msra.mxu0 %v4230
      %4252 = vmatpush.msra.mxu0 %v4229
      %4253 = vmatpush.msra.mxu0 %v4228
      %4254 = vmatpush.msra.mxu0 %v4227
      %4255 = vmatpush.msra.mxu0 %v4226
      %4256 = vmatpush.msra.mxu0 %v4225
      %4257 = vmatpush.msra.mxu0 %v4224
      %4258 = vmatpush.msra.mxu0 %v4223
      %4259 = vmatpush.msra.mxu0 %v4222
      %4260 = vmatpush.msra.mxu0 %v4221
      %4261 = vmatpush.msra.mxu0 %v4220
      %4262 = vmatpush.msra.mxu0 %v4219
      %4263 = vmatpush.msra.mxu0 %v4218
      %4264 = vmatpush.msra.mxu0 %v4217
      %4265 = vmatpush.msra.mxu0 %v4216
      %4266 = vmatpush.msra.mxu0 %v4215
      %4267 = vmatmul.f32.gmra.mxu0 %v4173
      %v4268 = vpop.f32.mrf.mxu0
      %v4269 = vadd.f32 %v4249, %v4268
      %4270 = vdwg.mxu0
      %4271 = vmatpush.msra.mxu0 %v4246
      %4272 = vmatpush.msra.mxu0 %v4245
      %4273 = vmatpush.msra.mxu0 %v4244
      %4274 = vmatpush.msra.mxu0 %v4243
      %4275 = vmatpush.msra.mxu0 %v4242
      %4276 = vmatpush.msra.mxu0 %v4241
      %4277 = vmatpush.msra.mxu0 %v4240
      %4278 = vmatpush.msra.mxu0 %v4239
      %4279 = vmatpush.msra.mxu0 %v4238
      %4280 = vmatpush.msra.mxu0 %v4237
      %4281 = vmatpush.msra.mxu0 %v4236
      %4282 = vmatpush.msra.mxu0 %v4235
      %4283 = vmatpush.msra.mxu0 %v4234
      %4284 = vmatpush.msra.mxu0 %v4233
      %4285 = vmatpush.msra.mxu0 %v4232
      %4286 = vmatpush.msra.mxu0 %v4231
      %4287 = vmatmul.f32.gmra.mxu0 %v4213
      %v4288 = vpop.f32.mrf.mxu0
      %v4289 = vadd.f32 %v4269, %v4288
      %4290 = vdwg.mxu0
      %4291 = vst [vmem:[#allocation12] sm:$0xff] %v4289
    $region49: #{tpu_custom_call.1} parent=1 // pred_fallthru
      _
    // Predicated region
    $region50: #{tpu_custom_call.1} parent=1 // pred_check
      _
    $region51: #{tpu_custom_call.1} parent=1 // pred_check_branch
      %4293 = sbr.rel (0) target = $region53
    $region52: #{tpu_custom_call.1} parent=1 // pred_region
      %4295 = vsyncadd [#allocation6], 0
      %s4297 = sshll.u32 [#allocation12], 4
      %s4298 = int_to_ptr.vmem [resolvable:$true] %s4297
      %s4299 = sshll.u32 %s6, 4
      %s4300 = int_to_ptr.hbm [resolvable:$true] %s4299
      %4302 = dma.vmem_to_hbm [thread:$0]  %s4298, 128, %s4300, [#allocation6]
    $region53: #{tpu_custom_call.1} parent=1 // pred_fallthru
      _
    // Predicated region
    $region54: #{tpu_custom_call.1} parent=1 // pred_check
      _
    $region55: #{tpu_custom_call.1} parent=1 // pred_check_branch
      %4304 = sbr.rel (0) target = $region57
    $region56: #{tpu_custom_call.1} parent=1 // pred_region
      %4306 = dma.done [#allocation6], 128
    $region57: #{tpu_custom_call.1} parent=1 // pred_fallthru
      _
    %4307 = vsyncpa [#allocation5], 1
    %4308 = vsyncpa [#allocation8], 1
    %4309 = vsyncpa [#allocation11], 1
    %4310 = vsyncpa [#allocation6], 1

</llo_original>
